<compile_context>
chip_gen: v5e
topology: v5e:2x2
jax: 0.10.0
libtpu: 0.0.40
codegen_flags: <defaults>
</compile_context>

<pallas_src>
import functools
import math

import jax
import jax.numpy as jnp
from jax.experimental import pallas as pl
from jax.experimental.pallas import tpu as pltpu

_NEG_INF = -1e30


def _round_up(x, m):
    return ((x + m - 1) // m) * m


def _detect_vmem_limit():
    """Scoped-VMEM budget with headroom: ~96 MiB on 128 MiB parts (v5e/v6e),
    ~48 MiB on 64 MiB parts (v7x)."""
    cap = 64 * 1024 * 1024
    try:
        info = pltpu.get_tpu_info()
        cap = int(getattr(info, "vmem_capacity_bytes", cap))
    except Exception:
        pass
    return int(min(cap * 3 // 4, 96 * 1024 * 1024))


_VMEM_LIMIT = _detect_vmem_limit()
# Bigger row tiles when there is VMEM to spare (v5e/v6e); conservative on v7x.
_TM_MAX = 2048 if _VMEM_LIMIT >= 80 * 1024 * 1024 else 1024
_TN_MAX = 1024
_ATTN_TILE = 512


# ----------------------------------------------------------------------------
# Fused (LayerNorm?) -> matmul -> (+bias) -> (gelu?) -> (+residual?) kernel
# ----------------------------------------------------------------------------

def _dense_kernel(*refs, fuse_ln, has_bias, has_residual, activation):
    idx = 0
    x_ref = refs[idx]; idx += 1
    if fuse_ln:
        g_ref = refs[idx]; bln_ref = refs[idx + 1]; idx += 2
    w_ref = refs[idx]; idx += 1
    if has_bias:
        b_ref = refs[idx]; idx += 1
    if has_residual:
        r_ref = refs[idx]; idx += 1
    o_ref = refs[idx]

    x = x_ref[...]
    if fuse_ln:
        xf = x.astype(jnp.float32)
        mu = jnp.mean(xf, axis=-1, keepdims=True)
        var = jnp.mean((xf - mu) * (xf - mu), axis=-1, keepdims=True)
        xf = (xf - mu) * jax.lax.rsqrt(var + 1e-5)
        xf = xf * g_ref[...].astype(jnp.float32) + bln_ref[...].astype(jnp.float32)
        x = xf.astype(w_ref.dtype)

    y = jnp.dot(x, w_ref[...], preferred_element_type=jnp.float32)
    if has_bias:
        y = y + b_ref[...].astype(jnp.float32)
    if activation == "gelu":
        # GPT2 "gelu_new" (tanh approximation), computed in f32 on the EUP.
        c = math.sqrt(2.0 / math.pi)
        y = 0.5 * y * (1.0 + jnp.tanh(c * (y + 0.044715 * y * y * y)))
    if has_residual:
        y = y + r_ref[...].astype(jnp.float32)
    o_ref[...] = y.astype(o_ref.dtype)


def _pick_tn(Np, tn_max):
    """Largest multiple of 128 <= tn_max that divides Np (Np % 128 == 0)."""
    best = 128
    t = 128
    lim = min(tn_max, Np)
    while t <= lim:
        if Np % t == 0:
            best = t
        t += 128
    return best


def dense(x, w, b=None, *, ln_g=None, ln_b=None, activation=None,
          residual=None, out_dtype=None, tm_max=None, tn_max=None):
    """y = [LN](x) @ w (+ b) (+gelu) (+residual); tiled over (M, N), full K."""
    M, K = x.shape
    Kw, N = w.shape
    assert K == Kw
    out_dtype = out_dtype if out_dtype is not None else x.dtype
    tm_max = tm_max or _TM_MAX
    tn_max = tn_max or _TN_MAX

    # Row tile: as large as allowed (weights get re-streamed Mp/tm times).
    tm = int(min(tm_max, _round_up(M, 16)))
    while tm > 256 and _round_up(M, tm) - M > tm // 2:   # avoid gross row padding
        tm //= 2
        tm = _round_up(tm, 16)
    Mp = _round_up(M, tm)

    # Column tile: must divide the 128-aligned N so no per-call weight padding
    # is needed (weights are pre-padded once in prepare_params if ragged).
    Np = _round_up(N, 128)
    if Np != N:
        # Fallback only — avoided by prepare_params for the big lm_head weight.
        w = jnp.pad(w, ((0, 0), (0, Np - N)))
        if b is not None:
            b = jnp.pad(b.reshape(1, N), ((0, 0), (0, Np - N)))
    tn = _pick_tn(Np, tn_max)

    xp = x if Mp == M else jnp.pad(x, ((0, Mp - M), (0, 0)))

    args = [xp]
    in_specs = [pl.BlockSpec((tm, K), lambda i, j: (i, 0))]
    if ln_g is not None:
        args += [ln_g.reshape(1, K), ln_b.reshape(1, K)]
        in_specs += [pl.BlockSpec((1, K), lambda i, j: (0, 0)),
                     pl.BlockSpec((1, K), lambda i, j: (0, 0))]
    args.append(w)
    in_specs.append(pl.BlockSpec((K, tn), lambda i, j: (0, j)))
    if b is not None:
        args.append(b.reshape(1, Np))
        in_specs.append(pl.BlockSpec((1, tn), lambda i, j: (0, j)))
    if residual is not None:
        rp = residual
        if Mp != M or Np != N:
            rp = jnp.pad(rp, ((0, Mp - M), (0, Np - N)))
        args.append(rp)
        in_specs.append(pl.BlockSpec((tm, tn), lambda i, j: (i, j)))

    out = pl.pallas_call(
        functools.partial(_dense_kernel,
                          fuse_ln=ln_g is not None,
                          has_bias=b is not None,
                          has_residual=residual is not None,
                          activation=activation),
        out_shape=jax.ShapeDtypeStruct((Mp, Np), out_dtype),
        grid=(Mp // tm, Np // tn),
        in_specs=in_specs,
        out_specs=pl.BlockSpec((tm, tn), lambda i, j: (i, j)),
        compiler_params=pltpu.CompilerParams(
            dimension_semantics=("parallel", "parallel"),
            vmem_limit_bytes=_VMEM_LIMIT),
    )(*args)
    if Mp != M or Np != N:
        out = out[:M, :N]
    return out


# ----------------------------------------------------------------------------
# Flash-style attention reading straight from the (B, T, 3D) QKV projection
# ----------------------------------------------------------------------------

def _flash_attn_kernel(*refs, n_head, dh, tq, tkv, has_key_bias):
    idx = 0
    if has_key_bias:
        kb_ref = refs[idx]; idx += 1
    q_ref, k_ref, v_ref, o_ref, m_sc, l_sc, acc_sc = refs[idx:]

    qi = pl.program_id(1)
    ki = pl.program_id(2)

    @pl.when(ki == 0)
    def _init():
        m_sc[...] = jnp.full_like(m_sc, _NEG_INF)
        l_sc[...] = jnp.zeros_like(l_sc)
        acc_sc[...] = jnp.zeros_like(acc_sc)

    # Skip KV tiles that lie entirely in the causal-masked future (their DMAs
    # are already suppressed by the clamped index_map on k/v).
    @pl.when(qi * tq + (tq - 1) >= ki * tkv)
    def _compute():
        rows = qi * tq + jax.lax.broadcasted_iota(jnp.int32, (tq, tkv), 0)
        cols = ki * tkv + jax.lax.broadcasted_iota(jnp.int32, (tq, tkv), 1)
        bias = jnp.where(rows >= cols, 0.0, _NEG_INF)          # (tq, tkv) f32
        if has_key_bias:
            bias = bias + kb_ref[0].astype(jnp.float32)        # (1, tkv)

        for h in range(n_head):
            sl = slice(h * dh, (h + 1) * dh)
            q = q_ref[0, :, sl]            # 1/sqrt(dh) already folded into W_q
            k = k_ref[0, :, sl]
            v = v_ref[0, :, sl]
            s = jax.lax.dot_general(
                q, k, (((1,), (1,)), ((), ())),
                preferred_element_type=jnp.float32) + bias     # (tq, tkv) f32
            m_prev = m_sc[h]                                   # (tq, 1)
            m_new = jnp.maximum(m_prev, jnp.max(s, axis=-1, keepdims=True))
            alpha = jnp.exp(m_prev - m_new)
            p = jnp.exp(s - m_new)
            l_sc[h] = alpha * l_sc[h] + jnp.sum(p, axis=-1, keepdims=True)
            acc_sc[:, sl] = alpha * acc_sc[:, sl] + jax.lax.dot_general(
                p.astype(v.dtype), v, (((1,), (0,)), ((), ())),
                preferred_element_type=jnp.float32)
            m_sc[h] = m_new

    @pl.when(ki == pl.num_programs(2) - 1)
    def _finalize():
        # Normalize in the f32 accumulator, then ONE full-width lane-dense
        # store to o_ref (no per-head masked stores to the output).
        for h in range(n_head):
            sl = slice(h * dh, (h + 1) * dh)
            acc_sc[:, sl] = acc_sc[:, sl] * pl.reciprocal(l_sc[h], approx=False)
        o_ref[0] = acc_sc[...].astype(o_ref.dtype)


def flash_attention(qkv, key_bias, n_head, *, tile=None):
    """qkv: (B, T, 3D) bf16 from the QKV projection; key_bias: (B, 1, T) f32
    additive padding bias or None.  Returns the attention context (B, T, D)."""
    B, T, threeD = qkv.shape
    D = threeD // 3
    assert D % n_head == 0
    dh = D // n_head

    tile = tile or _ATTN_TILE
    tile = int(min(tile, _round_up(T, 16)))
    Tp = _round_up(T, tile)
    has_key_bias = key_bias is not None
    if Tp != T:
        qkv = jnp.pad(qkv, ((0, 0), (0, Tp - T), (0, 0)))
        if has_key_bias:
            key_bias = jnp.pad(key_bias, ((0, 0), (0, 0), (0, Tp - T)),
                               constant_values=-1e9)   # mask padded key positions

    n_q = Tp // tile
    args = []
    in_specs = []
    if has_key_bias:
        args.append(key_bias)
        in_specs.append(pl.BlockSpec(
            (1, 1, tile), lambda b, qi, ki: (b, 0, jnp.minimum(ki, qi))))
    args += [qkv, qkv, qkv]
    in_specs += [
        pl.BlockSpec((1, tile, D), lambda b, qi, ki: (b, qi, 0)),            # q
        # Clamp the kv block index so fully-future KV tiles are never DMA'd:
        # the block index repeats and Pallas skips re-fetching it.
        pl.BlockSpec((1, tile, D), lambda b, qi, ki: (b, jnp.minimum(ki, qi), 1)),  # k
        pl.BlockSpec((1, tile, D), lambda b, qi, ki: (b, jnp.minimum(ki, qi), 2)),  # v
    ]

    out = pl.pallas_call(
        functools.partial(_flash_attn_kernel, n_head=n_head, dh=dh,
                          tq=tile, tkv=tile, has_key_bias=has_key_bias),
        out_shape=jax.ShapeDtypeStruct((B, Tp, D), qkv.dtype),
        grid=(B, n_q, n_q),
        in_specs=in_specs,
        out_specs=pl.BlockSpec((1, tile, D), lambda b, qi, ki: (b, qi, 0)),
        scratch_shapes=[
            pltpu.VMEM((n_head, tile, 1), jnp.float32),   # running max
            pltpu.VMEM((n_head, tile, 1), jnp.float32),   # running sum
            pltpu.VMEM((tile, D), jnp.float32),           # accumulator (lane-dense)
        ],
        compiler_params=pltpu.CompilerParams(
            dimension_semantics=("parallel", "parallel", "arbitrary"),
            vmem_limit_bytes=_VMEM_LIMIT),
    )(*args)
    if Tp != T:
        out = out[:, :T, :]
    return out


# ----------------------------------------------------------------------------
# GPT2 model assembled from the kernels
# ----------------------------------------------------------------------------

def init_params(key, *, vocab_size, n_positions, n_embd, n_head, n_layer,
                n_segments=2, dtype=jnp.bfloat16):
    del n_head
    keys = jax.random.split(key, 4 + n_layer)

    def nrm(k, shape):
        return (jax.random.normal(k, shape, jnp.float32) * 0.02).astype(dtype)

    params = {
        "wte": nrm(keys[0], (vocab_size, n_embd)),
        "wpe": nrm(keys[1], (n_positions, n_embd)),
        "wse": nrm(keys[2], (n_segments, n_embd)),
        "ln_f_g": jnp.ones((1, n_embd), dtype),
        "ln_f_b": jnp.zeros((1, n_embd), dtype),
        # Independent lm_head weight (pre-transposed [in, out]); the reference
        # module does NOT tie it to wte.
        "lm_head_w": nrm(keys[3], (n_embd, vocab_size)),
        "blocks": [],
    }
    for l in range(n_layer):
        lk = jax.random.split(keys[4 + l], 4)
        params["blocks"].append({
            "ln1_g": jnp.ones((1, n_embd), dtype),
            "ln1_b": jnp.zeros((1, n_embd), dtype),
            "attn_w": nrm(lk[0], (n_embd, 3 * n_embd)),
            "attn_b": jnp.zeros((1, 3 * n_embd), dtype),
            "proj_w": nrm(lk[1], (n_embd, n_embd)),
            "proj_b": jnp.zeros((1, n_embd), dtype),
            "ln2_g": jnp.ones((1, n_embd), dtype),
            "ln2_b": jnp.zeros((1, n_embd), dtype),
            "fc_w": nrm(lk[2], (n_embd, 4 * n_embd)),
            "fc_b": jnp.zeros((1, 4 * n_embd), dtype),
            "mlp_proj_w": nrm(lk[3], (4 * n_embd, n_embd)),
            "mlp_proj_b": jnp.zeros((1, n_embd), dtype),
        })
    return params


def prepare_params(params, n_head):
    """One-time (outside-jit) parameter prep:
      * fold the 1/sqrt(dh) attention scale into the Q columns of attn_w/attn_b,
      * pad lm_head weight columns ONCE to a lane/tile-friendly width so no
        per-forward jnp.pad HBM copy of the biggest weight is ever needed."""
    D = params["wte"].shape[1]
    dh = D // n_head
    scale = 1.0 / math.sqrt(dh)

    p = dict(params)
    blocks = []
    for blk in params["blocks"]:
        b = dict(blk)
        aw = blk["attn_w"].astype(jnp.float32).at[:, :D].multiply(scale)
        ab = blk["attn_b"].astype(jnp.float32).at[:, :D].multiply(scale)
        b["attn_w"] = aw.astype(blk["attn_w"].dtype)
        b["attn_b"] = ab.astype(blk["attn_b"].dtype)
        blocks.append(b)
    p["blocks"] = blocks

    w = params["lm_head_w"]
    V = w.shape[1]
    Vp = _round_up(V, 1024) if V > 1024 else _round_up(V, 128)
    if Vp != V:
        p["lm_head_w"] = jnp.pad(w, ((0, 0), (0, Vp - V)))
    return p


def _block_forward(p, x2, key_bias, n_head, B, T):
    D = x2.shape[1]
    # LN1 fused into the QKV projection (one HBM pass of the stream).
    qkv = dense(x2, p["attn_w"], p["attn_b"], ln_g=p["ln1_g"], ln_b=p["ln1_b"])
    # Attention directly on the (B, T, 3D) layout — no transposes in HBM.
    ctx = flash_attention(qkv.reshape(B, T, 3 * D), key_bias, n_head)
    # Output projection with the residual add fused into the epilogue.
    x2 = dense(ctx.reshape(B * T, D), p["proj_w"], p["proj_b"], residual=x2)
    # LN2 fused into the MLP up-projection, gelu_new in the epilogue.
    h = dense(x2, p["fc_w"], p["fc_b"], ln_g=p["ln2_g"], ln_b=p["ln2_b"],
              activation="gelu")
    # MLP down-projection with the residual add fused in.
    x2 = dense(h, p["mlp_proj_w"], p["mlp_proj_b"], residual=x2)
    return x2


def gpt2_lm_head_forward(params, input_ids, n_head, vocab_size=None,
                         segment_ids=None, attention_mask=None):
    """Returns lm_logits of shape (B, T, vocab_size), float32."""
    B, T = input_ids.shape
    D = params["wte"].shape[1]
    Vp = params["lm_head_w"].shape[1]
    V = vocab_size if vocab_size is not None else Vp

    # Embedding gathers kept in plain JAX.
    x = params["wte"][input_ids] + params["wpe"][:T][None, :, :]
    if segment_ids is not None:
        x = x + params["wse"][segment_ids]
    # TODO(synk): dropout is a no-op in eval mode; not implemented.

    # Tiny additive key-padding bias (B, 1, T); causal mask is built in-kernel.
    if attention_mask is not None:
        key_bias = ((attention_mask.astype(jnp.float32) - 1.0) * 1e9).reshape(B, 1, T)
    else:
        key_bias = None   # specialized no-mask kernel variant (no kb add)

    x2 = x.reshape(B * T, D)
    for p in params["blocks"]:
        x2 = _block_forward(p, x2, key_bias, n_head, B, T)

    # Final LayerNorm fused into the bias-free lm_head matmul (no zero bias).
    logits = dense(x2, params["lm_head_w"], None,
                   ln_g=params["ln_f_g"], ln_b=params["ln_f_b"],
                   out_dtype=jnp.float32)
    logits = logits.reshape(B, T, Vp)
    if V != Vp:
        logits = logits[..., :V]
    return logits


# ----------------------------------------------------------------------------
# Main
# ----------------------------------------------------------------------------

if __name__ == "__main__":
    # Small GPT2 config (lane-friendly): n_embd=128, n_head=2, n_layer=2,
    # vocab_size=256, n_positions=64; batch=2, seq=16.
    VOCAB, NPOS, NEMBD, NHEAD, NLAYER = 256, 64, 128, 2, 2
    B, T = 2, 16

    key = jax.random.PRNGKey(0)
    pkey, ikey = jax.random.split(key)
    params = prepare_params(
        init_params(pkey, vocab_size=VOCAB, n_positions=NPOS,
                    n_embd=NEMBD, n_head=NHEAD, n_layer=NLAYER),
        NHEAD)

    input_ids = jax.random.randint(ikey, (B, T), 0, VOCAB, dtype=jnp.int32)
    segment_ids = jnp.zeros((B, T), dtype=jnp.int32).at[1, T // 2:].set(1)
    attention_mask = jnp.ones((B, T), dtype=jnp.float32).at[1, -2:].set(0.0)

    fwd = jax.jit(functools.partial(gpt2_lm_head_forward, n_head=NHEAD,
                                    vocab_size=VOCAB))
    logits = fwd(params, input_ids, segment_ids=segment_ids,
                 attention_mask=attention_mask)
    logits = jax.block_until_ready(logits)

    assert logits.shape == (B, T, VOCAB)
    assert logits.dtype == jnp.float32
    assert bool(jnp.all(jnp.isfinite(logits)))
    print("KERNEL_OK")
</pallas_src>

<mosaic_0001>
module attributes {stable_mosaic.version = 11 : i64} {
  func.func @_flash_attn_kernel(%arg0: i32, %arg1: i32, %arg2: i32, %arg3: memref<1x1x16xf32, #tpu.memory_space<vmem>>, %arg4: memref<1x16x128xbf16, #tpu.memory_space<vmem>>, %arg5: memref<1x16x128xbf16, #tpu.memory_space<vmem>>, %arg6: memref<1x16x128xbf16, #tpu.memory_space<vmem>>, %arg7: memref<1x16x128xbf16, #tpu.memory_space<vmem>>, %arg8: memref<2x16x1xf32, #tpu.memory_space<vmem>>, %arg9: memref<2x16x1xf32, #tpu.memory_space<vmem>>, %arg10: memref<16x128xf32, #tpu.memory_space<vmem>>) attributes {dimension_semantics = [#tpu.dimension_semantics<parallel>, #tpu.dimension_semantics<parallel>, #tpu.dimension_semantics<arbitrary>], iteration_bounds = array<i64: 2, 1, 1>, scalar_prefetch = 0 : i64, scratch_operands = 3 : i64, tpu.core_type = #tpu.core_type<tc>, window_params = [{transform_indices = @transform_0, window_bounds = array<i64: 1, 1, 16>}, {transform_indices = @transform_1, window_bounds = array<i64: 1, 16, 128>}, {transform_indices = @transform_2, window_bounds = array<i64: 1, 16, 128>}, {transform_indices = @transform_3, window_bounds = array<i64: 1, 16, 128>}, {transform_indices = @transform_4, window_bounds = array<i64: 1, 16, 128>}]} {
    %c0_i32 = arith.constant 0 : i32
    %0 = arith.cmpi eq, %arg2, %c0_i32 : i32
    %1 = arith.extui %0 : i1 to i32
    %c0_i32_0 = arith.constant 0 : i32
    %2 = arith.cmpi ne, %1, %c0_i32_0 : i32
    scf.if %2 {
      %cst = arith.constant -1.000000e+30 : f32
      %12 = vector.broadcast %cst : f32 to vector<2x16x1xf32>
      %c0 = arith.constant 0 : index
      %c0_5 = arith.constant 0 : index
      %c0_6 = arith.constant 0 : index
      %13 = vector.load %arg8[%c0, %c0_5, %c0_6] : memref<2x16x1xf32, #tpu.memory_space<vmem>>, vector<2x16x1xf32>
      tpu.vector_store %arg8[%c0, %c0_5, %c0_6], %12 {strides = array<i32>} : memref<2x16x1xf32, #tpu.memory_space<vmem>>, vector<2x16x1xf32>,
      %cst_7 = arith.constant 0.000000e+00 : f32
      %14 = vector.broadcast %cst_7 : f32 to vector<2x16x1xf32>
      %c0_8 = arith.constant 0 : index
      %c0_9 = arith.constant 0 : index
      %c0_10 = arith.constant 0 : index
      %15 = vector.load %arg9[%c0_8, %c0_9, %c0_10] : memref<2x16x1xf32, #tpu.memory_space<vmem>>, vector<2x16x1xf32>
      tpu.vector_store %arg9[%c0_8, %c0_9, %c0_10], %14 {strides = array<i32>} : memref<2x16x1xf32, #tpu.memory_space<vmem>>, vector<2x16x1xf32>,
      %cst_11 = arith.constant 0.000000e+00 : f32
      %16 = vector.broadcast %cst_11 : f32 to vector<16x128xf32>
      %c0_12 = arith.constant 0 : index
      %c0_13 = arith.constant 0 : index
      %17 = vector.load %arg10[%c0_12, %c0_13] : memref<16x128xf32, #tpu.memory_space<vmem>>, vector<16x128xf32>
      tpu.vector_store %arg10[%c0_12, %c0_13], %16 {strides = array<i32>} : memref<16x128xf32, #tpu.memory_space<vmem>>, vector<16x128xf32>,
    } else {
    }
    %c16_i32 = arith.constant 16 : i32
    %3 = arith.muli %arg1, %c16_i32 : i32
    %c15_i32 = arith.constant 15 : i32
    %4 = arith.addi %3, %c15_i32 : i32
    %c16_i32_1 = arith.constant 16 : i32
    %5 = arith.muli %arg2, %c16_i32_1 : i32
    %6 = arith.cmpi sge, %4, %5 : i32
    %7 = arith.extui %6 : i1 to i32
    %c0_i32_2 = arith.constant 0 : i32
    %8 = arith.cmpi ne, %7, %c0_i32_2 : i32
    scf.if %8 {
      %c16_i32_5 = arith.constant 16 : i32
      %12 = arith.muli %arg1, %c16_i32_5 : i32
      %13 = tpu.iota {dimensions = array<i32: 0>} : vector<16x16xi32>
      %14 = vector.broadcast %12 : i32 to vector<16x16xi32>
      %15 = arith.addi %14, %13 : vector<16x16xi32>
      %c16_i32_6 = arith.constant 16 : i32
      %16 = arith.muli %arg2, %c16_i32_6 : i32
      %17 = tpu.iota {dimensions = array<i32: 1>} : vector<16x16xi32>
      %18 = vector.broadcast %16 : i32 to vector<16x16xi32>
      %19 = arith.addi %18, %17 : vector<16x16xi32>
      %20 = arith.cmpi sge, %15, %19 : vector<16x16xi32>
      %cst = arith.constant 0.000000e+00 : f32
      %cst_7 = arith.constant -1.000000e+30 : f32
      %21 = vector.broadcast %cst : f32 to vector<16x16xf32>
      %22 = vector.broadcast %cst_7 : f32 to vector<16x16xf32>
      %23 = arith.select %20, %21, %22 : vector<16x16xi1>, vector<16x16xf32>
      %c0 = arith.constant 0 : index
      %c0_8 = arith.constant 0 : index
      %c0_9 = arith.constant 0 : index
      %24 = vector.load %arg3[%c0, %c0_8, %c0_9] : memref<1x1x16xf32, #tpu.memory_space<vmem>>, vector<1x1x16xf32>
      %25 = vector.shape_cast %24 : vector<1x1x16xf32> to vector<1x16xf32>
      %26 = vector.broadcast %25 : vector<1x16xf32> to vector<16x16xf32>
      %27 = arith.addf %23, %26 : vector<16x16xf32>
      %c0_10 = arith.constant 0 : index
      %c0_11 = arith.constant 0 : index
      %c0_12 = arith.constant 0 : index
      %28 = vector.load %arg4[%c0_10, %c0_11, %c0_12] : memref<1x16x128xbf16, #tpu.memory_space<vmem>>, vector<1x16x64xbf16>
      %29 = vector.shape_cast %28 : vector<1x16x64xbf16> to vector<16x64xbf16>
      %c0_13 = arith.constant 0 : index
      %c0_14 = arith.constant 0 : index
      %c0_15 = arith.constant 0 : index
      %30 = vector.load %arg5[%c0_13, %c0_14, %c0_15] : memref<1x16x128xbf16, #tpu.memory_space<vmem>>, vector<1x16x64xbf16>
      %31 = vector.shape_cast %30 : vector<1x16x64xbf16> to vector<16x64xbf16>
      %c0_16 = arith.constant 0 : index
      %c0_17 = arith.constant 0 : index
      %c0_18 = arith.constant 0 : index
      %32 = vector.load %arg6[%c0_16, %c0_17, %c0_18] : memref<1x16x128xbf16, #tpu.memory_space<vmem>>, vector<1x16x64xbf16>
      %33 = vector.shape_cast %32 : vector<1x16x64xbf16> to vector<16x64xbf16>
      %cst_19 = arith.constant dense<0.000000e+00> : vector<16x16xf32>
      %34 = tpu.matmul %29, %31, %cst_19 {dimension_numbers = #tpu.dot_dimension_numbers<[1], [1], [0], [0], [0, 0, 1, 0], [], []>} : vector<16x64xbf16>, vector<16x64xbf16>, vector<16x16xf32> -> vector<16x16xf32>
      %35 = arith.addf %34, %27 : vector<16x16xf32>
      %c0_20 = arith.constant 0 : index
      %c0_21 = arith.constant 0 : index
      %c0_22 = arith.constant 0 : index
      %36 = vector.load %arg8[%c0_20, %c0_21, %c0_22] : memref<2x16x1xf32, #tpu.memory_space<vmem>>, vector<1x16x1xf32>
      %37 = vector.shape_cast %36 : vector<1x16x1xf32> to vector<16x1xf32>
      %cst_23 = arith.constant dense<0xFF800000> : vector<16xf32>
      %38 = vector.multi_reduction <maximumf>, %35, %cst_23 [1] : vector<16x16xf32> to vector<16xf32>
      %39 = vector.shape_cast %38 : vector<16xf32> to vector<16x1xf32>
      %40 = arith.maximumf %37, %39 : vector<16x1xf32>
      %41 = arith.subf %37, %40 : vector<16x1xf32>
      %42 = math.exp %41 : vector<16x1xf32>
      %43 = vector.broadcast %40 : vector<16x1xf32> to vector<16x16xf32>
      %44 = arith.subf %35, %43 : vector<16x16xf32>
      %45 = math.exp %44 : vector<16x16xf32>
      %c0_24 = arith.constant 0 : index
      %c0_25 = arith.constant 0 : index
      %c0_26 = arith.constant 0 : index
      %46 = vector.load %arg9[%c0_24, %c0_25, %c0_26] : memref<2x16x1xf32, #tpu.memory_space<vmem>>, vector<1x16x1xf32>
      %47 = vector.shape_cast %46 : vector<1x16x1xf32> to vector<16x1xf32>
      %48 = arith.mulf %42, %47 : vector<16x1xf32>
      %cst_27 = arith.constant dense<0.000000e+00> : vector<16xf32>
      %49 = vector.multi_reduction <add>, %45, %cst_27 [1] : vector<16x16xf32> to vector<16xf32>
      %50 = vector.shape_cast %49 : vector<16xf32> to vector<16x1xf32>
      %51 = arith.addf %48, %50 : vector<16x1xf32>
      %c0_28 = arith.constant 0 : index
      %c0_29 = arith.constant 0 : index
      %c0_30 = arith.constant 0 : index
      %52 = vector.load %arg9[%c0_28, %c0_29, %c0_30] : memref<2x16x1xf32, #tpu.memory_space<vmem>>, vector<1x16x1xf32>
      %53 = vector.shape_cast %52 : vector<1x16x1xf32> to vector<16x1xf32>
      %54 = vector.shape_cast %51 : vector<16x1xf32> to vector<1x16x1xf32>
      tpu.vector_store %arg9[%c0_28, %c0_29, %c0_30], %54 {strides = array<i32>} : memref<2x16x1xf32, #tpu.memory_space<vmem>>, vector<1x16x1xf32>,
      %c0_31 = arith.constant 0 : index
      %c0_32 = arith.constant 0 : index
      %55 = vector.load %arg10[%c0_31, %c0_32] : memref<16x128xf32, #tpu.memory_space<vmem>>, vector<16x64xf32>
      %56 = vector.broadcast %42 : vector<16x1xf32> to vector<16x64xf32>
      %57 = arith.mulf %56, %55 : vector<16x64xf32>
      %58 = arith.truncf %45 : vector<16x16xf32> to vector<16x16xbf16>
      %cst_33 = arith.constant dense<0.000000e+00> : vector<16x64xf32>
      %59 = tpu.matmul %58, %33, %cst_33 {dimension_numbers = #tpu.dot_dimension_numbers<[1], [0], [0], [1], [0, 0, 1, 1], [], []>} : vector<16x16xbf16>, vector<16x64xbf16>, vector<16x64xf32> -> vector<16x64xf32>
      %60 = arith.addf %57, %59 : vector<16x64xf32>
      %c0_34 = arith.constant 0 : index
      %c0_35 = arith.constant 0 : index
      %61 = vector.load %arg10[%c0_34, %c0_35] : memref<16x128xf32, #tpu.memory_space<vmem>>, vector<16x64xf32>
      tpu.vector_store %arg10[%c0_34, %c0_35], %60 {strides = array<i32>} : memref<16x128xf32, #tpu.memory_space<vmem>>, vector<16x64xf32>,
      %c0_36 = arith.constant 0 : index
      %c0_37 = arith.constant 0 : index
      %c0_38 = arith.constant 0 : index
      %62 = vector.load %arg8[%c0_36, %c0_37, %c0_38] : memref<2x16x1xf32, #tpu.memory_space<vmem>>, vector<1x16x1xf32>
      %63 = vector.shape_cast %62 : vector<1x16x1xf32> to vector<16x1xf32>
      %64 = vector.shape_cast %40 : vector<16x1xf32> to vector<1x16x1xf32>
      tpu.vector_store %arg8[%c0_36, %c0_37, %c0_38], %64 {strides = array<i32>} : memref<2x16x1xf32, #tpu.memory_space<vmem>>, vector<1x16x1xf32>,
      %c0_39 = arith.constant 0 : index
      %c0_40 = arith.constant 0 : index
      %c64 = arith.constant 64 : index
      %65 = vector.load %arg4[%c0_39, %c0_40, %c64] : memref<1x16x128xbf16, #tpu.memory_space<vmem>>, vector<1x16x64xbf16>
      %66 = vector.shape_cast %65 : vector<1x16x64xbf16> to vector<16x64xbf16>
      %c0_41 = arith.constant 0 : index
      %c0_42 = arith.constant 0 : index
      %c64_43 = arith.constant 64 : index
      %67 = vector.load %arg5[%c0_41, %c0_42, %c64_43] : memref<1x16x128xbf16, #tpu.memory_space<vmem>>, vector<1x16x64xbf16>
      %68 = vector.shape_cast %67 : vector<1x16x64xbf16> to vector<16x64xbf16>
      %c0_44 = arith.constant 0 : index
      %c0_45 = arith.constant 0 : index
      %c64_46 = arith.constant 64 : index
      %69 = vector.load %arg6[%c0_44, %c0_45, %c64_46] : memref<1x16x128xbf16, #tpu.memory_space<vmem>>, vector<1x16x64xbf16>
      %70 = vector.shape_cast %69 : vector<1x16x64xbf16> to vector<16x64xbf16>
      %cst_47 = arith.constant dense<0.000000e+00> : vector<16x16xf32>
      %71 = tpu.matmul %66, %68, %cst_47 {dimension_numbers = #tpu.dot_dimension_numbers<[1], [1], [0], [0], [0, 0, 1, 0], [], []>} : vector<16x64xbf16>, vector<16x64xbf16>, vector<16x16xf32> -> vector<16x16xf32>
      %72 = arith.addf %71, %27 : vector<16x16xf32>
      %c1 = arith.constant 1 : index
      %c0_48 = arith.constant 0 : index
      %c0_49 = arith.constant 0 : index
      %73 = vector.load %arg8[%c1, %c0_48, %c0_49] : memref<2x16x1xf32, #tpu.memory_space<vmem>>, vector<1x16x1xf32>
      %74 = vector.shape_cast %73 : vector<1x16x1xf32> to vector<16x1xf32>
      %cst_50 = arith.constant dense<0xFF800000> : vector<16xf32>
      %75 = vector.multi_reduction <maximumf>, %72, %cst_50 [1] : vector<16x16xf32> to vector<16xf32>
      %76 = vector.shape_cast %75 : vector<16xf32> to vector<16x1xf32>
      %77 = arith.maximumf %74, %76 : vector<16x1xf32>
      %78 = arith.subf %74, %77 : vector<16x1xf32>
      %79 = math.exp %78 : vector<16x1xf32>
      %80 = vector.broadcast %77 : vector<16x1xf32> to vector<16x16xf32>
      %81 = arith.subf %72, %80 : vector<16x16xf32>
      %82 = math.exp %81 : vector<16x16xf32>
      %c1_51 = arith.constant 1 : index
      %c0_52 = arith.constant 0 : index
      %c0_53 = arith.constant 0 : index
      %83 = vector.load %arg9[%c1_51, %c0_52, %c0_53] : memref<2x16x1xf32, #tpu.memory_space<vmem>>, vector<1x16x1xf32>
      %84 = vector.shape_cast %83 : vector<1x16x1xf32> to vector<16x1xf32>
      %85 = arith.mulf %79, %84 : vector<16x1xf32>
      %cst_54 = arith.constant dense<0.000000e+00> : vector<16xf32>
      %86 = vector.multi_reduction <add>, %82, %cst_54 [1] : vector<16x16xf32> to vector<16xf32>
      %87 = vector.shape_cast %86 : vector<16xf32> to vector<16x1xf32>
      %88 = arith.addf %85, %87 : vector<16x1xf32>
      %c1_55 = arith.constant 1 : index
      %c0_56 = arith.constant 0 : index
      %c0_57 = arith.constant 0 : index
      %89 = vector.load %arg9[%c1_55, %c0_56, %c0_57] : memref<2x16x1xf32, #tpu.memory_space<vmem>>, vector<1x16x1xf32>
      %90 = vector.shape_cast %89 : vector<1x16x1xf32> to vector<16x1xf32>
      %91 = vector.shape_cast %88 : vector<16x1xf32> to vector<1x16x1xf32>
      tpu.vector_store %arg9[%c1_55, %c0_56, %c0_57], %91 {strides = array<i32>} : memref<2x16x1xf32, #tpu.memory_space<vmem>>, vector<1x16x1xf32>,
      %c0_58 = arith.constant 0 : index
      %c64_59 = arith.constant 64 : index
      %92 = vector.load %arg10[%c0_58, %c64_59] : memref<16x128xf32, #tpu.memory_space<vmem>>, vector<16x64xf32>
      %93 = vector.broadcast %79 : vector<16x1xf32> to vector<16x64xf32>
      %94 = arith.mulf %93, %92 : vector<16x64xf32>
      %95 = arith.truncf %82 : vector<16x16xf32> to vector<16x16xbf16>
      %cst_60 = arith.constant dense<0.000000e+00> : vector<16x64xf32>
      %96 = tpu.matmul %95, %70, %cst_60 {dimension_numbers = #tpu.dot_dimension_numbers<[1], [0], [0], [1], [0, 0, 1, 1], [], []>} : vector<16x16xbf16>, vector<16x64xbf16>, vector<16x64xf32> -> vector<16x64xf32>
      %97 = arith.addf %94, %96 : vector<16x64xf32>
      %c0_61 = arith.constant 0 : index
      %c64_62 = arith.constant 64 : index
      %98 = vector.load %arg10[%c0_61, %c64_62] : memref<16x128xf32, #tpu.memory_space<vmem>>, vector<16x64xf32>
      tpu.vector_store %arg10[%c0_61, %c64_62], %97 {strides = array<i32>} : memref<16x128xf32, #tpu.memory_space<vmem>>, vector<16x64xf32>,
      %c1_63 = arith.constant 1 : index
      %c0_64 = arith.constant 0 : index
      %c0_65 = arith.constant 0 : index
      %99 = vector.load %arg8[%c1_63, %c0_64, %c0_65] : memref<2x16x1xf32, #tpu.memory_space<vmem>>, vector<1x16x1xf32>
      %100 = vector.shape_cast %99 : vector<1x16x1xf32> to vector<16x1xf32>
      %101 = vector.shape_cast %77 : vector<16x1xf32> to vector<1x16x1xf32>
      tpu.vector_store %arg8[%c1_63, %c0_64, %c0_65], %101 {strides = array<i32>} : memref<2x16x1xf32, #tpu.memory_space<vmem>>, vector<1x16x1xf32>,
    } else {
    }
    %c0_i32_3 = arith.constant 0 : i32
    %9 = arith.cmpi eq, %arg2, %c0_i32_3 : i32
    %10 = arith.extui %9 : i1 to i32
    %c0_i32_4 = arith.constant 0 : i32
    %11 = arith.cmpi ne, %10, %c0_i32_4 : i32
    scf.if %11 {
      %c0 = arith.constant 0 : index
      %c0_5 = arith.constant 0 : index
      %12 = vector.load %arg10[%c0, %c0_5] : memref<16x128xf32, #tpu.memory_space<vmem>>, vector<16x64xf32>
      %c0_6 = arith.constant 0 : index
      %c0_7 = arith.constant 0 : index
      %c0_8 = arith.constant 0 : index
      %13 = vector.load %arg9[%c0_6, %c0_7, %c0_8] : memref<2x16x1xf32, #tpu.memory_space<vmem>>, vector<1x16x1xf32>
      %14 = vector.shape_cast %13 : vector<1x16x1xf32> to vector<16x1xf32>
      %15 = tpu.reciprocal %14 : vector<16x1xf32> -> vector<16x1xf32>
      %16 = vector.broadcast %15 : vector<16x1xf32> to vector<16x64xf32>
      %17 = arith.mulf %12, %16 : vector<16x64xf32>
      %c0_9 = arith.constant 0 : index
      %c0_10 = arith.constant 0 : index
      %18 = vector.load %arg10[%c0_9, %c0_10] : memref<16x128xf32, #tpu.memory_space<vmem>>, vector<16x64xf32>
      tpu.vector_store %arg10[%c0_9, %c0_10], %17 {strides = array<i32>} : memref<16x128xf32, #tpu.memory_space<vmem>>, vector<16x64xf32>,
      %c0_11 = arith.constant 0 : index
      %c64 = arith.constant 64 : index
      %19 = vector.load %arg10[%c0_11, %c64] : memref<16x128xf32, #tpu.memory_space<vmem>>, vector<16x64xf32>
      %c1 = arith.constant 1 : index
      %c0_12 = arith.constant 0 : index
      %c0_13 = arith.constant 0 : index
      %20 = vector.load %arg9[%c1, %c0_12, %c0_13] : memref<2x16x1xf32, #tpu.memory_space<vmem>>, vector<1x16x1xf32>
      %21 = vector.shape_cast %20 : vector<1x16x1xf32> to vector<16x1xf32>
      %22 = tpu.reciprocal %21 : vector<16x1xf32> -> vector<16x1xf32>
      %23 = vector.broadcast %22 : vector<16x1xf32> to vector<16x64xf32>
      %24 = arith.mulf %19, %23 : vector<16x64xf32>
      %c0_14 = arith.constant 0 : index
      %c64_15 = arith.constant 64 : index
      %25 = vector.load %arg10[%c0_14, %c64_15] : memref<16x128xf32, #tpu.memory_space<vmem>>, vector<16x64xf32>
      tpu.vector_store %arg10[%c0_14, %c64_15], %24 {strides = array<i32>} : memref<16x128xf32, #tpu.memory_space<vmem>>, vector<16x64xf32>,
      %c0_16 = arith.constant 0 : index
      %c0_17 = arith.constant 0 : index
      %26 = vector.load %arg10[%c0_16, %c0_17] : memref<16x128xf32, #tpu.memory_space<vmem>>, vector<16x128xf32>
      %27 = arith.truncf %26 : vector<16x128xf32> to vector<16x128xbf16>
      %c0_18 = arith.constant 0 : index
      %c0_19 = arith.constant 0 : index
      %c0_20 = arith.constant 0 : index
      %28 = vector.load %arg7[%c0_18, %c0_19, %c0_20] : memref<1x16x128xbf16, #tpu.memory_space<vmem>>, vector<1x16x128xbf16>
      %29 = vector.shape_cast %28 : vector<1x16x128xbf16> to vector<16x128xbf16>
      %30 = vector.shape_cast %27 : vector<16x128xbf16> to vector<1x16x128xbf16>
      tpu.vector_store %arg7[%c0_18, %c0_19, %c0_20], %30 {strides = array<i32>} : memref<1x16x128xbf16, #tpu.memory_space<vmem>>, vector<1x16x128xbf16>,
    } else {
    }
    return
  }
  func.func @transform_0(%arg0: i32, %arg1: i32, %arg2: i32) -> (i32, i32, i32) {
    %0 = arith.minsi %arg2, %arg1 : i32
    %c0_i32 = arith.constant 0 : i32
    %c0_i32_0 = arith.constant 0 : i32
    return %arg0, %c0_i32, %0 : i32, i32, i32
  }
  func.func @transform_1(%arg0: i32, %arg1: i32, %arg2: i32) -> (i32, i32, i32) {
    %c0_i32 = arith.constant 0 : i32
    %c0_i32_0 = arith.constant 0 : i32
    return %arg0, %arg1, %c0_i32 : i32, i32, i32
  }
  func.func @transform_2(%arg0: i32, %arg1: i32, %arg2: i32) -> (i32, i32, i32) {
    %0 = arith.minsi %arg2, %arg1 : i32
    %c1_i32 = arith.constant 1 : i32
    %c0_i32 = arith.constant 0 : i32
    return %arg0, %0, %c1_i32 : i32, i32, i32
  }
  func.func @transform_3(%arg0: i32, %arg1: i32, %arg2: i32) -> (i32, i32, i32) {
    %0 = arith.minsi %arg2, %arg1 : i32
    %c2_i32 = arith.constant 2 : i32
    %c0_i32 = arith.constant 0 : i32
    return %arg0, %0, %c2_i32 : i32, i32, i32
  }
  func.func @transform_4(%arg0: i32, %arg1: i32, %arg2: i32) -> (i32, i32, i32) {
    %c0_i32 = arith.constant 0 : i32
    %c0_i32_0 = arith.constant 0 : i32
    return %arg0, %arg1, %c0_i32 : i32, i32, i32
  }
}

module attributes {stable_mosaic.version = 11 : i64} {
  func.func @_dense_kernel(%arg0: i32, %arg1: i32, %arg2: memref<32x128xbf16, #tpu.memory_space<vmem>>, %arg3: memref<1x128xbf16, #tpu.memory_space<vmem>>, %arg4: memref<1x128xbf16, #tpu.memory_space<vmem>>, %arg5: memref<128x384xbf16, #tpu.memory_space<vmem>>, %arg6: memref<1x384xbf16, #tpu.memory_space<vmem>>, %arg7: memref<32x384xbf16, #tpu.memory_space<vmem>>) attributes {dimension_semantics = [#tpu.dimension_semantics<parallel>, #tpu.dimension_semantics<parallel>], iteration_bounds = array<i64: 1, 1>, scalar_prefetch = 0 : i64, scratch_operands = 0 : i64, tpu.core_type = #tpu.core_type<tc>, window_params = [{transform_indices = @transform_0, window_bounds = array<i64: 32, 128>}, {pipeline_mode = #tpu.pipeline_mode<synchronous>, transform_indices = @transform_1, window_bounds = array<i64: 1, 128>}, {pipeline_mode = #tpu.pipeline_mode<synchronous>, transform_indices = @transform_2, window_bounds = array<i64: 1, 128>}, {transform_indices = @transform_3, window_bounds = array<i64: 128, 384>}, {transform_indices = @transform_4, window_bounds = array<i64: 1, 384>}, {transform_indices = @transform_5, window_bounds = array<i64: 32, 384>}]} {
    %c0 = arith.constant 0 : index
    %c0_0 = arith.constant 0 : index
    %0 = vector.load %arg2[%c0, %c0_0] : memref<32x128xbf16, #tpu.memory_space<vmem>>, vector<32x128xbf16>
    %1 = arith.extf %0 : vector<32x128xbf16> to vector<32x128xf32>
    %cst = arith.constant dense<0.000000e+00> : vector<32xf32>
    %2 = vector.multi_reduction <add>, %1, %cst [1] : vector<32x128xf32> to vector<32xf32>
    %3 = vector.shape_cast %2 : vector<32xf32> to vector<32x1xf32>
    %cst_1 = arith.constant 1.280000e+02 : f32
    %4 = vector.broadcast %cst_1 : f32 to vector<32x1xf32>
    %5 = arith.divf %3, %4 : vector<32x1xf32>
    %6 = vector.broadcast %5 : vector<32x1xf32> to vector<32x128xf32>
    %7 = arith.subf %1, %6 : vector<32x128xf32>
    %8 = vector.broadcast %5 : vector<32x1xf32> to vector<32x128xf32>
    %9 = arith.subf %1, %8 : vector<32x128xf32>
    %10 = arith.mulf %7, %9 : vector<32x128xf32>
    %cst_2 = arith.constant dense<0.000000e+00> : vector<32xf32>
    %11 = vector.multi_reduction <add>, %10, %cst_2 [1] : vector<32x128xf32> to vector<32xf32>
    %12 = vector.shape_cast %11 : vector<32xf32> to vector<32x1xf32>
    %cst_3 = arith.constant 1.280000e+02 : f32
    %13 = vector.broadcast %cst_3 : f32 to vector<32x1xf32>
    %14 = arith.divf %12, %13 : vector<32x1xf32>
    %15 = vector.broadcast %5 : vector<32x1xf32> to vector<32x128xf32>
    %16 = arith.subf %1, %15 : vector<32x128xf32>
    %cst_4 = arith.constant 9.99999974E-6 : f32
    %17 = vector.broadcast %cst_4 : f32 to vector<32x1xf32>
    %18 = arith.addf %14, %17 : vector<32x1xf32>
    %19 = math.rsqrt %18 : vector<32x1xf32>
    %20 = vector.broadcast %19 : vector<32x1xf32> to vector<32x128xf32>
    %21 = arith.mulf %16, %20 : vector<32x128xf32>
    %c0_5 = arith.constant 0 : index
    %c0_6 = arith.constant 0 : index
    %22 = vector.load %arg3[%c0_5, %c0_6] : memref<1x128xbf16, #tpu.memory_space<vmem>>, vector<1x128xbf16>
    %23 = arith.extf %22 : vector<1x128xbf16> to vector<1x128xf32>
    %24 = vector.broadcast %23 : vector<1x128xf32> to vector<32x128xf32>
    %25 = arith.mulf %21, %24 : vector<32x128xf32>
    %c0_7 = arith.constant 0 : index
    %c0_8 = arith.constant 0 : index
    %26 = vector.load %arg4[%c0_7, %c0_8] : memref<1x128xbf16, #tpu.memory_space<vmem>>, vector<1x128xbf16>
    %27 = arith.extf %26 : vector<1x128xbf16> to vector<1x128xf32>
    %28 = vector.broadcast %27 : vector<1x128xf32> to vector<32x128xf32>
    %29 = arith.addf %25, %28 : vector<32x128xf32>
    %30 = arith.truncf %29 : vector<32x128xf32> to vector<32x128xbf16>
    %c0_9 = arith.constant 0 : index
    %c0_10 = arith.constant 0 : index
    %31 = vector.load %arg5[%c0_9, %c0_10] : memref<128x384xbf16, #tpu.memory_space<vmem>>, vector<128x384xbf16>
    %cst_11 = arith.constant dense<0.000000e+00> : vector<32x384xf32>
    %32 = tpu.matmul %30, %31, %cst_11 {dimension_numbers = #tpu.dot_dimension_numbers<[1], [0], [0], [1], [0, 0, 1, 1], [], []>} : vector<32x128xbf16>, vector<128x384xbf16>, vector<32x384xf32> -> vector<32x384xf32>
    %c0_12 = arith.constant 0 : index
    %c0_13 = arith.constant 0 : index
    %33 = vector.load %arg6[%c0_12, %c0_13] : memref<1x384xbf16, #tpu.memory_space<vmem>>, vector<1x384xbf16>
    %34 = arith.extf %33 : vector<1x384xbf16> to vector<1x384xf32>
    %35 = vector.broadcast %34 : vector<1x384xf32> to vector<32x384xf32>
    %36 = arith.addf %32, %35 : vector<32x384xf32>
    %37 = arith.truncf %36 : vector<32x384xf32> to vector<32x384xbf16>
    %c0_14 = arith.constant 0 : index
    %c0_15 = arith.constant 0 : index
    %38 = vector.load %arg7[%c0_14, %c0_15] : memref<32x384xbf16, #tpu.memory_space<vmem>>, vector<32x384xbf16>
    tpu.vector_store %arg7[%c0_14, %c0_15], %37 {strides = array<i32>} : memref<32x384xbf16, #tpu.memory_space<vmem>>, vector<32x384xbf16>,
    return
  }
  func.func @transform_0(%arg0: i32, %arg1: i32) -> (i32, i32) {
    %c0_i32 = arith.constant 0 : i32
    %c0_i32_0 = arith.constant 0 : i32
    return %arg0, %c0_i32 : i32, i32
  }
  func.func @transform_1(%arg0: i32, %arg1: i32) -> (i32, i32) {
    %c0_i32 = arith.constant 0 : i32
    %c0_i32_0 = arith.constant 0 : i32
    %c0_i32_1 = arith.constant 0 : i32
    return %c0_i32, %c0_i32_0 : i32, i32
  }
  func.func @transform_2(%arg0: i32, %arg1: i32) -> (i32, i32) {
    %c0_i32 = arith.constant 0 : i32
    %c0_i32_0 = arith.constant 0 : i32
    %c0_i32_1 = arith.constant 0 : i32
    return %c0_i32, %c0_i32_0 : i32, i32
  }
  func.func @transform_3(%arg0: i32, %arg1: i32) -> (i32, i32) {
    %c0_i32 = arith.constant 0 : i32
    %c0_i32_0 = arith.constant 0 : i32
    return %c0_i32, %arg1 : i32, i32
  }
  func.func @transform_4(%arg0: i32, %arg1: i32) -> (i32, i32) {
    %c0_i32 = arith.constant 0 : i32
    %c0_i32_0 = arith.constant 0 : i32
    return %c0_i32, %arg1 : i32, i32
  }
  func.func @transform_5(%arg0: i32, %arg1: i32) -> (i32, i32) {
    %c0_i32 = arith.constant 0 : i32
    return %arg0, %arg1 : i32, i32
  }
}

module attributes {stable_mosaic.version = 11 : i64} {
  func.func @_dense_kernel(%arg0: i32, %arg1: i32, %arg2: memref<32x128xbf16, #tpu.memory_space<vmem>>, %arg3: memref<128x128xbf16, #tpu.memory_space<vmem>>, %arg4: memref<1x128xbf16, #tpu.memory_space<vmem>>, %arg5: memref<32x128xbf16, #tpu.memory_space<vmem>>, %arg6: memref<32x128xbf16, #tpu.memory_space<vmem>>) attributes {dimension_semantics = [#tpu.dimension_semantics<parallel>, #tpu.dimension_semantics<parallel>], iteration_bounds = array<i64: 1, 1>, scalar_prefetch = 0 : i64, scratch_operands = 0 : i64, tpu.core_type = #tpu.core_type<tc>, window_params = [{transform_indices = @transform_0, window_bounds = array<i64: 32, 128>}, {transform_indices = @transform_1, window_bounds = array<i64: 128, 128>}, {transform_indices = @transform_2, window_bounds = array<i64: 1, 128>}, {transform_indices = @transform_3, window_bounds = array<i64: 32, 128>}, {transform_indices = @transform_4, window_bounds = array<i64: 32, 128>}]} {
    %c0 = arith.constant 0 : index
    %c0_0 = arith.constant 0 : index
    %0 = vector.load %arg2[%c0, %c0_0] : memref<32x128xbf16, #tpu.memory_space<vmem>>, vector<32x128xbf16>
    %c0_1 = arith.constant 0 : index
    %c0_2 = arith.constant 0 : index
    %1 = vector.load %arg3[%c0_1, %c0_2] : memref<128x128xbf16, #tpu.memory_space<vmem>>, vector<128x128xbf16>
    %cst = arith.constant dense<0.000000e+00> : vector<32x128xf32>
    %2 = tpu.matmul %0, %1, %cst {dimension_numbers = #tpu.dot_dimension_numbers<[1], [0], [0], [1], [0, 0, 1, 1], [], []>} : vector<32x128xbf16>, vector<128x128xbf16>, vector<32x128xf32> -> vector<32x128xf32>
    %c0_3 = arith.constant 0 : index
    %c0_4 = arith.constant 0 : index
    %3 = vector.load %arg4[%c0_3, %c0_4] : memref<1x128xbf16, #tpu.memory_space<vmem>>, vector<1x128xbf16>
    %4 = arith.extf %3 : vector<1x128xbf16> to vector<1x128xf32>
    %5 = vector.broadcast %4 : vector<1x128xf32> to vector<32x128xf32>
    %6 = arith.addf %2, %5 : vector<32x128xf32>
    %c0_5 = arith.constant 0 : index
    %c0_6 = arith.constant 0 : index
    %7 = vector.load %arg5[%c0_5, %c0_6] : memref<32x128xbf16, #tpu.memory_space<vmem>>, vector<32x128xbf16>
    %8 = arith.extf %7 : vector<32x128xbf16> to vector<32x128xf32>
    %9 = arith.addf %6, %8 : vector<32x128xf32>
    %10 = arith.truncf %9 : vector<32x128xf32> to vector<32x128xbf16>
    %c0_7 = arith.constant 0 : index
    %c0_8 = arith.constant 0 : index
    %11 = vector.load %arg6[%c0_7, %c0_8] : memref<32x128xbf16, #tpu.memory_space<vmem>>, vector<32x128xbf16>
    tpu.vector_store %arg6[%c0_7, %c0_8], %10 {strides = array<i32>} : memref<32x128xbf16, #tpu.memory_space<vmem>>, vector<32x128xbf16>,
    return
  }
  func.func @transform_0(%arg0: i32, %arg1: i32) -> (i32, i32) {
    %c0_i32 = arith.constant 0 : i32
    %c0_i32_0 = arith.constant 0 : i32
    return %arg0, %c0_i32 : i32, i32
  }
  func.func @transform_1(%arg0: i32, %arg1: i32) -> (i32, i32) {
    %c0_i32 = arith.constant 0 : i32
    %c0_i32_0 = arith.constant 0 : i32
    return %c0_i32, %arg1 : i32, i32
  }
  func.func @transform_2(%arg0: i32, %arg1: i32) -> (i32, i32) {
    %c0_i32 = arith.constant 0 : i32
    %c0_i32_0 = arith.constant 0 : i32
    return %c0_i32, %arg1 : i32, i32
  }
  func.func @transform_3(%arg0: i32, %arg1: i32) -> (i32, i32) {
    %c0_i32 = arith.constant 0 : i32
    return %arg0, %arg1 : i32, i32
  }
  func.func @transform_4(%arg0: i32, %arg1: i32) -> (i32, i32) {
    %c0_i32 = arith.constant 0 : i32
    return %arg0, %arg1 : i32, i32
  }
}

module attributes {stable_mosaic.version = 11 : i64} {
  func.func @_dense_kernel(%arg0: i32, %arg1: i32, %arg2: memref<32x128xbf16, #tpu.memory_space<vmem>>, %arg3: memref<1x128xbf16, #tpu.memory_space<vmem>>, %arg4: memref<1x128xbf16, #tpu.memory_space<vmem>>, %arg5: memref<128x512xbf16, #tpu.memory_space<vmem>>, %arg6: memref<1x512xbf16, #tpu.memory_space<vmem>>, %arg7: memref<32x512xbf16, #tpu.memory_space<vmem>>) attributes {dimension_semantics = [#tpu.dimension_semantics<parallel>, #tpu.dimension_semantics<parallel>], iteration_bounds = array<i64: 1, 1>, scalar_prefetch = 0 : i64, scratch_operands = 0 : i64, tpu.core_type = #tpu.core_type<tc>, window_params = [{transform_indices = @transform_0, window_bounds = array<i64: 32, 128>}, {pipeline_mode = #tpu.pipeline_mode<synchronous>, transform_indices = @transform_1, window_bounds = array<i64: 1, 128>}, {pipeline_mode = #tpu.pipeline_mode<synchronous>, transform_indices = @transform_2, window_bounds = array<i64: 1, 128>}, {transform_indices = @transform_3, window_bounds = array<i64: 128, 512>}, {transform_indices = @transform_4, window_bounds = array<i64: 1, 512>}, {transform_indices = @transform_5, window_bounds = array<i64: 32, 512>}]} {
    %c0 = arith.constant 0 : index
    %c0_0 = arith.constant 0 : index
    %0 = vector.load %arg2[%c0, %c0_0] : memref<32x128xbf16, #tpu.memory_space<vmem>>, vector<32x128xbf16>
    %1 = arith.extf %0 : vector<32x128xbf16> to vector<32x128xf32>
    %cst = arith.constant dense<0.000000e+00> : vector<32xf32>
    %2 = vector.multi_reduction <add>, %1, %cst [1] : vector<32x128xf32> to vector<32xf32>
    %3 = vector.shape_cast %2 : vector<32xf32> to vector<32x1xf32>
    %cst_1 = arith.constant 1.280000e+02 : f32
    %4 = vector.broadcast %cst_1 : f32 to vector<32x1xf32>
    %5 = arith.divf %3, %4 : vector<32x1xf32>
    %6 = vector.broadcast %5 : vector<32x1xf32> to vector<32x128xf32>
    %7 = arith.subf %1, %6 : vector<32x128xf32>
    %8 = vector.broadcast %5 : vector<32x1xf32> to vector<32x128xf32>
    %9 = arith.subf %1, %8 : vector<32x128xf32>
    %10 = arith.mulf %7, %9 : vector<32x128xf32>
    %cst_2 = arith.constant dense<0.000000e+00> : vector<32xf32>
    %11 = vector.multi_reduction <add>, %10, %cst_2 [1] : vector<32x128xf32> to vector<32xf32>
    %12 = vector.shape_cast %11 : vector<32xf32> to vector<32x1xf32>
    %cst_3 = arith.constant 1.280000e+02 : f32
    %13 = vector.broadcast %cst_3 : f32 to vector<32x1xf32>
    %14 = arith.divf %12, %13 : vector<32x1xf32>
    %15 = vector.broadcast %5 : vector<32x1xf32> to vector<32x128xf32>
    %16 = arith.subf %1, %15 : vector<32x128xf32>
    %cst_4 = arith.constant 9.99999974E-6 : f32
    %17 = vector.broadcast %cst_4 : f32 to vector<32x1xf32>
    %18 = arith.addf %14, %17 : vector<32x1xf32>
    %19 = math.rsqrt %18 : vector<32x1xf32>
    %20 = vector.broadcast %19 : vector<32x1xf32> to vector<32x128xf32>
    %21 = arith.mulf %16, %20 : vector<32x128xf32>
    %c0_5 = arith.constant 0 : index
    %c0_6 = arith.constant 0 : index
    %22 = vector.load %arg3[%c0_5, %c0_6] : memref<1x128xbf16, #tpu.memory_space<vmem>>, vector<1x128xbf16>
    %23 = arith.extf %22 : vector<1x128xbf16> to vector<1x128xf32>
    %24 = vector.broadcast %23 : vector<1x128xf32> to vector<32x128xf32>
    %25 = arith.mulf %21, %24 : vector<32x128xf32>
    %c0_7 = arith.constant 0 : index
    %c0_8 = arith.constant 0 : index
    %26 = vector.load %arg4[%c0_7, %c0_8] : memref<1x128xbf16, #tpu.memory_space<vmem>>, vector<1x128xbf16>
    %27 = arith.extf %26 : vector<1x128xbf16> to vector<1x128xf32>
    %28 = vector.broadcast %27 : vector<1x128xf32> to vector<32x128xf32>
    %29 = arith.addf %25, %28 : vector<32x128xf32>
    %30 = arith.truncf %29 : vector<32x128xf32> to vector<32x128xbf16>
    %c0_9 = arith.constant 0 : index
    %c0_10 = arith.constant 0 : index
    %31 = vector.load %arg5[%c0_9, %c0_10] : memref<128x512xbf16, #tpu.memory_space<vmem>>, vector<128x512xbf16>
    %cst_11 = arith.constant dense<0.000000e+00> : vector<32x512xf32>
    %32 = tpu.matmul %30, %31, %cst_11 {dimension_numbers = #tpu.dot_dimension_numbers<[1], [0], [0], [1], [0, 0, 1, 1], [], []>} : vector<32x128xbf16>, vector<128x512xbf16>, vector<32x512xf32> -> vector<32x512xf32>
    %c0_12 = arith.constant 0 : index
    %c0_13 = arith.constant 0 : index
    %33 = vector.load %arg6[%c0_12, %c0_13] : memref<1x512xbf16, #tpu.memory_space<vmem>>, vector<1x512xbf16>
    %34 = arith.extf %33 : vector<1x512xbf16> to vector<1x512xf32>
    %35 = vector.broadcast %34 : vector<1x512xf32> to vector<32x512xf32>
    %36 = arith.addf %32, %35 : vector<32x512xf32>
    %cst_14 = arith.constant 5.000000e-01 : f32
    %37 = vector.broadcast %cst_14 : f32 to vector<32x512xf32>
    %38 = arith.mulf %37, %36 : vector<32x512xf32>
    %cst_15 = arith.constant 4.471500e-02 : f32
    %39 = vector.broadcast %cst_15 : f32 to vector<32x512xf32>
    %40 = arith.mulf %39, %36 : vector<32x512xf32>
    %41 = arith.mulf %40, %36 : vector<32x512xf32>
    %42 = arith.mulf %41, %36 : vector<32x512xf32>
    %43 = arith.addf %36, %42 : vector<32x512xf32>
    %cst_16 = arith.constant 0.797884583 : f32
    %44 = vector.broadcast %cst_16 : f32 to vector<32x512xf32>
    %45 = arith.mulf %44, %43 : vector<32x512xf32>
    %46 = math.tanh %45 : vector<32x512xf32>
    %cst_17 = arith.constant 1.000000e+00 : f32
    %47 = vector.broadcast %cst_17 : f32 to vector<32x512xf32>
    %48 = arith.addf %47, %46 : vector<32x512xf32>
    %49 = arith.mulf %38, %48 : vector<32x512xf32>
    %50 = arith.truncf %49 : vector<32x512xf32> to vector<32x512xbf16>
    %c0_18 = arith.constant 0 : index
    %c0_19 = arith.constant 0 : index
    %51 = vector.load %arg7[%c0_18, %c0_19] : memref<32x512xbf16, #tpu.memory_space<vmem>>, vector<32x512xbf16>
    tpu.vector_store %arg7[%c0_18, %c0_19], %50 {strides = array<i32>} : memref<32x512xbf16, #tpu.memory_space<vmem>>, vector<32x512xbf16>,
    return
  }
  func.func @transform_0(%arg0: i32, %arg1: i32) -> (i32, i32) {
    %c0_i32 = arith.constant 0 : i32
    %c0_i32_0 = arith.constant 0 : i32
    return %arg0, %c0_i32 : i32, i32
  }
  func.func @transform_1(%arg0: i32, %arg1: i32) -> (i32, i32) {
    %c0_i32 = arith.constant 0 : i32
    %c0_i32_0 = arith.constant 0 : i32
    %c0_i32_1 = arith.constant 0 : i32
    return %c0_i32, %c0_i32_0 : i32, i32
  }
  func.func @transform_2(%arg0: i32, %arg1: i32) -> (i32, i32) {
    %c0_i32 = arith.constant 0 : i32
    %c0_i32_0 = arith.constant 0 : i32
    %c0_i32_1 = arith.constant 0 : i32
    return %c0_i32, %c0_i32_0 : i32, i32
  }
  func.func @transform_3(%arg0: i32, %arg1: i32) -> (i32, i32) {
    %c0_i32 = arith.constant 0 : i32
    %c0_i32_0 = arith.constant 0 : i32
    return %c0_i32, %arg1 : i32, i32
  }
  func.func @transform_4(%arg0: i32, %arg1: i32) -> (i32, i32) {
    %c0_i32 = arith.constant 0 : i32
    %c0_i32_0 = arith.constant 0 : i32
    return %c0_i32, %arg1 : i32, i32
  }
  func.func @transform_5(%arg0: i32, %arg1: i32) -> (i32, i32) {
    %c0_i32 = arith.constant 0 : i32
    return %arg0, %arg1 : i32, i32
  }
}

module attributes {stable_mosaic.version = 11 : i64} {
  func.func @_dense_kernel(%arg0: i32, %arg1: i32, %arg2: memref<32x512xbf16, #tpu.memory_space<vmem>>, %arg3: memref<512x128xbf16, #tpu.memory_space<vmem>>, %arg4: memref<1x128xbf16, #tpu.memory_space<vmem>>, %arg5: memref<32x128xbf16, #tpu.memory_space<vmem>>, %arg6: memref<32x128xbf16, #tpu.memory_space<vmem>>) attributes {dimension_semantics = [#tpu.dimension_semantics<parallel>, #tpu.dimension_semantics<parallel>], iteration_bounds = array<i64: 1, 1>, scalar_prefetch = 0 : i64, scratch_operands = 0 : i64, tpu.core_type = #tpu.core_type<tc>, window_params = [{transform_indices = @transform_0, window_bounds = array<i64: 32, 512>}, {transform_indices = @transform_1, window_bounds = array<i64: 512, 128>}, {transform_indices = @transform_2, window_bounds = array<i64: 1, 128>}, {transform_indices = @transform_3, window_bounds = array<i64: 32, 128>}, {transform_indices = @transform_4, window_bounds = array<i64: 32, 128>}]} {
    %c0 = arith.constant 0 : index
    %c0_0 = arith.constant 0 : index
    %0 = vector.load %arg2[%c0, %c0_0] : memref<32x512xbf16, #tpu.memory_space<vmem>>, vector<32x512xbf16>
    %c0_1 = arith.constant 0 : index
    %c0_2 = arith.constant 0 : index
    %1 = vector.load %arg3[%c0_1, %c0_2] : memref<512x128xbf16, #tpu.memory_space<vmem>>, vector<512x128xbf16>
    %cst = arith.constant dense<0.000000e+00> : vector<32x128xf32>
    %2 = tpu.matmul %0, %1, %cst {dimension_numbers = #tpu.dot_dimension_numbers<[1], [0], [0], [1], [0, 0, 1, 1], [], []>} : vector<32x512xbf16>, vector<512x128xbf16>, vector<32x128xf32> -> vector<32x128xf32>
    %c0_3 = arith.constant 0 : index
    %c0_4 = arith.constant 0 : index
    %3 = vector.load %arg4[%c0_3, %c0_4] : memref<1x128xbf16, #tpu.memory_space<vmem>>, vector<1x128xbf16>
    %4 = arith.extf %3 : vector<1x128xbf16> to vector<1x128xf32>
    %5 = vector.broadcast %4 : vector<1x128xf32> to vector<32x128xf32>
    %6 = arith.addf %2, %5 : vector<32x128xf32>
    %c0_5 = arith.constant 0 : index
    %c0_6 = arith.constant 0 : index
    %7 = vector.load %arg5[%c0_5, %c0_6] : memref<32x128xbf16, #tpu.memory_space<vmem>>, vector<32x128xbf16>
    %8 = arith.extf %7 : vector<32x128xbf16> to vector<32x128xf32>
    %9 = arith.addf %6, %8 : vector<32x128xf32>
    %10 = arith.truncf %9 : vector<32x128xf32> to vector<32x128xbf16>
    %c0_7 = arith.constant 0 : index
    %c0_8 = arith.constant 0 : index
    %11 = vector.load %arg6[%c0_7, %c0_8] : memref<32x128xbf16, #tpu.memory_space<vmem>>, vector<32x128xbf16>
    tpu.vector_store %arg6[%c0_7, %c0_8], %10 {strides = array<i32>} : memref<32x128xbf16, #tpu.memory_space<vmem>>, vector<32x128xbf16>,
    return
  }
  func.func @transform_0(%arg0: i32, %arg1: i32) -> (i32, i32) {
    %c0_i32 = arith.constant 0 : i32
    %c0_i32_0 = arith.constant 0 : i32
    return %arg0, %c0_i32 : i32, i32
  }
  func.func @transform_1(%arg0: i32, %arg1: i32) -> (i32, i32) {
    %c0_i32 = arith.constant 0 : i32
    %c0_i32_0 = arith.constant 0 : i32
    return %c0_i32, %arg1 : i32, i32
  }
  func.func @transform_2(%arg0: i32, %arg1: i32) -> (i32, i32) {
    %c0_i32 = arith.constant 0 : i32
    %c0_i32_0 = arith.constant 0 : i32
    return %c0_i32, %arg1 : i32, i32
  }
  func.func @transform_3(%arg0: i32, %arg1: i32) -> (i32, i32) {
    %c0_i32 = arith.constant 0 : i32
    return %arg0, %arg1 : i32, i32
  }
  func.func @transform_4(%arg0: i32, %arg1: i32) -> (i32, i32) {
    %c0_i32 = arith.constant 0 : i32
    return %arg0, %arg1 : i32, i32
  }
}

module attributes {stable_mosaic.version = 11 : i64} {
  func.func @_dense_kernel(%arg0: i32, %arg1: i32, %arg2: memref<32x128xbf16, #tpu.memory_space<vmem>>, %arg3: memref<1x128xbf16, #tpu.memory_space<vmem>>, %arg4: memref<1x128xbf16, #tpu.memory_space<vmem>>, %arg5: memref<128x512xbf16, #tpu.memory_space<vmem>>, %arg6: memref<1x512xbf16, #tpu.memory_space<vmem>>, %arg7: memref<32x512xbf16, #tpu.memory_space<vmem>>) attributes {dimension_semantics = [#tpu.dimension_semantics<parallel>, #tpu.dimension_semantics<parallel>], iteration_bounds = array<i64: 1, 1>, scalar_prefetch = 0 : i64, scratch_operands = 0 : i64, tpu.core_type = #tpu.core_type<tc>, window_params = [{transform_indices = @transform_0, window_bounds = array<i64: 32, 128>}, {pipeline_mode = #tpu.pipeline_mode<synchronous>, transform_indices = @transform_1, window_bounds = array<i64: 1, 128>}, {pipeline_mode = #tpu.pipeline_mode<synchronous>, transform_indices = @transform_2, window_bounds = array<i64: 1, 128>}, {transform_indices = @transform_3, window_bounds = array<i64: 128, 512>}, {transform_indices = @transform_4, window_bounds = array<i64: 1, 512>}, {transform_indices = @transform_5, window_bounds = array<i64: 32, 512>}]} {
    %c0 = arith.constant 0 : index
    %c0_0 = arith.constant 0 : index
    %0 = vector.load %arg2[%c0, %c0_0] : memref<32x128xbf16, #tpu.memory_space<vmem>>, vector<32x128xbf16>
    %1 = arith.extf %0 : vector<32x128xbf16> to vector<32x128xf32>
    %cst = arith.constant dense<0.000000e+00> : vector<32xf32>
    %2 = vector.multi_reduction <add>, %1, %cst [1] : vector<32x128xf32> to vector<32xf32>
    %3 = vector.shape_cast %2 : vector<32xf32> to vector<32x1xf32>
    %cst_1 = arith.constant 1.280000e+02 : f32
    %4 = vector.broadcast %cst_1 : f32 to vector<32x1xf32>
    %5 = arith.divf %3, %4 : vector<32x1xf32>
    %6 = vector.broadcast %5 : vector<32x1xf32> to vector<32x128xf32>
    %7 = arith.subf %1, %6 : vector<32x128xf32>
    %8 = vector.broadcast %5 : vector<32x1xf32> to vector<32x128xf32>
    %9 = arith.subf %1, %8 : vector<32x128xf32>
    %10 = arith.mulf %7, %9 : vector<32x128xf32>
    %cst_2 = arith.constant dense<0.000000e+00> : vector<32xf32>
    %11 = vector.multi_reduction <add>, %10, %cst_2 [1] : vector<32x128xf32> to vector<32xf32>
    %12 = vector.shape_cast %11 : vector<32xf32> to vector<32x1xf32>
    %cst_3 = arith.constant 1.280000e+02 : f32
    %13 = vector.broadcast %cst_3 : f32 to vector<32x1xf32>
    %14 = arith.divf %12, %13 : vector<32x1xf32>
    %15 = vector.broadcast %5 : vector<32x1xf32> to vector<32x128xf32>
    %16 = arith.subf %1, %15 : vector<32x128xf32>
    %cst_4 = arith.constant 9.99999974E-6 : f32
    %17 = vector.broadcast %cst_4 : f32 to vector<32x1xf32>
    %18 = arith.addf %14, %17 : vector<32x1xf32>
    %19 = math.rsqrt %18 : vector<32x1xf32>
    %20 = vector.broadcast %19 : vector<32x1xf32> to vector<32x128xf32>
    %21 = arith.mulf %16, %20 : vector<32x128xf32>
    %c0_5 = arith.constant 0 : index
    %c0_6 = arith.constant 0 : index
    %22 = vector.load %arg3[%c0_5, %c0_6] : memref<1x128xbf16, #tpu.memory_space<vmem>>, vector<1x128xbf16>
    %23 = arith.extf %22 : vector<1x128xbf16> to vector<1x128xf32>
    %24 = vector.broadcast %23 : vector<1x128xf32> to vector<32x128xf32>
    %25 = arith.mulf %21, %24 : vector<32x128xf32>
    %c0_7 = arith.constant 0 : index
    %c0_8 = arith.constant 0 : index
    %26 = vector.load %arg4[%c0_7, %c0_8] : memref<1x128xbf16, #tpu.memory_space<vmem>>, vector<1x128xbf16>
    %27 = arith.extf %26 : vector<1x128xbf16> to vector<1x128xf32>
    %28 = vector.broadcast %27 : vector<1x128xf32> to vector<32x128xf32>
    %29 = arith.addf %25, %28 : vector<32x128xf32>
    %30 = arith.truncf %29 : vector<32x128xf32> to vector<32x128xbf16>
    %c0_9 = arith.constant 0 : index
    %c0_10 = arith.constant 0 : index
    %31 = vector.load %arg5[%c0_9, %c0_10] : memref<128x512xbf16, #tpu.memory_space<vmem>>, vector<128x512xbf16>
    %cst_11 = arith.constant dense<0.000000e+00> : vector<32x512xf32>
    %32 = tpu.matmul %30, %31, %cst_11 {dimension_numbers = #tpu.dot_dimension_numbers<[1], [0], [0], [1], [0, 0, 1, 1], [], []>} : vector<32x128xbf16>, vector<128x512xbf16>, vector<32x512xf32> -> vector<32x512xf32>
    %c0_12 = arith.constant 0 : index
    %c0_13 = arith.constant 0 : index
    %33 = vector.load %arg6[%c0_12, %c0_13] : memref<1x512xbf16, #tpu.memory_space<vmem>>, vector<1x512xbf16>
    %34 = arith.extf %33 : vector<1x512xbf16> to vector<1x512xf32>
    %35 = vector.broadcast %34 : vector<1x512xf32> to vector<32x512xf32>
    %36 = arith.addf %32, %35 : vector<32x512xf32>
    %cst_14 = arith.constant 5.000000e-01 : f32
    %37 = vector.broadcast %cst_14 : f32 to vector<32x512xf32>
    %38 = arith.mulf %37, %36 : vector<32x512xf32>
    %cst_15 = arith.constant 4.471500e-02 : f32
    %39 = vector.broadcast %cst_15 : f32 to vector<32x512xf32>
    %40 = arith.mulf %39, %36 : vector<32x512xf32>
    %41 = arith.mulf %40, %36 : vector<32x512xf32>
    %42 = arith.mulf %41, %36 : vector<32x512xf32>
    %43 = arith.addf %36, %42 : vector<32x512xf32>
    %cst_16 = arith.constant 0.797884583 : f32
    %44 = vector.broadcast %cst_16 : f32 to vector<32x512xf32>
    %45 = arith.mulf %44, %43 : vector<32x512xf32>
    %46 = math.tanh %45 : vector<32x512xf32>
    %cst_17 = arith.constant 1.000000e+00 : f32
    %47 = vector.broadcast %cst_17 : f32 to vector<32x512xf32>
    %48 = arith.addf %47, %46 : vector<32x512xf32>
    %49 = arith.mulf %38, %48 : vector<32x512xf32>
    %50 = arith.truncf %49 : vector<32x512xf32> to vector<32x512xbf16>
    %c0_18 = arith.constant 0 : index
    %c0_19 = arith.constant 0 : index
    %51 = vector.load %arg7[%c0_18, %c0_19] : memref<32x512xbf16, #tpu.memory_space<vmem>>, vector<32x512xbf16>
    tpu.vector_store %arg7[%c0_18, %c0_19], %50 {strides = array<i32>} : memref<32x512xbf16, #tpu.memory_space<vmem>>, vector<32x512xbf16>,
    return
  }
  func.func @transform_0(%arg0: i32, %arg1: i32) -> (i32, i32) {
    %c0_i32 = arith.constant 0 : i32
    %c0_i32_0 = arith.constant 0 : i32
    return %arg0, %c0_i32 : i32, i32
  }
  func.func @transform_1(%arg0: i32, %arg1: i32) -> (i32, i32) {
    %c0_i32 = arith.constant 0 : i32
    %c0_i32_0 = arith.constant 0 : i32
    %c0_i32_1 = arith.constant 0 : i32
    return %c0_i32, %c0_i32_0 : i32, i32
  }
  func.func @transform_2(%arg0: i32, %arg1: i32) -> (i32, i32) {
    %c0_i32 = arith.constant 0 : i32
    %c0_i32_0 = arith.constant 0 : i32
    %c0_i32_1 = arith.constant 0 : i32
    return %c0_i32, %c0_i32_0 : i32, i32
  }
  func.func @transform_3(%arg0: i32, %arg1: i32) -> (i32, i32) {
    %c0_i32 = arith.constant 0 : i32
    %c0_i32_0 = arith.constant 0 : i32
    return %c0_i32, %arg1 : i32, i32
  }
  func.func @transform_4(%arg0: i32, %arg1: i32) -> (i32, i32) {
    %c0_i32 = arith.constant 0 : i32
    %c0_i32_0 = arith.constant 0 : i32
    return %c0_i32, %arg1 : i32, i32
  }
  func.func @transform_5(%arg0: i32, %arg1: i32) -> (i32, i32) {
    %c0_i32 = arith.constant 0 : i32
    return %arg0, %arg1 : i32, i32
  }
}

module attributes {stable_mosaic.version = 11 : i64} {
  func.func @_dense_kernel(%arg0: i32, %arg1: i32, %arg2: memref<32x512xbf16, #tpu.memory_space<vmem>>, %arg3: memref<512x128xbf16, #tpu.memory_space<vmem>>, %arg4: memref<1x128xbf16, #tpu.memory_space<vmem>>, %arg5: memref<32x128xbf16, #tpu.memory_space<vmem>>, %arg6: memref<32x128xbf16, #tpu.memory_space<vmem>>) attributes {dimension_semantics = [#tpu.dimension_semantics<parallel>, #tpu.dimension_semantics<parallel>], iteration_bounds = array<i64: 1, 1>, scalar_prefetch = 0 : i64, scratch_operands = 0 : i64, tpu.core_type = #tpu.core_type<tc>, window_params = [{transform_indices = @transform_0, window_bounds = array<i64: 32, 512>}, {transform_indices = @transform_1, window_bounds = array<i64: 512, 128>}, {transform_indices = @transform_2, window_bounds = array<i64: 1, 128>}, {transform_indices = @transform_3, window_bounds = array<i64: 32, 128>}, {transform_indices = @transform_4, window_bounds = array<i64: 32, 128>}]} {
    %c0 = arith.constant 0 : index
    %c0_0 = arith.constant 0 : index
    %0 = vector.load %arg2[%c0, %c0_0] : memref<32x512xbf16, #tpu.memory_space<vmem>>, vector<32x512xbf16>
    %c0_1 = arith.constant 0 : index
    %c0_2 = arith.constant 0 : index
    %1 = vector.load %arg3[%c0_1, %c0_2] : memref<512x128xbf16, #tpu.memory_space<vmem>>, vector<512x128xbf16>
    %cst = arith.constant dense<0.000000e+00> : vector<32x128xf32>
    %2 = tpu.matmul %0, %1, %cst {dimension_numbers = #tpu.dot_dimension_numbers<[1], [0], [0], [1], [0, 0, 1, 1], [], []>} : vector<32x512xbf16>, vector<512x128xbf16>, vector<32x128xf32> -> vector<32x128xf32>
    %c0_3 = arith.constant 0 : index
    %c0_4 = arith.constant 0 : index
    %3 = vector.load %arg4[%c0_3, %c0_4] : memref<1x128xbf16, #tpu.memory_space<vmem>>, vector<1x128xbf16>
    %4 = arith.extf %3 : vector<1x128xbf16> to vector<1x128xf32>
    %5 = vector.broadcast %4 : vector<1x128xf32> to vector<32x128xf32>
    %6 = arith.addf %2, %5 : vector<32x128xf32>
    %c0_5 = arith.constant 0 : index
    %c0_6 = arith.constant 0 : index
    %7 = vector.load %arg5[%c0_5, %c0_6] : memref<32x128xbf16, #tpu.memory_space<vmem>>, vector<32x128xbf16>
    %8 = arith.extf %7 : vector<32x128xbf16> to vector<32x128xf32>
    %9 = arith.addf %6, %8 : vector<32x128xf32>
    %10 = arith.truncf %9 : vector<32x128xf32> to vector<32x128xbf16>
    %c0_7 = arith.constant 0 : index
    %c0_8 = arith.constant 0 : index
    %11 = vector.load %arg6[%c0_7, %c0_8] : memref<32x128xbf16, #tpu.memory_space<vmem>>, vector<32x128xbf16>
    tpu.vector_store %arg6[%c0_7, %c0_8], %10 {strides = array<i32>} : memref<32x128xbf16, #tpu.memory_space<vmem>>, vector<32x128xbf16>,
    return
  }
  func.func @transform_0(%arg0: i32, %arg1: i32) -> (i32, i32) {
    %c0_i32 = arith.constant 0 : i32
    %c0_i32_0 = arith.constant 0 : i32
    return %arg0, %c0_i32 : i32, i32
  }
  func.func @transform_1(%arg0: i32, %arg1: i32) -> (i32, i32) {
    %c0_i32 = arith.constant 0 : i32
    %c0_i32_0 = arith.constant 0 : i32
    return %c0_i32, %arg1 : i32, i32
  }
  func.func @transform_2(%arg0: i32, %arg1: i32) -> (i32, i32) {
    %c0_i32 = arith.constant 0 : i32
    %c0_i32_0 = arith.constant 0 : i32
    return %c0_i32, %arg1 : i32, i32
  }
  func.func @transform_3(%arg0: i32, %arg1: i32) -> (i32, i32) {
    %c0_i32 = arith.constant 0 : i32
    return %arg0, %arg1 : i32, i32
  }
  func.func @transform_4(%arg0: i32, %arg1: i32) -> (i32, i32) {
    %c0_i32 = arith.constant 0 : i32
    return %arg0, %arg1 : i32, i32
  }
}

module attributes {stable_mosaic.version = 11 : i64} {
  func.func @_dense_kernel(%arg0: i32, %arg1: i32, %arg2: memref<32x128xbf16, #tpu.memory_space<vmem>>, %arg3: memref<1x128xbf16, #tpu.memory_space<vmem>>, %arg4: memref<1x128xbf16, #tpu.memory_space<vmem>>, %arg5: memref<128x256xbf16, #tpu.memory_space<vmem>>, %arg6: memref<32x256xf32, #tpu.memory_space<vmem>>) attributes {dimension_semantics = [#tpu.dimension_semantics<parallel>, #tpu.dimension_semantics<parallel>], iteration_bounds = array<i64: 1, 1>, scalar_prefetch = 0 : i64, scratch_operands = 0 : i64, tpu.core_type = #tpu.core_type<tc>, window_params = [{transform_indices = @transform_0, window_bounds = array<i64: 32, 128>}, {pipeline_mode = #tpu.pipeline_mode<synchronous>, transform_indices = @transform_1, window_bounds = array<i64: 1, 128>}, {pipeline_mode = #tpu.pipeline_mode<synchronous>, transform_indices = @transform_2, window_bounds = array<i64: 1, 128>}, {transform_indices = @transform_3, window_bounds = array<i64: 128, 256>}, {transform_indices = @transform_4, window_bounds = array<i64: 32, 256>}]} {
    %c0 = arith.constant 0 : index
    %c0_0 = arith.constant 0 : index
    %0 = vector.load %arg2[%c0, %c0_0] : memref<32x128xbf16, #tpu.memory_space<vmem>>, vector<32x128xbf16>
    %1 = arith.extf %0 : vector<32x128xbf16> to vector<32x128xf32>
    %cst = arith.constant dense<0.000000e+00> : vector<32xf32>
    %2 = vector.multi_reduction <add>, %1, %cst [1] : vector<32x128xf32> to vector<32xf32>
    %3 = vector.shape_cast %2 : vector<32xf32> to vector<32x1xf32>
    %cst_1 = arith.constant 1.280000e+02 : f32
    %4 = vector.broadcast %cst_1 : f32 to vector<32x1xf32>
    %5 = arith.divf %3, %4 : vector<32x1xf32>
    %6 = vector.broadcast %5 : vector<32x1xf32> to vector<32x128xf32>
    %7 = arith.subf %1, %6 : vector<32x128xf32>
    %8 = vector.broadcast %5 : vector<32x1xf32> to vector<32x128xf32>
    %9 = arith.subf %1, %8 : vector<32x128xf32>
    %10 = arith.mulf %7, %9 : vector<32x128xf32>
    %cst_2 = arith.constant dense<0.000000e+00> : vector<32xf32>
    %11 = vector.multi_reduction <add>, %10, %cst_2 [1] : vector<32x128xf32> to vector<32xf32>
    %12 = vector.shape_cast %11 : vector<32xf32> to vector<32x1xf32>
    %cst_3 = arith.constant 1.280000e+02 : f32
    %13 = vector.broadcast %cst_3 : f32 to vector<32x1xf32>
    %14 = arith.divf %12, %13 : vector<32x1xf32>
    %15 = vector.broadcast %5 : vector<32x1xf32> to vector<32x128xf32>
    %16 = arith.subf %1, %15 : vector<32x128xf32>
    %cst_4 = arith.constant 9.99999974E-6 : f32
    %17 = vector.broadcast %cst_4 : f32 to vector<32x1xf32>
    %18 = arith.addf %14, %17 : vector<32x1xf32>
    %19 = math.rsqrt %18 : vector<32x1xf32>
    %20 = vector.broadcast %19 : vector<32x1xf32> to vector<32x128xf32>
    %21 = arith.mulf %16, %20 : vector<32x128xf32>
    %c0_5 = arith.constant 0 : index
    %c0_6 = arith.constant 0 : index
    %22 = vector.load %arg3[%c0_5, %c0_6] : memref<1x128xbf16, #tpu.memory_space<vmem>>, vector<1x128xbf16>
    %23 = arith.extf %22 : vector<1x128xbf16> to vector<1x128xf32>
    %24 = vector.broadcast %23 : vector<1x128xf32> to vector<32x128xf32>
    %25 = arith.mulf %21, %24 : vector<32x128xf32>
    %c0_7 = arith.constant 0 : index
    %c0_8 = arith.constant 0 : index
    %26 = vector.load %arg4[%c0_7, %c0_8] : memref<1x128xbf16, #tpu.memory_space<vmem>>, vector<1x128xbf16>
    %27 = arith.extf %26 : vector<1x128xbf16> to vector<1x128xf32>
    %28 = vector.broadcast %27 : vector<1x128xf32> to vector<32x128xf32>
    %29 = arith.addf %25, %28 : vector<32x128xf32>
    %30 = arith.truncf %29 : vector<32x128xf32> to vector<32x128xbf16>
    %c0_9 = arith.constant 0 : index
    %c0_10 = arith.constant 0 : index
    %31 = vector.load %arg5[%c0_9, %c0_10] : memref<128x256xbf16, #tpu.memory_space<vmem>>, vector<128x256xbf16>
    %cst_11 = arith.constant dense<0.000000e+00> : vector<32x256xf32>
    %32 = tpu.matmul %30, %31, %cst_11 {dimension_numbers = #tpu.dot_dimension_numbers<[1], [0], [0], [1], [0, 0, 1, 1], [], []>} : vector<32x128xbf16>, vector<128x256xbf16>, vector<32x256xf32> -> vector<32x256xf32>
    %c0_12 = arith.constant 0 : index
    %c0_13 = arith.constant 0 : index
    %33 = vector.load %arg6[%c0_12, %c0_13] : memref<32x256xf32, #tpu.memory_space<vmem>>, vector<32x256xf32>
    tpu.vector_store %arg6[%c0_12, %c0_13], %32 {strides = array<i32>} : memref<32x256xf32, #tpu.memory_space<vmem>>, vector<32x256xf32>,
    return
  }
  func.func @transform_0(%arg0: i32, %arg1: i32) -> (i32, i32) {
    %c0_i32 = arith.constant 0 : i32
    %c0_i32_0 = arith.constant 0 : i32
    return %arg0, %c0_i32 : i32, i32
  }
  func.func @transform_1(%arg0: i32, %arg1: i32) -> (i32, i32) {
    %c0_i32 = arith.constant 0 : i32
    %c0_i32_0 = arith.constant 0 : i32
    %c0_i32_1 = arith.constant 0 : i32
    return %c0_i32, %c0_i32_0 : i32, i32
  }
  func.func @transform_2(%arg0: i32, %arg1: i32) -> (i32, i32) {
    %c0_i32 = arith.constant 0 : i32
    %c0_i32_0 = arith.constant 0 : i32
    %c0_i32_1 = arith.constant 0 : i32
    return %c0_i32, %c0_i32_0 : i32, i32
  }
  func.func @transform_3(%arg0: i32, %arg1: i32) -> (i32, i32) {
    %c0_i32 = arith.constant 0 : i32
    %c0_i32_0 = arith.constant 0 : i32
    return %c0_i32, %arg1 : i32, i32
  }
  func.func @transform_4(%arg0: i32, %arg1: i32) -> (i32, i32) {
    %c0_i32 = arith.constant 0 : i32
    return %arg0, %arg1 : i32, i32
  }
}

</mosaic_0001>

<llo_original>
// kernel: gpt2_lm_head_forward.13
$region0: #{gpt2_lm_head_forward.13}
  #allocation0 [shape = 'u32[]', space=smem, size = 0x4, offset = 0x4, fixed_abs, tag = 'smem constant byte address 0x4 - core index']
  #allocation1 [shape = 'u32[72,128]{1,0:T(1,128)}', space=vmem, size = 0x9000, scoped, tag = 'internal scratch']
  %s0 = inlined_call_operand.vmem [shape: bf16[32,128], index: 0, kind: input, shape index: {}]
  %s1 = inlined_call_operand.vmem [shape: bf16[128,128], index: 1, kind: input, shape index: {}]
  %s2 = inlined_call_operand.vmem [shape: bf16[1,128], index: 2, kind: input, shape index: {}]
  %s3 = inlined_call_operand.vmem [shape: bf16[32,128], index: 3, kind: input, shape index: {}]
  %s4 = inlined_call_operand.vmem [shape: bf16[32,128], index: 4, kind: output, shape index: {}]
  %s5 = sld [smem:[#allocation0]]
  $region26: #{gpt2_lm_head_forward.13} parent=0
    _
  %s7 = ssub.s32 1, %s5
  %s8 = scalar_select 0, %s7, %s5
  // Predicated region
  $region2: #{gpt2_lm_head_forward.13} parent=0 // pred_check
    _
  $region3: #{gpt2_lm_head_forward.13} parent=0 // pred_check_branch
    %10 = sbr.rel (0) target = $region5
  $region4: #{gpt2_lm_head_forward.13} parent=0 // pred_region
    _
  $region5: #{gpt2_lm_head_forward.13} parent=0 // pred_fallthru
    _
  // Predicated region
  $region6: #{gpt2_lm_head_forward.13} parent=0 // pred_check
    _
  $region7: #{gpt2_lm_head_forward.13} parent=0 // pred_check_branch
    %12 = sbr.rel (0) target = $region9
  $region8: #{gpt2_lm_head_forward.13} parent=0 // pred_region
    _
  $region9: #{gpt2_lm_head_forward.13} parent=0 // pred_fallthru
    _
  // Predicated region
  $region10: #{gpt2_lm_head_forward.13} parent=0 // pred_check
    _
  $region11: #{gpt2_lm_head_forward.13} parent=0 // pred_check_branch
    %14 = sbr.rel (0) target = $region13
  $region12: #{gpt2_lm_head_forward.13} parent=0 // pred_region
    _
  $region13: #{gpt2_lm_head_forward.13} parent=0 // pred_fallthru
    _
  // Predicated region
  $region14: #{gpt2_lm_head_forward.13} parent=0 // pred_check
    _
  $region15: #{gpt2_lm_head_forward.13} parent=0 // pred_check_branch
    %16 = sbr.rel (0) target = $region17
  $region16: #{gpt2_lm_head_forward.13} parent=0 // pred_region
    _
  $region17: #{gpt2_lm_head_forward.13} parent=0 // pred_fallthru
    _
  %v17 = vld [vmem:[%s0] sm:$0xf]
  %v18 = vld [vmem:[%s0 + $0x4] sm:$0xf]
  %v19 = vld [vmem:[%s0 + $0x8] sm:$0xf]
  %v20 = vld [vmem:[%s0 + $0xc] sm:$0xf]
  %v21 = vld [vmem:[%s1] sm:$0xf]
  %v22 = vld [vmem:[%s1 + $0x4] sm:$0xf]
  %v23 = vld [vmem:[%s1 + $0x8] sm:$0xf]
  %v24 = vld [vmem:[%s1 + $0xc] sm:$0xf]
  %v25 = vld [vmem:[%s1 + $0x10] sm:$0xf]
  %v26 = vld [vmem:[%s1 + $0x14] sm:$0xf]
  %v27 = vld [vmem:[%s1 + $0x18] sm:$0xf]
  %v28 = vld [vmem:[%s1 + $0x1c] sm:$0xf]
  %v29 = vld [vmem:[%s1 + $0x20] sm:$0xf]
  %v30 = vld [vmem:[%s1 + $0x24] sm:$0xf]
  %v31 = vld [vmem:[%s1 + $0x28] sm:$0xf]
  %v32 = vld [vmem:[%s1 + $0x2c] sm:$0xf]
  %v33 = vld [vmem:[%s1 + $0x30] sm:$0xf]
  %v34 = vld [vmem:[%s1 + $0x34] sm:$0xf]
  %v35 = vld [vmem:[%s1 + $0x38] sm:$0xf]
  %v36 = vld [vmem:[%s1 + $0x3c] sm:$0xf]
  %v37 = vld [vmem:[%s2] sm:$0x1]
  %v38 = vunpack.c.l.bf16 %v37
  %v39 = vperm.slane %v38, 0
  %v44 = vunpack.c.l.b16 %v17
  %v45 = vunpack.c.l.b16 %v18
  %v46 = vunpack.c.l.b16 %v19
  %v47 = vunpack.c.l.b16 %v20
  %v48 = vpack.c.b16 %v45, %v44
  %v49 = vpack.c.b16 %v47, %v46
  %v68 = vunpack.c.l.b16 %v21
  %v69 = vunpack.c.l.b16 %v22
  %v70 = vunpack.c.l.b16 %v23
  %v71 = vunpack.c.l.b16 %v24
  %v72 = vunpack.c.l.b16 %v25
  %v73 = vunpack.c.l.b16 %v26
  %v74 = vunpack.c.l.b16 %v27
  %v75 = vunpack.c.l.b16 %v28
  %v76 = vunpack.c.l.b16 %v29
  %v77 = vunpack.c.l.b16 %v30
  %v78 = vunpack.c.l.b16 %v31
  %v79 = vunpack.c.l.b16 %v32
  %v80 = vunpack.c.l.b16 %v33
  %v81 = vunpack.c.l.b16 %v34
  %v82 = vunpack.c.l.b16 %v35
  %v83 = vunpack.c.l.b16 %v36
  %v84 = vpack.c.b16 %v69, %v68
  %v85 = vpack.c.b16 %v71, %v70
  %v86 = vpack.c.b16 %v73, %v72
  %v87 = vpack.c.b16 %v75, %v74
  %v88 = vpack.c.b16 %v77, %v76
  %v89 = vpack.c.b16 %v79, %v78
  %v90 = vpack.c.b16 %v81, %v80
  %v91 = vpack.c.b16 %v83, %v82
  %100 = vmatpush.bf16.msra.mxu0 %v91
  %101 = vmatpush.bf16.msra.mxu0 %v90
  %102 = vmatpush.bf16.msra.mxu0 %v89
  %103 = vmatpush.bf16.msra.mxu0 %v88
  %104 = vmatpush.bf16.msra.mxu0 %v87
  %105 = vmatpush.bf16.msra.mxu0 %v86
  %106 = vmatpush.bf16.msra.mxu0 %v85
  %107 = vmatpush.bf16.msra.mxu0 %v84
  %108 = vmatmul.bf16.gmra.mxu0 %v48
  %v109 = vpop.f32.mrf.mxu0
  %v110 = vadd.f32 %v39, %v109
  %v111 = vpop.f32.mrf.mxu0
  %v112 = vadd.f32 %v39, %v111
  %113 = vmatmul.bf16.gmra.mxu0 %v49
  %v114 = vpop.f32.mrf.mxu0
  %v115 = vadd.f32 %v39, %v114
  %v116 = vpop.f32.mrf.mxu0
  %v117 = vadd.f32 %v39, %v116
  %118 = vdwg.mxu0
  %v119 = vld [vmem:[%s3] sm:$0xf]
  %v120 = vld [vmem:[%s3 + $0x4] sm:$0xf]
  %v121 = vld [vmem:[%s3 + $0x8] sm:$0xf]
  %v122 = vld [vmem:[%s3 + $0xc] sm:$0xf]
  %v123 = vunpack.c.l.bf16 %v119
  %v124 = vunpack.c.l.bf16 %v120
  %v125 = vunpack.c.l.bf16 %v121
  %v126 = vunpack.c.l.bf16 %v122
  %v127 = vadd.f32 %v110, %v123
  %v128 = vadd.f32 %v112, %v124
  %v129 = vadd.f32 %v115, %v125
  %v130 = vadd.f32 %v117, %v126
  %v131 = vpack.c.bf16 %v127, %v127
  %v132 = vpack.c.bf16 %v128, %v128
  %v133 = vpack.c.bf16 %v129, %v129
  %v134 = vpack.c.bf16 %v130, %v130
  %135 = vst [vmem:[%s4] sm:$0xf] %v131
  %136 = vst [vmem:[%s4 + $0x4] sm:$0xf] %v132
  %137 = vst [vmem:[%s4 + $0x8] sm:$0xf] %v133
  %138 = vst [vmem:[%s4 + $0xc] sm:$0xf] %v134
  // Predicated region
  $region18: #{gpt2_lm_head_forward.13} parent=0 // pred_check
    _
  $region19: #{gpt2_lm_head_forward.13} parent=0 // pred_check_branch
    %140 = sbr.rel (0) target = $region21
  $region20: #{gpt2_lm_head_forward.13} parent=0 // pred_region
    _
  $region21: #{gpt2_lm_head_forward.13} parent=0 // pred_fallthru
    _
  // Predicated region
  $region22: #{gpt2_lm_head_forward.13} parent=0 // pred_check
    _
  $region23: #{gpt2_lm_head_forward.13} parent=0 // pred_check_branch
    %142 = sbr.rel (0) target = $region25
  $region24: #{gpt2_lm_head_forward.13} parent=0 // pred_region
    _
  $region25: #{gpt2_lm_head_forward.13} parent=0 // pred_fallthru
    _

// kernel: gpt2_lm_head_forward.11
$region0: #{gpt2_lm_head_forward.11}
  #allocation0 [shape = 'u32[]', space=smem, size = 0x4, offset = 0x4, fixed_abs, tag = 'smem constant byte address 0x4 - core index']
  #allocation1 [shape = 'u32[72,128]{1,0:T(1,128)}', space=vmem, size = 0x9000, scoped, tag = 'internal scratch']
  %s0 = inlined_call_operand.vmem [shape: bf16[32,128], index: 0, kind: input, shape index: {}]
  %s1 = inlined_call_operand.vmem [shape: bf16[1,128], index: 1, kind: input, shape index: {}]
  %s2 = inlined_call_operand.vmem [shape: bf16[1,128], index: 2, kind: input, shape index: {}]
  %s3 = inlined_call_operand.hbm [shape: bf16[128,384], index: 3, kind: input, shape index: {}]
  %s4 = inlined_call_operand.vmem [shape: bf16[1,384], index: 4, kind: input, shape index: {}]
  %s5 = inlined_call_operand.vmem [shape: bf16[32,384], index: 5, kind: output, shape index: {}]
  %s6 = sld [smem:[#allocation0]]
  $region34: #{gpt2_lm_head_forward.11} parent=0
    _
  %s8 = ssub.s32 1, %s6
  %s9 = scalar_select 0, %s8, %s6
  $region1: #{gpt2_lm_head_forward.11} parent=0
    #allocation2 [shape = 'u8[98304]{0}', space=vmem, size = 0x18000, scoped, tag = 'input window, operand 3, single buffered']
    #allocation3 [shape = 's32[1]{0}', space=sflag, size = 0x4, scoped, tag = 'scoped memory for gpt2_lm_head_forward.11']
    %10 = vsyncpa [#allocation3], 0
    // Predicated region
    $region2: #{gpt2_lm_head_forward.11} parent=1 // pred_check
      _
    $region3: #{gpt2_lm_head_forward.11} parent=1 // pred_check_branch
      %12 = sbr.rel (0) target = $region5
    $region4: #{gpt2_lm_head_forward.11} parent=1 // pred_region
      _
    $region5: #{gpt2_lm_head_forward.11} parent=1 // pred_fallthru
      _
    // Predicated region
    $region6: #{gpt2_lm_head_forward.11} parent=1 // pred_check
      _
    $region7: #{gpt2_lm_head_forward.11} parent=1 // pred_check_branch
      %14 = sbr.rel (0) target = $region9
    $region8: #{gpt2_lm_head_forward.11} parent=1 // pred_region
      _
    $region9: #{gpt2_lm_head_forward.11} parent=1 // pred_fallthru
      _
    // Predicated region
    $region10: #{gpt2_lm_head_forward.11} parent=1 // pred_check
      _
    $region11: #{gpt2_lm_head_forward.11} parent=1 // pred_check_branch
      %16 = sbr.rel (0) target = $region13
    $region12: #{gpt2_lm_head_forward.11} parent=1 // pred_region
      _
    $region13: #{gpt2_lm_head_forward.11} parent=1 // pred_fallthru
      _
    // Predicated region
    $region14: #{gpt2_lm_head_forward.11} parent=1 // pred_check
      _
    $region15: #{gpt2_lm_head_forward.11} parent=1 // pred_check_branch
      %18 = sbr.rel (0) target = $region17
    $region16: #{gpt2_lm_head_forward.11} parent=1 // pred_region
      %20 = vsyncadd [#allocation3], 0
      %s21 = sshll.u32 %s3, 4
      %s22 = int_to_ptr.hbm [resolvable:$true] %s21
      %s23 = sshll.u32 [#allocation2], 4
      %s24 = int_to_ptr.vmem [resolvable:$true] %s23
      %29 = dma.hbm_to_vmem [thread:$0]  %s22, 3072, %s24, [#allocation3], 192, 192, 12
    $region17: #{gpt2_lm_head_forward.11} parent=1 // pred_fallthru
      _
    // Predicated region
    $region18: #{gpt2_lm_head_forward.11} parent=1 // pred_check
      _
    $region19: #{gpt2_lm_head_forward.11} parent=1 // pred_check_branch
      %31 = sbr.rel (0) target = $region21
    $region20: #{gpt2_lm_head_forward.11} parent=1 // pred_region
      _
    $region21: #{gpt2_lm_head_forward.11} parent=1 // pred_fallthru
      _
    // Predicated region
    $region22: #{gpt2_lm_head_forward.11} parent=1 // pred_check
      _
    $region23: #{gpt2_lm_head_forward.11} parent=1 // pred_check_branch
      %33 = sbr.rel (0) target = $region25
    $region24: #{gpt2_lm_head_forward.11} parent=1 // pred_region
      %35 = dma.done [#allocation3], 3072
    $region25: #{gpt2_lm_head_forward.11} parent=1 // pred_fallthru
      _
    %v36 = vld [vmem:[%s0] sm:$0xf]
    %v37 = vld [vmem:[%s0 + $0x4] sm:$0xf]
    %v38 = vld [vmem:[%s0 + $0x8] sm:$0xf]
    %v39 = vld [vmem:[%s0 + $0xc] sm:$0xf]
    %v40 = vunpack.c.l.bf16 %v36
    %v41 = vunpack.c.l.bf16 %v37
    %v42 = vunpack.c.l.bf16 %v38
    %v43 = vunpack.c.l.bf16 %v39
    %44 = vadd.xlane.f32.xlu0 %v40
    %v45 = vpop.xlane.xlu0 %44
    %46 = vadd.xlane.f32.xlu0 %v41
    %v47 = vpop.xlane.xlu0 %46
    %48 = vadd.xlane.f32.xlu0 %v42
    %v49 = vpop.xlane.xlu0 %48
    %50 = vadd.xlane.f32.xlu0 %v43
    %v51 = vpop.xlane.xlu0 %50
    %v52 = vrcp.pop 128.0
    %v53 = vmul.f32 128.0, %v52
    %v54 = vsub.f32 1.0, %v53
    %v55 = vmul.f32 %v52, %v54
    %v56 = vadd.f32 %v52, %v55
    %vm57 = vweird.f32 %v52
    %v58 = vsel %vm57, %v52, %v56
    %v59 = vmul.f32 %v45, %v58
    %v60 = vmul.f32 %v47, %v58
    %v61 = vmul.f32 %v49, %v58
    %v62 = vmul.f32 %v51, %v58
    %v63 = vsub.f32 %v40, %v59
    %v64 = vsub.f32 %v41, %v60
    %v65 = vsub.f32 %v42, %v61
    %v66 = vsub.f32 %v43, %v62
    %v67 = vmul.f32 %v63, %v63
    %v68 = vmul.f32 %v64, %v64
    %v69 = vmul.f32 %v65, %v65
    %v70 = vmul.f32 %v66, %v66
    %71 = vadd.xlane.f32.xlu0 %v67
    %v72 = vpop.xlane.xlu0 %71
    %73 = vadd.xlane.f32.xlu0 %v68
    %v74 = vpop.xlane.xlu0 %73
    %75 = vadd.xlane.f32.xlu0 %v69
    %v76 = vpop.xlane.xlu0 %75
    %77 = vadd.xlane.f32.xlu0 %v70
    %v78 = vpop.xlane.xlu0 %77
    %v79 = vmul.f32 %v72, %v58
    %v80 = vmul.f32 %v74, %v58
    %v81 = vmul.f32 %v76, %v58
    %v82 = vmul.f32 %v78, %v58
    %v83 = vadd.f32 %v79, 1e-05
    %v84 = vadd.f32 %v80, 1e-05
    %v85 = vadd.f32 %v81, 1e-05
    %v86 = vadd.f32 %v82, 1e-05
    %v87 = vrsqrt.pop %v83
    %v88 = vmul.f32 %v87, %v83
    %v89 = vmul.f32 %v88, %v87
    %v90 = vmul.f32 0.5, %v89
    %v91 = vsub.f32 1.5, %v90
    %v92 = vmul.f32 %v87, %v91
    %vm93 = vweird.f32 %v83
    %vm94 = vweird.f32 %v87
    %vm95 = vmor %vm93, %vm94
    %v96 = vsel %vm95, %v87, %v92
    %v97 = vrsqrt.pop %v84
    %v98 = vmul.f32 %v97, %v84
    %v99 = vmul.f32 %v98, %v97
    %v100 = vmul.f32 0.5, %v99
    %v101 = vsub.f32 1.5, %v100
    %v102 = vmul.f32 %v97, %v101
    %vm103 = vweird.f32 %v84
    %vm104 = vweird.f32 %v97
    %vm105 = vmor %vm103, %vm104
    %v106 = vsel %vm105, %v97, %v102
    %v107 = vrsqrt.pop %v85
    %v108 = vmul.f32 %v107, %v85
    %v109 = vmul.f32 %v108, %v107
    %v110 = vmul.f32 0.5, %v109
    %v111 = vsub.f32 1.5, %v110
    %v112 = vmul.f32 %v107, %v111
    %vm113 = vweird.f32 %v85
    %vm114 = vweird.f32 %v107
    %vm115 = vmor %vm113, %vm114
    %v116 = vsel %vm115, %v107, %v112
    %v117 = vrsqrt.pop %v86
    %v118 = vmul.f32 %v117, %v86
    %v119 = vmul.f32 %v118, %v117
    %v120 = vmul.f32 0.5, %v119
    %v121 = vsub.f32 1.5, %v120
    %v122 = vmul.f32 %v117, %v121
    %vm123 = vweird.f32 %v86
    %vm124 = vweird.f32 %v117
    %vm125 = vmor %vm123, %vm124
    %v126 = vsel %vm125, %v117, %v122
    %v127 = vmul.f32 %v63, %v96
    %v128 = vmul.f32 %v64, %v106
    %v129 = vmul.f32 %v65, %v116
    %v130 = vmul.f32 %v66, %v126
    %v131 = vld [vmem:[%s1] sm:$0x1]
    %v132 = vunpack.c.l.bf16 %v131
    %v133 = vperm.slane %v132, 0
    %v134 = vmul.f32 %v127, %v133
    %v135 = vmul.f32 %v128, %v133
    %v136 = vmul.f32 %v129, %v133
    %v137 = vmul.f32 %v130, %v133
    %v138 = vld [vmem:[%s2] sm:$0x1]
    %v139 = vunpack.c.l.bf16 %v138
    %v140 = vperm.slane %v139, 0
    %v141 = vadd.f32 %v134, %v140
    %v142 = vadd.f32 %v135, %v140
    %v143 = vadd.f32 %v136, %v140
    %v144 = vadd.f32 %v137, %v140
    %v145 = vpack.c.bf16 %v142, %v141
    %v146 = vpack.c.bf16 %v144, %v143
    %v147 = vld [vmem:[#allocation2] sm:$0xff]
    %v148 = vld [vmem:[#allocation2 + $0x8] sm:$0xf]
    %v149 = vld [vmem:[#allocation2 + $0xc] sm:$0xff]
    %v150 = vld [vmem:[#allocation2 + $0x14] sm:$0xf]
    %v151 = vld [vmem:[#allocation2 + $0x18] sm:$0xff]
    %v152 = vld [vmem:[#allocation2 + $0x20] sm:$0xf]
    %v153 = vld [vmem:[#allocation2 + $0x24] sm:$0xff]
    %v154 = vld [vmem:[#allocation2 + $0x2c] sm:$0xf]
    %v155 = vld [vmem:[#allocation2 + $0x30] sm:$0xff]
    %v156 = vld [vmem:[#allocation2 + $0x38] sm:$0xf]
    %v157 = vld [vmem:[#allocation2 + $0x3c] sm:$0xff]
    %v158 = vld [vmem:[#allocation2 + $0x44] sm:$0xf]
    %v159 = vld [vmem:[#allocation2 + $0x48] sm:$0xff]
    %v160 = vld [vmem:[#allocation2 + $0x50] sm:$0xf]
    %v161 = vld [vmem:[#allocation2 + $0x54] sm:$0xff]
    %v162 = vld [vmem:[#allocation2 + $0x5c] sm:$0xf]
    %v163 = vld [vmem:[#allocation2 + $0x60] sm:$0xff]
    %v164 = vld [vmem:[#allocation2 + $0x68] sm:$0xf]
    %v165 = vld [vmem:[#allocation2 + $0x6c] sm:$0xff]
    %v166 = vld [vmem:[#allocation2 + $0x74] sm:$0xf]
    %v167 = vld [vmem:[#allocation2 + $0x78] sm:$0xff]
    %v168 = vld [vmem:[#allocation2 + $0x80] sm:$0xf]
    %v169 = vld [vmem:[#allocation2 + $0x84] sm:$0xff]
    %v170 = vld [vmem:[#allocation2 + $0x8c] sm:$0xf]
    %v171 = vld [vmem:[#allocation2 + $0x90] sm:$0xff]
    %v172 = vld [vmem:[#allocation2 + $0x98] sm:$0xf]
    %v173 = vld [vmem:[#allocation2 + $0x9c] sm:$0xff]
    %v174 = vld [vmem:[#allocation2 + $0xa4] sm:$0xf]
    %v175 = vld [vmem:[#allocation2 + $0xa8] sm:$0xff]
    %v176 = vld [vmem:[#allocation2 + $0xb0] sm:$0xf]
    %v177 = vld [vmem:[#allocation2 + $0xb4] sm:$0xff]
    %v178 = vld [vmem:[#allocation2 + $0xbc] sm:$0xf]
    %v179 = vld [vmem:[%s4] sm:$0x7]
    %v180 = vunpack.c.l.bf16 %v179
    %v182 = vperm.slane %v180, 0
    %v183 = vperm.slane %v180, 2
    %v184 = vperm.slane %v180, 4
    %v188 = vperm.slane %v182, 0
    %v189 = vperm.slane %v183, 0
    %v190 = vperm.slane %v184, 0
    %v223 = vunpack.c.l.b16 %v147
    %v224 = vunpack.c.h.b16 %v147
    %v225 = vunpack.c.l.b16 %v148
    %v226 = vunpack.c.l.b16 %v149
    %v227 = vunpack.c.h.b16 %v149
    %v228 = vunpack.c.l.b16 %v150
    %v229 = vunpack.c.l.b16 %v151
    %v230 = vunpack.c.h.b16 %v151
    %v231 = vunpack.c.l.b16 %v152
    %v232 = vunpack.c.l.b16 %v153
    %v233 = vunpack.c.h.b16 %v153
    %v234 = vunpack.c.l.b16 %v154
    %v235 = vunpack.c.l.b16 %v155
    %v236 = vunpack.c.h.b16 %v155
    %v237 = vunpack.c.l.b16 %v156
    %v238 = vunpack.c.l.b16 %v157
    %v239 = vunpack.c.h.b16 %v157
    %v240 = vunpack.c.l.b16 %v158
    %v241 = vunpack.c.l.b16 %v159
    %v242 = vunpack.c.h.b16 %v159
    %v243 = vunpack.c.l.b16 %v160
    %v244 = vunpack.c.l.b16 %v161
    %v245 = vunpack.c.h.b16 %v161
    %v246 = vunpack.c.l.b16 %v162
    %v247 = vunpack.c.l.b16 %v163
    %v248 = vunpack.c.h.b16 %v163
    %v249 = vunpack.c.l.b16 %v164
    %v250 = vunpack.c.l.b16 %v165
    %v251 = vunpack.c.h.b16 %v165
    %v252 = vunpack.c.l.b16 %v166
    %v253 = vunpack.c.l.b16 %v167
    %v254 = vunpack.c.h.b16 %v167
    %v255 = vunpack.c.l.b16 %v168
    %v256 = vunpack.c.l.b16 %v169
    %v257 = vunpack.c.h.b16 %v169
    %v258 = vunpack.c.l.b16 %v170
    %v259 = vunpack.c.l.b16 %v171
    %v260 = vunpack.c.h.b16 %v171
    %v261 = vunpack.c.l.b16 %v172
    %v262 = vunpack.c.l.b16 %v173
    %v263 = vunpack.c.h.b16 %v173
    %v264 = vunpack.c.l.b16 %v174
    %v265 = vunpack.c.l.b16 %v175
    %v266 = vunpack.c.h.b16 %v175
    %v267 = vunpack.c.l.b16 %v176
    %v268 = vunpack.c.l.b16 %v177
    %v269 = vunpack.c.h.b16 %v177
    %v270 = vunpack.c.l.b16 %v178
    %v271 = vpack.c.b16 %v226, %v223
    %v272 = vpack.c.b16 %v227, %v224
    %v273 = vpack.c.b16 %v228, %v225
    %v274 = vpack.c.b16 %v232, %v229
    %v275 = vpack.c.b16 %v233, %v230
    %v276 = vpack.c.b16 %v234, %v231
    %v277 = vpack.c.b16 %v238, %v235
    %v278 = vpack.c.b16 %v239, %v236
    %v279 = vpack.c.b16 %v240, %v237
    %v280 = vpack.c.b16 %v244, %v241
    %v281 = vpack.c.b16 %v245, %v242
    %v282 = vpack.c.b16 %v246, %v243
    %v283 = vpack.c.b16 %v250, %v247
    %v284 = vpack.c.b16 %v251, %v248
    %v285 = vpack.c.b16 %v252, %v249
    %v286 = vpack.c.b16 %v256, %v253
    %v287 = vpack.c.b16 %v257, %v254
    %v288 = vpack.c.b16 %v258, %v255
    %v289 = vpack.c.b16 %v262, %v259
    %v290 = vpack.c.b16 %v263, %v260
    %v291 = vpack.c.b16 %v264, %v261
    %v292 = vpack.c.b16 %v268, %v265
    %v293 = vpack.c.b16 %v269, %v266
    %v294 = vpack.c.b16 %v270, %v267
    %319 = vmatpush.bf16.msra.mxu0 %v292
    %320 = vmatpush.bf16.msra.mxu0 %v289
    %321 = vmatpush.bf16.msra.mxu0 %v286
    %322 = vmatpush.bf16.msra.mxu0 %v283
    %323 = vmatpush.bf16.msra.mxu0 %v280
    %324 = vmatpush.bf16.msra.mxu0 %v277
    %325 = vmatpush.bf16.msra.mxu0 %v274
    %326 = vmatpush.bf16.msra.mxu0 %v271
    %327 = vmatmul.bf16.gmra.mxu0 %v145
    %v328 = vpop.f32.mrf.mxu0
    %v329 = vadd.f32 %v188, %v328
    %v330 = vpop.f32.mrf.mxu0
    %v331 = vadd.f32 %v188, %v330
    %332 = vmatmul.bf16.gmra.mxu0 %v146
    %v333 = vpop.f32.mrf.mxu0
    %v334 = vadd.f32 %v188, %v333
    %v335 = vpop.f32.mrf.mxu0
    %v336 = vadd.f32 %v188, %v335
    %337 = vdwg.mxu0
    %338 = vmatpush.bf16.msra.mxu0 %v293
    %339 = vmatpush.bf16.msra.mxu0 %v290
    %340 = vmatpush.bf16.msra.mxu0 %v287
    %341 = vmatpush.bf16.msra.mxu0 %v284
    %342 = vmatpush.bf16.msra.mxu0 %v281
    %343 = vmatpush.bf16.msra.mxu0 %v278
    %344 = vmatpush.bf16.msra.mxu0 %v275
    %345 = vmatpush.bf16.msra.mxu0 %v272
    %346 = vmatmul.bf16.gmra.mxu0 %v145
    %v347 = vpop.f32.mrf.mxu0
    %v348 = vadd.f32 %v189, %v347
    %v349 = vpop.f32.mrf.mxu0
    %v350 = vadd.f32 %v189, %v349
    %351 = vmatmul.bf16.gmra.mxu0 %v146
    %v352 = vpop.f32.mrf.mxu0
    %v353 = vadd.f32 %v189, %v352
    %v354 = vpop.f32.mrf.mxu0
    %v355 = vadd.f32 %v189, %v354
    %356 = vdwg.mxu0
    %357 = vmatpush.bf16.msra.mxu0 %v294
    %358 = vmatpush.bf16.msra.mxu0 %v291
    %359 = vmatpush.bf16.msra.mxu0 %v288
    %360 = vmatpush.bf16.msra.mxu0 %v285
    %361 = vmatpush.bf16.msra.mxu0 %v282
    %362 = vmatpush.bf16.msra.mxu0 %v279
    %363 = vmatpush.bf16.msra.mxu0 %v276
    %364 = vmatpush.bf16.msra.mxu0 %v273
    %365 = vmatmul.bf16.gmra.mxu0 %v145
    %v366 = vpop.f32.mrf.mxu0
    %v367 = vadd.f32 %v190, %v366
    %v368 = vpop.f32.mrf.mxu0
    %v369 = vadd.f32 %v190, %v368
    %370 = vmatmul.bf16.gmra.mxu0 %v146
    %v371 = vpop.f32.mrf.mxu0
    %v372 = vadd.f32 %v190, %v371
    %v373 = vpop.f32.mrf.mxu0
    %v374 = vadd.f32 %v190, %v373
    %375 = vdwg.mxu0
    %v376 = vpack.c.bf16 %v348, %v329
    %v377 = vpack.c.bf16 %v367, %v367
    %v378 = vpack.c.bf16 %v350, %v331
    %v379 = vpack.c.bf16 %v369, %v369
    %v380 = vpack.c.bf16 %v353, %v334
    %v381 = vpack.c.bf16 %v372, %v372
    %v382 = vpack.c.bf16 %v355, %v336
    %v383 = vpack.c.bf16 %v374, %v374
    %384 = vst [vmem:[%s5] sm:$0xff] %v376
    %385 = vst [vmem:[%s5 + $0x8] sm:$0xf] %v377
    %386 = vst [vmem:[%s5 + $0xc] sm:$0xff] %v378
    %387 = vst [vmem:[%s5 + $0x14] sm:$0xf] %v379
    %388 = vst [vmem:[%s5 + $0x18] sm:$0xff] %v380
    %389 = vst [vmem:[%s5 + $0x20] sm:$0xf] %v381
    %390 = vst [vmem:[%s5 + $0x24] sm:$0xff] %v382
    %391 = vst [vmem:[%s5 + $0x2c] sm:$0xf] %v383
    // Predicated region
    $region26: #{gpt2_lm_head_forward.11} parent=1 // pred_check
      _
    $region27: #{gpt2_lm_head_forward.11} parent=1 // pred_check_branch
      %393 = sbr.rel (0) target = $region29
    $region28: #{gpt2_lm_head_forward.11} parent=1 // pred_region
      _
    $region29: #{gpt2_lm_head_forward.11} parent=1 // pred_fallthru
      _
    // Predicated region
    $region30: #{gpt2_lm_head_forward.11} parent=1 // pred_check
      _
    $region31: #{gpt2_lm_head_forward.11} parent=1 // pred_check_branch
      %395 = sbr.rel (0) target = $region33
    $region32: #{gpt2_lm_head_forward.11} parent=1 // pred_region
      _
    $region33: #{gpt2_lm_head_forward.11} parent=1 // pred_fallthru
      _
    %396 = vsyncpa [#allocation3], 1

// kernel: gpt2_lm_head_forward.12
$region0: #{gpt2_lm_head_forward.12}
  #allocation0 [shape = 'u32[]', space=smem, size = 0x4, offset = 0x4, fixed_abs, tag = 'smem constant byte address 0x4 - core index']
  #allocation1 [shape = 'u32[72,128]{1,0:T(1,128)}', space=vmem, size = 0x9000, scoped, tag = 'internal scratch']
  #allocation2 [shape = 'f32[2,16,1]{2,1,0:T(8,128)}', space=vmem, size = 0x4000, scoped, tag = 'scratch operand']
  #allocation3 [shape = 'f32[2,16,1]{2,1,0:T(8,128)}', space=vmem, size = 0x4000, scoped, tag = 'scratch operand']
  #allocation4 [shape = 'f32[16,128]{1,0:T(8,128)}', space=vmem, size = 0x2000, scoped, tag = 'scratch operand']
  %s0 = inlined_call_operand.vmem [shape: f32[2,1,16], index: 0, kind: input, shape index: {}]
  %s1 = inlined_call_operand.vmem [shape: bf16[2,16,384], index: 1, kind: input, shape index: {}, may-alias: {1,2,3}]
  %s2 = inlined_call_operand.vmem [shape: bf16[2,16,384], index: 2, kind: input, shape index: {}, may-alias: {1,2,3}]
  %s3 = inlined_call_operand.vmem [shape: bf16[2,16,384], index: 3, kind: input, shape index: {}, may-alias: {1,2,3}]
  %s4 = inlined_call_operand.vmem [shape: bf16[2,16,128], index: 4, kind: output, shape index: {}]
  %s5 = sld [smem:[#allocation0]]
  $region184: #{gpt2_lm_head_forward.12} parent=0
    _
  %s7 = ssub.s32 1, %s5
  %s8 = scalar_select 0, %s7, %s5
  $region1: #{gpt2_lm_head_forward.12} parent=0
    #allocation5 [shape = 'u8[8192]{0}', space=vmem, size = 0x2000, scoped, tag = 'input window, operand 1']
    #allocation6 [shape = 'u8[8192]{0}', space=vmem, size = 0x2000, scoped, tag = 'input window, operand 2']
    #allocation7 [shape = 'u8[8192]{0}', space=vmem, size = 0x2000, scoped, tag = 'input window, operand 3']
    loop: start=0, step=1, limit=4
    $region2: #{gpt2_lm_head_forward.12} parent=1 // loop_pre_header
      _
    $region3: #{gpt2_lm_head_forward.12} parent=1 // loop_header
      %s10 = sphi 0, %s14
      %p11 = scmp.ge.s32.totalorder %s10, 4
      %s17 = sphi 0, %s36
      %s18 = sphi 0, %s32
      %s19 = sphi 0, %s28
      %s20 = sphi 0, %s17
      %s21 = sphi 0, %s18
      %s22 = sphi 0, %s19
      %s23 = sphi 0, %s20
      %s24 = sphi 0, %s21
      %s25 = sphi 0, %s22
      %s45 = sphi 0, %s47
      %s48 = sphi 0, %s45
      %s49 = sphi 0, %s48
      %s65 = sphi 0, %s49
      %s73 = sphi 0, %s75
      %s76 = sphi 0, %s73
      %s77 = sphi 0, %s76
      %s93 = sphi 0, %s77
      %s105 = sphi 0, %s107
      %s108 = sphi 0, %s105
      %s109 = sphi 0, %s108
      %s125 = sphi 0, %s109
      %s137 = sphi 0, %s139
      %s140 = sphi 0, %s137
      %s141 = sphi 0, %s140
      %s157 = sphi 0, %s141
      %s165 = sphi 0, %s167
      %s168 = sphi 0, %s165
      %s169 = sphi 0, %s168
      %s185 = sphi 0, %s169
    $region4: #{gpt2_lm_head_forward.12} parent=1 // loop_header_branch
      %13 = sbr.rel (%p11) target = $region8
    $region5: #{gpt2_lm_head_forward.12} parent=1 // loop_body
      %s15 = ssub.s32 %s10, 1
      %s16 = ssub.s32 %s10, 2
      %s26 = sadd.s32 1, %s19
      %p27 = scmp.ge.s32.totalorder %s26, 1
      %s28 = scalar_select %p27, 0, %s26
      %s29 = sadd.s32 1, %s18
      %s30 = scalar_select %p27, %s29, %s18
      %p31 = scmp.ge.s32.totalorder %s30, 1
      %s32 = scalar_select %p31, 0, %s30
      %s33 = sadd.s32 1, %s17
      %s34 = scalar_select %p31, %s33, %s17
      %p35 = scmp.ge.s32.totalorder %s34, 2
      %s36 = scalar_select %p35, 0, %s34
      %p37 = scmp.lt.s32.totalorder %s19, %s18
      %s38 = scalar_select %p37, %s19, %s18
      %p39 = scmp.lt.s32.totalorder %s28, %s32
      %s40 = scalar_select %p39, %s28, %s32
      %s41 = ssub.s32 %s17, %s36
      %s42 = ssub.s32 %s38, %s40
      %s43 = sor.u32 %s41, %s42
      %p44 = scmp.eq.s32.totalorder %s43, 0
      %s46 = sadd.s32 %s45, 1
      %s47 = scalar_select %p44, %s45, %s46
      %p50 = pneg %p44
      %p51 = scmp.eq.s32.totalorder %s10, 1
      %p52 = por %p50, %p51
      %p53 = scmp.ne.s32.totalorder %s45, %s48
      %p54 = scmp.eq.s32.totalorder %s10, 0
      %p55 = por %p53, %p54
      %p56 = scmp.ne.s32.totalorder %s45, %s48
      %p57 = scmp.eq.s32.totalorder %s15, 1
      %p58 = por %p56, %p57
      %p59 = scmp.ne.s32.totalorder %s48, %s49
      %p60 = scmp.eq.s32.totalorder %s15, 0
      %p61 = por %p59, %p60
      %p62 = scmp.ne.s32.totalorder %s48, %s49
      %p63 = scmp.eq.s32.totalorder %s16, 1
      %p64 = por %p62, %p63
      %p66 = scmp.ne.s32.totalorder %s49, %s65
      %p67 = scmp.eq.s32.totalorder %s16, 0
      %p68 = por %p66, %p67
      %s69 = ssub.s32 %s17, %s36
      %s70 = ssub.s32 %s18, %s32
      %s71 = sor.u32 %s69, %s70
      %p72 = scmp.eq.s32.totalorder %s71, 0
      %s74 = sadd.s32 %s73, 1
      %s75 = scalar_select %p72, %s73, %s74
      %p78 = pneg %p72
      %p79 = scmp.eq.s32.totalorder %s10, 1
      %p80 = por %p78, %p79
      %p81 = scmp.ne.s32.totalorder %s73, %s76
      %p82 = scmp.eq.s32.totalorder %s10, 0
      %p83 = por %p81, %p82
      %p84 = scmp.ne.s32.totalorder %s73, %s76
      %p85 = scmp.eq.s32.totalorder %s15, 1
      %p86 = por %p84, %p85
      %p87 = scmp.ne.s32.totalorder %s76, %s77
      %p88 = scmp.eq.s32.totalorder %s15, 0
      %p89 = por %p87, %p88
      %p90 = scmp.ne.s32.totalorder %s76, %s77
      %p91 = scmp.eq.s32.totalorder %s16, 1
      %p92 = por %p90, %p91
      %p94 = scmp.ne.s32.totalorder %s77, %s93
      %p95 = scmp.eq.s32.totalorder %s16, 0
      %p96 = por %p94, %p95
      %p97 = scmp.lt.s32.totalorder %s19, %s18
      %s98 = scalar_select %p97, %s19, %s18
      %p99 = scmp.lt.s32.totalorder %s28, %s32
      %s100 = scalar_select %p99, %s28, %s32
      %s101 = ssub.s32 %s17, %s36
      %s102 = ssub.s32 %s98, %s100
      %s103 = sor.u32 %s101, %s102
      %p104 = scmp.eq.s32.totalorder %s103, 0
      %s106 = sadd.s32 %s105, 1
      %s107 = scalar_select %p104, %s105, %s106
      %p110 = pneg %p104
      %p111 = scmp.eq.s32.totalorder %s10, 1
      %p112 = por %p110, %p111
      %p113 = scmp.ne.s32.totalorder %s105, %s108
      %p114 = scmp.eq.s32.totalorder %s10, 0
      %p115 = por %p113, %p114
      %p116 = scmp.ne.s32.totalorder %s105, %s108
      %p117 = scmp.eq.s32.totalorder %s15, 1
      %p118 = por %p116, %p117
      %p119 = scmp.ne.s32.totalorder %s108, %s109
      %p120 = scmp.eq.s32.totalorder %s15, 0
      %p121 = por %p119, %p120
      %p122 = scmp.ne.s32.totalorder %s108, %s109
      %p123 = scmp.eq.s32.totalorder %s16, 1
      %p124 = por %p122, %p123
      %p126 = scmp.ne.s32.totalorder %s109, %s125
      %p127 = scmp.eq.s32.totalorder %s16, 0
      %p128 = por %p126, %p127
      %p129 = scmp.lt.s32.totalorder %s19, %s18
      %s130 = scalar_select %p129, %s19, %s18
      %p131 = scmp.lt.s32.totalorder %s28, %s32
      %s132 = scalar_select %p131, %s28, %s32
      %s133 = ssub.s32 %s17, %s36
      %s134 = ssub.s32 %s130, %s132
      %s135 = sor.u32 %s133, %s134
      %p136 = scmp.eq.s32.totalorder %s135, 0
      %s138 = sadd.s32 %s137, 1
      %s139 = scalar_select %p136, %s137, %s138
      %p142 = pneg %p136
      %p143 = scmp.eq.s32.totalorder %s10, 1
      %p144 = por %p142, %p143
      %p145 = scmp.ne.s32.totalorder %s137, %s140
      %p146 = scmp.eq.s32.totalorder %s10, 0
      %p147 = por %p145, %p146
      %p148 = scmp.ne.s32.totalorder %s137, %s140
      %p149 = scmp.eq.s32.totalorder %s15, 1
      %p150 = por %p148, %p149
      %p151 = scmp.ne.s32.totalorder %s140, %s141
      %p152 = scmp.eq.s32.totalorder %s15, 0
      %p153 = por %p151, %p152
      %p154 = scmp.ne.s32.totalorder %s140, %s141
      %p155 = scmp.eq.s32.totalorder %s16, 1
      %p156 = por %p154, %p155
      %p158 = scmp.ne.s32.totalorder %s141, %s157
      %p159 = scmp.eq.s32.totalorder %s16, 0
      %p160 = por %p158, %p159
      %s161 = ssub.s32 %s17, %s36
      %s162 = ssub.s32 %s18, %s32
      %s163 = sor.u32 %s161, %s162
      %p164 = scmp.eq.s32.totalorder %s163, 0
      %s166 = sadd.s32 %s165, 1
      %s167 = scalar_select %p164, %s165, %s166
      %p170 = pneg %p164
      %p171 = scmp.eq.s32.totalorder %s10, 1
      %p172 = por %p170, %p171
      %p173 = scmp.ne.s32.totalorder %s165, %s168
      %p174 = scmp.eq.s32.totalorder %s10, 0
      %p175 = por %p173, %p174
      %p176 = scmp.ne.s32.totalorder %s165, %s168
      %p177 = scmp.eq.s32.totalorder %s15, 1
      %p178 = por %p176, %p177
      %p179 = scmp.ne.s32.totalorder %s168, %s169
      %p180 = scmp.eq.s32.totalorder %s15, 0
      %p181 = por %p179, %p180
      %p182 = scmp.ne.s32.totalorder %s168, %s169
      %p183 = scmp.eq.s32.totalorder %s16, 1
      %p184 = por %p182, %p183
      %p186 = scmp.ne.s32.totalorder %s169, %s185
      %p187 = scmp.eq.s32.totalorder %s16, 0
      %p188 = por %p186, %p187
      %p189 = scmp.le.s32.totalorder 1, %s10
      %p190 = scmp.lt.s32.totalorder %s10, 3
      %p191 = pnand %p189, %p190
      %p192 = pneg %p191
      // Predicated region
      $region9: #{gpt2_lm_head_forward.12} parent=5 // pred_check
        _
      $region10: #{gpt2_lm_head_forward.12} parent=5 // pred_check_branch
        %194 = sbr.rel (%p191) target = $region12
      $region11: #{gpt2_lm_head_forward.12} parent=5 // pred_region
        %s195 = ssub.s32 %s10, 1
      $region12: #{gpt2_lm_head_forward.12} parent=5 // pred_fallthru
        _
      %p196 = scmp.lt.s32.totalorder %s10, 2
      // Predicated region
      $region13: #{gpt2_lm_head_forward.12} parent=5 // pred_check
        %p197 = pneg %p196
      $region14: #{gpt2_lm_head_forward.12} parent=5 // pred_check_branch
        %199 = sbr.rel (%p197) target = $region16
      $region15: #{gpt2_lm_head_forward.12} parent=5 // pred_region
        // Predicated region
        $region17: #{gpt2_lm_head_forward.12} parent=15 // pred_check
          %p200 = pneg %p55
        $region18: #{gpt2_lm_head_forward.12} parent=15 // pred_check_branch
          %202 = sbr.rel (%p200) target = $region20
        $region19: #{gpt2_lm_head_forward.12} parent=15 // pred_region
          %p203 = scmp.lt.s32.totalorder %s19, %s18
          %s204 = scalar_select %p203, %s19, %s18
          %p205 = scmp.lt.s32.totalorder %s17, 1
          %s206 = scalar_select %p205, %s17, 1
          %p207 = scmp.lt.s32.totalorder %s204, 0
          %s208 = scalar_select %p207, %s204, 0
          %s209 = sadd.s32 %s208, %s206
          %s210 = scalar_lea.vmem %s0, %s209
          %p211 = scmp.lt.s32.totalorder %s19, %s18
          %s212 = scalar_select %p211, %s19, %s18
        $region20: #{gpt2_lm_head_forward.12} parent=15 // pred_fallthru
          _
        // Predicated region
        $region21: #{gpt2_lm_head_forward.12} parent=15 // pred_check
          %p213 = pneg %p83
        $region22: #{gpt2_lm_head_forward.12} parent=15 // pred_check_branch
          %215 = sbr.rel (%p213) target = $region24
        $region23: #{gpt2_lm_head_forward.12} parent=15 // pred_region
          %s216 = sand.u32 %s73, 1
          %s217 = sand.u32 %s73, 1
          %s218 = smul.addr %s217, 8
          %s219 = scalar_lea.vmem [#allocation5], %s218
          %s220 = smul.u32 2, %s18
          %s221 = smul.addr %s220, 3
          %s222 = smul.addr %s17, 6
          %s223 = sadd.s32 %s221, %s222
          %s224 = smul.addr %s223, 4
          %s225 = scalar_lea.vmem %s1, %s224
          // Predicated region
          $region25: #{gpt2_lm_head_forward.12} parent=23 // pred_check
            _
          $region26: #{gpt2_lm_head_forward.12} parent=23 // pred_check_branch
            %227 = sbr.rel (0) target = $region28
          $region27: #{gpt2_lm_head_forward.12} parent=23 // pred_region
            // Predicated region
            $region29: #{gpt2_lm_head_forward.12} parent=27 // pred_check
              _
            $region30: #{gpt2_lm_head_forward.12} parent=27 // pred_check_branch
              %229 = sbr.rel target = $region32
            $region31: #{gpt2_lm_head_forward.12} parent=27 // pred_region
              // Predicated region
              $region44: #{gpt2_lm_head_forward.12} parent=31 // pred_check
                _
              $region45: #{gpt2_lm_head_forward.12} parent=31 // pred_check_branch
                %247 = sbr.rel (0) target = $region47
              $region46: #{gpt2_lm_head_forward.12} parent=31 // pred_region
                loop: start=0, step=1, limit=1
                $region48: #{gpt2_lm_head_forward.12} parent=46 // loop_pre_header
                  _
                $region49: #{gpt2_lm_head_forward.12} parent=46 // loop_header
                  %s249 = sphi 0, %s253
                  %p250 = scmp.ge.s32.totalorder %s249, 1
                  %s254 = sphi %s225, %s225
                  %s255 = sphi %s219, %s219
                $region50: #{gpt2_lm_head_forward.12} parent=46 // loop_header_branch
                  %252 = sbr.rel (%p250) target = $region54
                $region51: #{gpt2_lm_head_forward.12} parent=46 // loop_body
                  _
                $region52: #{gpt2_lm_head_forward.12} parent=46 // loop_footer
                  %s253 = sadd.s32 1, %s249
                $region53: #{gpt2_lm_head_forward.12} parent=46 // loop_footer_branch
                  %248 = sbr.rel target = $region49
                $region54: #{gpt2_lm_head_forward.12} parent=46 // loop_exit
                  _
                %s257 = ssub.s32 16, 1
                loop: start=0, step=1, limit=1
                $region55: #{gpt2_lm_head_forward.12} parent=46 // loop_pre_header
                  _
                $region56: #{gpt2_lm_head_forward.12} parent=46 // loop_header
                  %s259 = sphi 0, %s263
                  %p260 = scmp.ge.s32.totalorder %s259, 1
                  %s264 = sphi %s225, %s225
                  %s265 = sphi %s219, %s219
                $region57: #{gpt2_lm_head_forward.12} parent=46 // loop_header_branch
                  %262 = sbr.rel (%p260) target = $region61
                $region58: #{gpt2_lm_head_forward.12} parent=46 // loop_body
                  %v266 = vld [vmem:[%s264] sm:%s257]
                  %267 = vst [vmem:[%s265] sm:%s257] %v266
                  %v268 = vld [vmem:[%s264 + $0xc] sm:%s257]
                  %269 = vst [vmem:[%s265 + $0x4] sm:%s257] %v268
                $region59: #{gpt2_lm_head_forward.12} parent=46 // loop_footer
                  %s263 = sadd.s32 1, %s259
                $region60: #{gpt2_lm_head_forward.12} parent=46 // loop_footer_branch
                  %258 = sbr.rel target = $region56
                $region61: #{gpt2_lm_head_forward.12} parent=46 // loop_exit
                  _
              $region47: #{gpt2_lm_head_forward.12} parent=31 // pred_fallthru
                _
            $region32: #{gpt2_lm_head_forward.12} parent=27 // pred_fallthru
              _
            // Predicated region
            $region33: #{gpt2_lm_head_forward.12} parent=27 // pred_check
              _
            $region34: #{gpt2_lm_head_forward.12} parent=27 // pred_check_branch
              %231 = sbr.rel (0) target = $region36
            $region35: #{gpt2_lm_head_forward.12} parent=27 // pred_region
              %s233 = ssub.s32 16, 1
              loop: start=0, step=1, limit=1
              $region37: #{gpt2_lm_head_forward.12} parent=35 // loop_pre_header
                _
              $region38: #{gpt2_lm_head_forward.12} parent=35 // loop_header
                %s235 = sphi 0, %s239
                %p236 = scmp.ge.s32.totalorder %s235, 1
                %s240 = sphi %s225, %s225
                %s241 = sphi %s219, %s219
              $region39: #{gpt2_lm_head_forward.12} parent=35 // loop_header_branch
                %238 = sbr.rel (%p236) target = $region43
              $region40: #{gpt2_lm_head_forward.12} parent=35 // loop_body
                %v242 = vld [vmem:[%s240] sm:%s233]
                %243 = vst [vmem:[%s241] sm:%s233] %v242
                %v244 = vld [vmem:[%s240 + $0xc] sm:%s233]
                %245 = vst [vmem:[%s241 + $0x4] sm:%s233] %v244
              $region41: #{gpt2_lm_head_forward.12} parent=35 // loop_footer
                %s239 = sadd.s32 1, %s235
              $region42: #{gpt2_lm_head_forward.12} parent=35 // loop_footer_branch
                %234 = sbr.rel target = $region38
              $region43: #{gpt2_lm_head_forward.12} parent=35 // loop_exit
                _
            $region36: #{gpt2_lm_head_forward.12} parent=27 // pred_fallthru
              _
          $region28: #{gpt2_lm_head_forward.12} parent=23 // pred_fallthru
            _
          %270 = vnop
        $region24: #{gpt2_lm_head_forward.12} parent=15 // pred_fallthru
          _
        // Predicated region
        $region62: #{gpt2_lm_head_forward.12} parent=15 // pred_check
          %p271 = pneg %p115
        $region63: #{gpt2_lm_head_forward.12} parent=15 // pred_check_branch
          %273 = sbr.rel (%p271) target = $region65
        $region64: #{gpt2_lm_head_forward.12} parent=15 // pred_region
          %s274 = sand.u32 %s105, 1
          %s275 = sand.u32 %s105, 1
          %s276 = smul.addr %s275, 8
          %s277 = scalar_lea.vmem [#allocation6], %s276
          %p278 = scmp.lt.s32.totalorder %s19, %s18
          %s279 = scalar_select %p278, %s19, %s18
          %s280 = smul.u32 2, %s279
          %s281 = smul.addr %s280, 3
          %s282 = sadd.s32 1, %s281
          %s283 = smul.addr %s17, 6
          %s284 = sadd.s32 %s282, %s283
          %s285 = smul.addr %s284, 4
          %s286 = scalar_lea.vmem %s2, %s285
          // Predicated region
          $region66: #{gpt2_lm_head_forward.12} parent=64 // pred_check
            _
          $region67: #{gpt2_lm_head_forward.12} parent=64 // pred_check_branch
            %288 = sbr.rel (0) target = $region69
          $region68: #{gpt2_lm_head_forward.12} parent=64 // pred_region
            // Predicated region
            $region70: #{gpt2_lm_head_forward.12} parent=68 // pred_check
              _
            $region71: #{gpt2_lm_head_forward.12} parent=68 // pred_check_branch
              %290 = sbr.rel target = $region73
            $region72: #{gpt2_lm_head_forward.12} parent=68 // pred_region
              // Predicated region
              $region85: #{gpt2_lm_head_forward.12} parent=72 // pred_check
                _
              $region86: #{gpt2_lm_head_forward.12} parent=72 // pred_check_branch
                %308 = sbr.rel (0) target = $region88
              $region87: #{gpt2_lm_head_forward.12} parent=72 // pred_region
                loop: start=0, step=1, limit=1
                $region89: #{gpt2_lm_head_forward.12} parent=87 // loop_pre_header
                  _
                $region90: #{gpt2_lm_head_forward.12} parent=87 // loop_header
                  %s310 = sphi 0, %s314
                  %p311 = scmp.ge.s32.totalorder %s310, 1
                  %s315 = sphi %s286, %s286
                  %s316 = sphi %s277, %s277
                $region91: #{gpt2_lm_head_forward.12} parent=87 // loop_header_branch
                  %313 = sbr.rel (%p311) target = $region95
                $region92: #{gpt2_lm_head_forward.12} parent=87 // loop_body
                  _
                $region93: #{gpt2_lm_head_forward.12} parent=87 // loop_footer
                  %s314 = sadd.s32 1, %s310
                $region94: #{gpt2_lm_head_forward.12} parent=87 // loop_footer_branch
                  %309 = sbr.rel target = $region90
                $region95: #{gpt2_lm_head_forward.12} parent=87 // loop_exit
                  _
                %s318 = ssub.s32 16, 1
                loop: start=0, step=1, limit=1
                $region96: #{gpt2_lm_head_forward.12} parent=87 // loop_pre_header
                  _
                $region97: #{gpt2_lm_head_forward.12} parent=87 // loop_header
                  %s320 = sphi 0, %s324
                  %p321 = scmp.ge.s32.totalorder %s320, 1
                  %s325 = sphi %s286, %s286
                  %s326 = sphi %s277, %s277
                $region98: #{gpt2_lm_head_forward.12} parent=87 // loop_header_branch
                  %323 = sbr.rel (%p321) target = $region102
                $region99: #{gpt2_lm_head_forward.12} parent=87 // loop_body
                  %v327 = vld [vmem:[%s325] sm:%s318]
                  %328 = vst [vmem:[%s326] sm:%s318] %v327
                  %v329 = vld [vmem:[%s325 + $0xc] sm:%s318]
                  %330 = vst [vmem:[%s326 + $0x4] sm:%s318] %v329
                $region100: #{gpt2_lm_head_forward.12} parent=87 // loop_footer
                  %s324 = sadd.s32 1, %s320
                $region101: #{gpt2_lm_head_forward.12} parent=87 // loop_footer_branch
                  %319 = sbr.rel target = $region97
                $region102: #{gpt2_lm_head_forward.12} parent=87 // loop_exit
                  _
              $region88: #{gpt2_lm_head_forward.12} parent=72 // pred_fallthru
                _
            $region73: #{gpt2_lm_head_forward.12} parent=68 // pred_fallthru
              _
            // Predicated region
            $region74: #{gpt2_lm_head_forward.12} parent=68 // pred_check
              _
            $region75: #{gpt2_lm_head_forward.12} parent=68 // pred_check_branch
              %292 = sbr.rel (0) target = $region77
            $region76: #{gpt2_lm_head_forward.12} parent=68 // pred_region
              %s294 = ssub.s32 16, 1
              loop: start=0, step=1, limit=1
              $region78: #{gpt2_lm_head_forward.12} parent=76 // loop_pre_header
                _
              $region79: #{gpt2_lm_head_forward.12} parent=76 // loop_header
                %s296 = sphi 0, %s300
                %p297 = scmp.ge.s32.totalorder %s296, 1
                %s301 = sphi %s286, %s286
                %s302 = sphi %s277, %s277
              $region80: #{gpt2_lm_head_forward.12} parent=76 // loop_header_branch
                %299 = sbr.rel (%p297) target = $region84
              $region81: #{gpt2_lm_head_forward.12} parent=76 // loop_body
                %v303 = vld [vmem:[%s301] sm:%s294]
                %304 = vst [vmem:[%s302] sm:%s294] %v303
                %v305 = vld [vmem:[%s301 + $0xc] sm:%s294]
                %306 = vst [vmem:[%s302 + $0x4] sm:%s294] %v305
              $region82: #{gpt2_lm_head_forward.12} parent=76 // loop_footer
                %s300 = sadd.s32 1, %s296
              $region83: #{gpt2_lm_head_forward.12} parent=76 // loop_footer_branch
                %295 = sbr.rel target = $region79
              $region84: #{gpt2_lm_head_forward.12} parent=76 // loop_exit
                _
            $region77: #{gpt2_lm_head_forward.12} parent=68 // pred_fallthru
              _
          $region69: #{gpt2_lm_head_forward.12} parent=64 // pred_fallthru
            _
          %331 = vnop
        $region65: #{gpt2_lm_head_forward.12} parent=15 // pred_fallthru
          _
        // Predicated region
        $region103: #{gpt2_lm_head_forward.12} parent=15 // pred_check
          %p332 = pneg %p147
        $region104: #{gpt2_lm_head_forward.12} parent=15 // pred_check_branch
          %334 = sbr.rel (%p332) target = $region106
        $region105: #{gpt2_lm_head_forward.12} parent=15 // pred_region
          %s335 = sand.u32 %s137, 1
          %s336 = sand.u32 %s137, 1
          %s337 = smul.addr %s336, 8
          %s338 = scalar_lea.vmem [#allocation7], %s337
          %p339 = scmp.lt.s32.totalorder %s19, %s18
          %s340 = scalar_select %p339, %s19, %s18
          %s341 = smul.u32 2, %s340
          %s342 = smul.addr %s341, 3
          %s343 = sadd.s32 2, %s342
          %s344 = smul.addr %s17, 6
          %s345 = sadd.s32 %s343, %s344
          %s346 = smul.addr %s345, 4
          %s347 = scalar_lea.vmem %s3, %s346
          // Predicated region
          $region107: #{gpt2_lm_head_forward.12} parent=105 // pred_check
            _
          $region108: #{gpt2_lm_head_forward.12} parent=105 // pred_check_branch
            %349 = sbr.rel (0) target = $region110
          $region109: #{gpt2_lm_head_forward.12} parent=105 // pred_region
            // Predicated region
            $region111: #{gpt2_lm_head_forward.12} parent=109 // pred_check
              _
            $region112: #{gpt2_lm_head_forward.12} parent=109 // pred_check_branch
              %351 = sbr.rel target = $region114
            $region113: #{gpt2_lm_head_forward.12} parent=109 // pred_region
              // Predicated region
              $region126: #{gpt2_lm_head_forward.12} parent=113 // pred_check
                _
              $region127: #{gpt2_lm_head_forward.12} parent=113 // pred_check_branch
                %369 = sbr.rel (0) target = $region129
              $region128: #{gpt2_lm_head_forward.12} parent=113 // pred_region
                loop: start=0, step=1, limit=1
                $region130: #{gpt2_lm_head_forward.12} parent=128 // loop_pre_header
                  _
                $region131: #{gpt2_lm_head_forward.12} parent=128 // loop_header
                  %s371 = sphi 0, %s375
                  %p372 = scmp.ge.s32.totalorder %s371, 1
                  %s376 = sphi %s347, %s347
                  %s377 = sphi %s338, %s338
                $region132: #{gpt2_lm_head_forward.12} parent=128 // loop_header_branch
                  %374 = sbr.rel (%p372) target = $region136
                $region133: #{gpt2_lm_head_forward.12} parent=128 // loop_body
                  _
                $region134: #{gpt2_lm_head_forward.12} parent=128 // loop_footer
                  %s375 = sadd.s32 1, %s371
                $region135: #{gpt2_lm_head_forward.12} parent=128 // loop_footer_branch
                  %370 = sbr.rel target = $region131
                $region136: #{gpt2_lm_head_forward.12} parent=128 // loop_exit
                  _
                %s379 = ssub.s32 16, 1
                loop: start=0, step=1, limit=1
                $region137: #{gpt2_lm_head_forward.12} parent=128 // loop_pre_header
                  _
                $region138: #{gpt2_lm_head_forward.12} parent=128 // loop_header
                  %s381 = sphi 0, %s385
                  %p382 = scmp.ge.s32.totalorder %s381, 1
                  %s386 = sphi %s347, %s347
                  %s387 = sphi %s338, %s338
                $region139: #{gpt2_lm_head_forward.12} parent=128 // loop_header_branch
                  %384 = sbr.rel (%p382) target = $region143
                $region140: #{gpt2_lm_head_forward.12} parent=128 // loop_body
                  %v388 = vld [vmem:[%s386] sm:%s379]
                  %389 = vst [vmem:[%s387] sm:%s379] %v388
                  %v390 = vld [vmem:[%s386 + $0xc] sm:%s379]
                  %391 = vst [vmem:[%s387 + $0x4] sm:%s379] %v390
                $region141: #{gpt2_lm_head_forward.12} parent=128 // loop_footer
                  %s385 = sadd.s32 1, %s381
                $region142: #{gpt2_lm_head_forward.12} parent=128 // loop_footer_branch
                  %380 = sbr.rel target = $region138
                $region143: #{gpt2_lm_head_forward.12} parent=128 // loop_exit
                  _
              $region129: #{gpt2_lm_head_forward.12} parent=113 // pred_fallthru
                _
            $region114: #{gpt2_lm_head_forward.12} parent=109 // pred_fallthru
              _
            // Predicated region
            $region115: #{gpt2_lm_head_forward.12} parent=109 // pred_check
              _
            $region116: #{gpt2_lm_head_forward.12} parent=109 // pred_check_branch
              %353 = sbr.rel (0) target = $region118
            $region117: #{gpt2_lm_head_forward.12} parent=109 // pred_region
              %s355 = ssub.s32 16, 1
              loop: start=0, step=1, limit=1
              $region119: #{gpt2_lm_head_forward.12} parent=117 // loop_pre_header
                _
              $region120: #{gpt2_lm_head_forward.12} parent=117 // loop_header
                %s357 = sphi 0, %s361
                %p358 = scmp.ge.s32.totalorder %s357, 1
                %s362 = sphi %s347, %s347
                %s363 = sphi %s338, %s338
              $region121: #{gpt2_lm_head_forward.12} parent=117 // loop_header_branch
                %360 = sbr.rel (%p358) target = $region125
              $region122: #{gpt2_lm_head_forward.12} parent=117 // loop_body
                %v364 = vld [vmem:[%s362] sm:%s355]
                %365 = vst [vmem:[%s363] sm:%s355] %v364
                %v366 = vld [vmem:[%s362 + $0xc] sm:%s355]
                %367 = vst [vmem:[%s363 + $0x4] sm:%s355] %v366
              $region123: #{gpt2_lm_head_forward.12} parent=117 // loop_footer
                %s361 = sadd.s32 1, %s357
              $region124: #{gpt2_lm_head_forward.12} parent=117 // loop_footer_branch
                %356 = sbr.rel target = $region120
              $region125: #{gpt2_lm_head_forward.12} parent=117 // loop_exit
                _
            $region118: #{gpt2_lm_head_forward.12} parent=109 // pred_fallthru
              _
          $region110: #{gpt2_lm_head_forward.12} parent=105 // pred_fallthru
            _
          %392 = vnop
        $region106: #{gpt2_lm_head_forward.12} parent=15 // pred_fallthru
          _
      $region16: #{gpt2_lm_head_forward.12} parent=5 // pred_fallthru
        _
      %p393 = scmp.le.s32.totalorder 1, %s10
      %p394 = scmp.lt.s32.totalorder %s10, 3
      %p395 = pnand %p393, %p394
      %p396 = pneg %p395
      // Predicated region
      $region144: #{gpt2_lm_head_forward.12} parent=5 // pred_check
        _
      $region145: #{gpt2_lm_head_forward.12} parent=5 // pred_check_branch
        %398 = sbr.rel (%p395) target = $region147
      $region146: #{gpt2_lm_head_forward.12} parent=5 // pred_region
        %s399 = ssub.s32 %s10, 1
        %s400 = sand.u32 %s76, 1
        %s401 = sand.u32 %s76, 1
        %s402 = smul.addr %s401, 8
        %s403 = scalar_lea.vmem [#allocation5], %s402
        // Predicated region
        $region148: #{gpt2_lm_head_forward.12} parent=146 // pred_check
          %p404 = pneg %p89
        $region149: #{gpt2_lm_head_forward.12} parent=146 // pred_check_branch
          %406 = sbr.rel (%p404) target = $region151
        $region150: #{gpt2_lm_head_forward.12} parent=146 // pred_region
          _
        $region151: #{gpt2_lm_head_forward.12} parent=146 // pred_fallthru
          _
        %s407 = sand.u32 %s108, 1
        %s408 = sand.u32 %s108, 1
        %s409 = smul.addr %s408, 8
        %s410 = scalar_lea.vmem [#allocation6], %s409
        // Predicated region
        $region152: #{gpt2_lm_head_forward.12} parent=146 // pred_check
          %p411 = pneg %p121
        $region153: #{gpt2_lm_head_forward.12} parent=146 // pred_check_branch
          %413 = sbr.rel (%p411) target = $region155
        $region154: #{gpt2_lm_head_forward.12} parent=146 // pred_region
          _
        $region155: #{gpt2_lm_head_forward.12} parent=146 // pred_fallthru
          _
        %s414 = sand.u32 %s140, 1
        %s415 = sand.u32 %s140, 1
        %s416 = smul.addr %s415, 8
        %s417 = scalar_lea.vmem [#allocation7], %s416
        // Predicated region
        $region156: #{gpt2_lm_head_forward.12} parent=146 // pred_check
          %p418 = pneg %p153
        $region157: #{gpt2_lm_head_forward.12} parent=146 // pred_check_branch
          %420 = sbr.rel (%p418) target = $region159
        $region158: #{gpt2_lm_head_forward.12} parent=146 // pred_region
          _
        $region159: #{gpt2_lm_head_forward.12} parent=146 // pred_fallthru
          _
        %p421 = scmp.lt.s32.totalorder %s22, %s21
        %s422 = scalar_select %p421, %s22, %s21
        %p423 = scmp.lt.s32.totalorder %s20, 1
        %s424 = scalar_select %p423, %s20, 1
        %p425 = scmp.lt.s32.totalorder %s422, 0
        %s426 = scalar_select %p425, %s422, 0
        %s427 = sadd.s32 %s426, %s424
        %s428 = scalar_lea.vmem %s0, %s427
        %p429 = pneg %p61
        %p430 = pneg %p58
        %s431 = sand.u32 %s76, 1
        %s432 = sand.u32 %s76, 1
        %s433 = smul.addr %s432, 8
        %s434 = scalar_lea.vmem [#allocation5], %s433
        %p435 = pneg %p89
        %p436 = pneg %p86
        %s437 = sand.u32 %s108, 1
        %s438 = sand.u32 %s108, 1
        %s439 = smul.addr %s438, 8
        %s440 = scalar_lea.vmem [#allocation6], %s439
        %p441 = pneg %p121
        %p442 = pneg %p118
        %s443 = sand.u32 %s140, 1
        %s444 = sand.u32 %s140, 1
        %s445 = smul.addr %s444, 8
        %s446 = scalar_lea.vmem [#allocation7], %s445
        %p447 = pneg %p153
        %p448 = pneg %p150
        %p449 = pneg %p181
        %p450 = pneg %p178
        %s451 = smul.u32 2, %s21
        %p452 = scmp.lt.s32.totalorder %s20, 1
        %s453 = scalar_select %p452, %s20, 1
        %p454 = scmp.lt.s32.totalorder %s451, 1
        %s455 = scalar_select %p454, %s451, 1
        %s456 = smul.addr %s453, 2
        %s457 = sadd.s32 %s455, %s456
        %s458 = smul.addr %s457, 4
        %s459 = scalar_lea.vmem %s4, %s458
        %p460 = scmp.lt.s32.totalorder %s22, %s21
        %s461 = scalar_select %p460, %s22, %s21
        %p462 = scmp.lt.s32.totalorder %s20, 1
        %s463 = scalar_select %p462, %s20, 1
        %p464 = scmp.lt.s32.totalorder %s461, 0
        %s465 = scalar_select %p464, %s461, 0
        %s466 = sadd.s32 %s465, %s463
        %s467 = scalar_lea.vmem %s0, %s466
        %p468 = scmp.lt.s32.totalorder %s22, %s21
        %s469 = scalar_select %p468, %s22, %s21
        %s470 = smul.u32 2, %s21
        %p471 = scmp.lt.s32.totalorder %s22, %s21
        %s472 = scalar_select %p471, %s22, %s21
        %s473 = smul.u32 2, %s472
        %p474 = scmp.lt.s32.totalorder %s22, %s21
        %s475 = scalar_select %p474, %s22, %s21
        %s476 = smul.u32 2, %s475
        %s477 = smul.u32 2, %s21
        %p478 = scmp.lt.s32.totalorder %s20, 1
        %s479 = scalar_select %p478, %s20, 1
        %p480 = scmp.lt.s32.totalorder %s477, 1
        %s481 = scalar_select %p480, %s477, 1
        %s482 = smul.addr %s479, 2
        %s483 = sadd.s32 %s481, %s482
        %s484 = smul.addr %s483, 4
        %s485 = scalar_lea.vmem %s4, %s484
        %s486 = smul.u32 2, %s21
        %p488 = scmp.eq.s32.totalorder %s22, 0
        // Predicated region
        $region160: #{gpt2_lm_head_forward.12} parent=146 // pred_check
          %p489 = pneg %p488
        $region161: #{gpt2_lm_head_forward.12} parent=146 // pred_check_branch
          %491 = sbr.rel (%p489) target = $region163
        $region162: #{gpt2_lm_head_forward.12} parent=146 // pred_region
          %vm492 = vcmask 7168
          %493 = vst.msk [vmem:[#allocation2] sm:$0xff] %vm492, -1e+30
          %494 = vst.msk [vmem:[#allocation2 + $0x8] sm:$0xff] %vm492, -1e+30
          %495 = vst.msk [vmem:[#allocation2 + $0x10] sm:$0xff] %vm492, -1e+30
          %496 = vst.msk [vmem:[#allocation2 + $0x18] sm:$0xff] %vm492, -1e+30
          %497 = vst.msk [vmem:[#allocation3] sm:$0xff] %vm492, 0.0
          %498 = vst.msk [vmem:[#allocation3 + $0x8] sm:$0xff] %vm492, 0.0
          %499 = vst.msk [vmem:[#allocation3 + $0x10] sm:$0xff] %vm492, 0.0
          %500 = vst.msk [vmem:[#allocation3 + $0x18] sm:$0xff] %vm492, 0.0
          %501 = vst [vmem:[#allocation4] sm:$0xff] 0.0
          %502 = vst [vmem:[#allocation4 + $0x8] sm:$0xff] 0.0
        $region163: #{gpt2_lm_head_forward.12} parent=146 // pred_fallthru
          _
        %s503 = smul.u32 %s21, 16
        %s504 = sadd.s32 %s503, 15
        %s505 = smul.u32 %s22, 16
        %p506 = scmp.ge.s32.totalorder %s504, %s505
        // Predicated region
        $region164: #{gpt2_lm_head_forward.12} parent=146 // pred_check
          %p507 = pneg %p506
        $region165: #{gpt2_lm_head_forward.12} parent=146 // pred_check_branch
          %509 = sbr.rel (%p507) target = $region167
        $region166: #{gpt2_lm_head_forward.12} parent=146 // pred_region
          %v510 = vlaneseq
          %v511 = vshrl.u32 %v510, 7
          %v512 = vadd.s32 %v511, 8
          %v513 = vstv %s503
          %v514 = vadd.s32 %v513, %v511
          %v515 = vadd.s32 %v513, %v512
          %v516 = vlaneseq
          %v517 = vand.u32 %v516, 127
          %v518 = vstv %s505
          %v519 = vadd.s32 %v518, %v517
          %vm520 = vcmp.ge.s32.totalorder %v514, %v519
          %vm521 = vcmp.ge.s32.totalorder %v515, %v519
          %v522 = vsel %vm520, 0.0, -1e+30
          %v523 = vsel %vm521, 0.0, -1e+30
          %v524 = vld [vmem:[%s467] sm:$0x1]
          %v526 = vperm.slane %v524, 0
          %v528 = vadd.f32 %v522, %v526
          %v529 = vadd.f32 %v523, %v526
          %v530 = vld [vmem:[%s403] sm:$0xf]
          %v531 = vld [vmem:[%s403 + $0x4] sm:$0xf]
          %v532 = vld [vmem:[%s410] sm:$0xf]
          %v533 = vld [vmem:[%s410 + $0x4] sm:$0xf]
          %v534 = vld [vmem:[%s417] sm:$0xf]
          %v535 = vld [vmem:[%s417 + $0x4] sm:$0xf]
          %v538 = vunpack.c.l.b16 %v530
          %v539 = vunpack.c.l.b16 %v531
          %v540 = vpack.c.b16 %v539, %v538
          %v543 = vunpack.c.l.b16 %v532
          %v544 = vunpack.c.l.b16 %v533
          %v545 = vpack.c.b16 %v544, %v543
          %vm546 = vcmask 523264
          %v548 = vsel %vm546, %v540, 0
          %v551 = vsel %vm546, %v545, 0
          %553 = vmatpush.bf16.xpose.msra.mxu0 0
          %554 = vmatpush.bf16.xpose.msra.mxu0 0
          %555 = vmatpush.bf16.xpose.msra.mxu0 0
          %556 = vmatpush.bf16.xpose.msra.mxu0 0
          %557 = vmatpush.bf16.xpose.msra.mxu0 0
          %558 = vmatpush.bf16.xpose.msra.mxu0 0
          %559 = vmatpush.bf16.xpose.msra.mxu0 0
          %560 = vmatpush.bf16.xpose.msra.mxu0 %v551
          %561 = vmatmul.bf16.gmra.mxu0 %v548
          %v562 = vpop.f32.mrf.mxu0
          %v563 = vadd.f32 %v528, %v562
          %v564 = vpop.f32.mrf.mxu0
          %v565 = vadd.f32 %v529, %v564
          %566 = vdwg.mxu0
          %v567 = vld [vmem:[#allocation2] sm:$0xff]
          %v568 = vld [vmem:[#allocation2 + $0x8] sm:$0xff]
          %vm569 = vcmask 130048
          %v570 = vsel %vm569, %v563, -inf
          %571 = vmax.xlane.f32.xlu0 %v570
          %v572 = vpop.xlane.xlu0 %571
          %v573 = vsel %vm569, %v565, -inf
          %574 = vmax.xlane.f32.xlu0 %v573
          %v575 = vpop.xlane.xlu0 %574
          %v576 = vmax.f32 %v567, %v572
          %v577 = vmax.f32 %v568, %v575
          %v578 = vsub.f32 %v567, %v576
          %v579 = vsub.f32 %v568, %v577
          %v580 = vmul.f32 %v578, 1.442695
          %v581 = vpow.pop %v580
          %v582 = vmul.f32 %v579, 1.442695
          %v583 = vpow.pop %v582
          %585 = vset.pattern.permute.xlu0 0
          %586 = vperm.xlu0 %585, %v576
          %v587 = vpop.permute.xlu0 %586
          %590 = vset.pattern.permute.xlu0 0
          %591 = vperm.xlu0 %590, %v577
          %v592 = vpop.permute.xlu0 %591
          %v594 = vsub.f32 %v563, %v587
          %v595 = vsub.f32 %v565, %v592
          %v596 = vmul.f32 %v594, 1.442695
          %v597 = vpow.pop %v596
          %v598 = vmul.f32 %v595, 1.442695
          %v599 = vpow.pop %v598
          %v600 = vld [vmem:[#allocation3] sm:$0xff]
          %v601 = vld [vmem:[#allocation3 + $0x8] sm:$0xff]
          %v602 = vmul.f32 %v581, %v600
          %v603 = vmul.f32 %v583, %v601
          %v604 = vsel %vm569, %v597, 0.0
          %605 = vadd.xlane.f32.xlu0 %v604
          %v606 = vpop.xlane.xlu0 %605
          %v607 = vsel %vm569, %v599, 0.0
          %608 = vadd.xlane.f32.xlu0 %v607
          %v609 = vpop.xlane.xlu0 %608
          %v610 = vadd.f32 %v602, %v606
          %v611 = vadd.f32 %v603, %v609
          %vm612 = vcmask 7168
          %613 = vst.msk [vmem:[#allocation3] sm:$0xff] %vm612, %v610
          %614 = vst.msk [vmem:[#allocation3 + $0x8] sm:$0xff] %vm612, %v611
          %v615 = vld [vmem:[#allocation4] sm:$0xff]
          %v616 = vld [vmem:[#allocation4 + $0x8] sm:$0xff]
          %618 = vset.pattern.permute.xlu0 0
          %619 = vperm.xlu0 %618, %v581
          %v620 = vpop.permute.xlu0 %619
          %623 = vset.pattern.permute.xlu0 0
          %624 = vperm.xlu0 %623, %v583
          %v625 = vpop.permute.xlu0 %624
          %v627 = vmul.f32 %v620, %v615
          %v628 = vmul.f32 %v625, %v616
          %v629 = vpack.c.bf16 %v599, %v597
          %v632 = vunpack.c.l.b16 %v534
          %v633 = vunpack.c.l.b16 %v535
          %v634 = vpack.c.b16 %v633, %v632
          %v637 = vsel %vm569, %v629, 0
          %639 = vmatpush.bf16.msra.mxu0 0
          %640 = vmatpush.bf16.msra.mxu0 0
          %641 = vmatpush.bf16.msra.mxu0 0
          %642 = vmatpush.bf16.msra.mxu0 0
          %643 = vmatpush.bf16.msra.mxu0 0
          %644 = vmatpush.bf16.msra.mxu0 0
          %645 = vmatpush.bf16.msra.mxu0 0
          %646 = vmatpush.bf16.msra.mxu0 %v634
          %647 = vmatmul.bf16.gmra.mxu0 %v637
          %v648 = vpop.f32.mrf.mxu0
          %v649 = vadd.f32 0.0, %v648
          %v650 = vpop.f32.mrf.mxu0
          %v651 = vadd.f32 0.0, %v650
          %652 = vdwg.mxu0
          %v653 = vadd.f32 %v627, %v649
          %v654 = vadd.f32 %v628, %v651
          %655 = vst.msk [vmem:[#allocation4] sm:$0xff] %vm546, %v653
          %656 = vst.msk [vmem:[#allocation4 + $0x8] sm:$0xff] %vm546, %v654
          %657 = vst.msk [vmem:[#allocation2] sm:$0xff] %vm612, %v576
          %658 = vst.msk [vmem:[#allocation2 + $0x8] sm:$0xff] %vm612, %v577
          %v659 = vld [vmem:[%s403] sm:$0xf]
          %v660 = vld [vmem:[%s403 + $0x4] sm:$0xf]
          %v661 = vld [vmem:[%s410] sm:$0xf]
          %v662 = vld [vmem:[%s410 + $0x4] sm:$0xf]
          %v663 = vld [vmem:[%s417] sm:$0xf]
          %v664 = vld [vmem:[%s417 + $0x4] sm:$0xf]
          %v667 = vunpack.c.l.b16 %v659
          %v668 = vunpack.c.l.b16 %v660
          %v669 = vpack.c.b16 %v668, %v667
          %670 = vrot.lane.b32.xlu0 %v669, 64
          %v671 = vpop.permute.xlu0 %670
          %v674 = vunpack.c.l.b16 %v661
          %v675 = vunpack.c.l.b16 %v662
          %v676 = vpack.c.b16 %v675, %v674
          %677 = vrot.lane.b32.xlu0 %v676, 64
          %v678 = vpop.permute.xlu0 %677
          %v680 = vsel %vm546, %v671, 0
          %v683 = vsel %vm546, %v678, 0
          %685 = vmatpush.bf16.xpose.msra.mxu0 0
          %686 = vmatpush.bf16.xpose.msra.mxu0 0
          %687 = vmatpush.bf16.xpose.msra.mxu0 0
          %688 = vmatpush.bf16.xpose.msra.mxu0 0
          %689 = vmatpush.bf16.xpose.msra.mxu0 0
          %690 = vmatpush.bf16.xpose.msra.mxu0 0
          %691 = vmatpush.bf16.xpose.msra.mxu0 0
          %692 = vmatpush.bf16.xpose.msra.mxu0 %v683
          %693 = vmatmul.bf16.gmra.mxu0 %v680
          %v694 = vpop.f32.mrf.mxu0
          %v695 = vadd.f32 %v528, %v694
          %v696 = vpop.f32.mrf.mxu0
          %v697 = vadd.f32 %v529, %v696
          %698 = vdwg.mxu0
          %s699 = scalar_lea.vmem [#allocation2], 16
          %v700 = vld [vmem:[%s699] sm:$0xff]
          %v701 = vld [vmem:[%s699 + $0x8] sm:$0xff]
          %v702 = vsel %vm569, %v695, -inf
          %703 = vmax.xlane.f32.xlu0 %v702
          %v704 = vpop.xlane.xlu0 %703
          %v705 = vsel %vm569, %v697, -inf
          %706 = vmax.xlane.f32.xlu0 %v705
          %v707 = vpop.xlane.xlu0 %706
          %v708 = vmax.f32 %v700, %v704
          %v709 = vmax.f32 %v701, %v707
          %v710 = vsub.f32 %v700, %v708
          %v711 = vsub.f32 %v701, %v709
          %v712 = vmul.f32 %v710, 1.442695
          %v713 = vpow.pop %v712
          %v714 = vmul.f32 %v711, 1.442695
          %v715 = vpow.pop %v714
          %717 = vset.pattern.permute.xlu0 0
          %718 = vperm.xlu0 %717, %v708
          %v719 = vpop.permute.xlu0 %718
          %722 = vset.pattern.permute.xlu0 0
          %723 = vperm.xlu0 %722, %v709
          %v724 = vpop.permute.xlu0 %723
          %v726 = vsub.f32 %v695, %v719
          %v727 = vsub.f32 %v697, %v724
          %v728 = vmul.f32 %v726, 1.442695
          %v729 = vpow.pop %v728
          %v730 = vmul.f32 %v727, 1.442695
          %v731 = vpow.pop %v730
          %s732 = scalar_lea.vmem [#allocation3], 16
          %v733 = vld [vmem:[%s732] sm:$0xff]
          %v734 = vld [vmem:[%s732 + $0x8] sm:$0xff]
          %v735 = vmul.f32 %v713, %v733
          %v736 = vmul.f32 %v715, %v734
          %v737 = vsel %vm569, %v729, 0.0
          %738 = vadd.xlane.f32.xlu0 %v737
          %v739 = vpop.xlane.xlu0 %738
          %v740 = vsel %vm569, %v731, 0.0
          %741 = vadd.xlane.f32.xlu0 %v740
          %v742 = vpop.xlane.xlu0 %741
          %v743 = vadd.f32 %v735, %v739
          %v744 = vadd.f32 %v736, %v742
          %745 = vst.msk [vmem:[%s732] sm:$0xff] %vm612, %v743
          %746 = vst.msk [vmem:[%s732 + $0x8] sm:$0xff] %vm612, %v744
          %v747 = vld [vmem:[#allocation4] sm:$0xff]
          %v748 = vld [vmem:[#allocation4 + $0x8] sm:$0xff]
          %750 = vset.pattern.permute.xlu0 0
          %751 = vperm.xlu0 %750, %v713
          %v752 = vpop.permute.xlu0 %751
          %755 = vset.pattern.permute.xlu0 0
          %756 = vperm.xlu0 %755, %v715
          %v757 = vpop.permute.xlu0 %756
          %v759 = vmul.f32 %v752, %v747
          %v760 = vmul.f32 %v757, %v748
          %v761 = vpack.c.bf16 %v731, %v729
          %v764 = vunpack.c.l.b16 %v663
          %v765 = vunpack.c.l.b16 %v664
          %v766 = vpack.c.b16 %v765, %v764
          %767 = vrot.lane.b32.xlu0 %v766, 64
          %v768 = vpop.permute.xlu0 %767
          %v771 = vsel %vm569, %v761, 0
          %773 = vmatpush.bf16.msra.mxu0 0
          %774 = vmatpush.bf16.msra.mxu0 0
          %775 = vmatpush.bf16.msra.mxu0 0
          %776 = vmatpush.bf16.msra.mxu0 0
          %777 = vmatpush.bf16.msra.mxu0 0
          %778 = vmatpush.bf16.msra.mxu0 0
          %779 = vmatpush.bf16.msra.mxu0 0
          %780 = vmatpush.bf16.msra.mxu0 %v768
          %781 = vmatmul.bf16.gmra.mxu0 %v771
          %v782 = vpop.f32.mrf.mxu0
          %v783 = vadd.f32 0.0, %v782
          %v784 = vpop.f32.mrf.mxu0
          %v785 = vadd.f32 0.0, %v784
          %786 = vdwg.mxu0
          %789 = vrot.lane.b32.xlu0 %v783, 64
          %v790 = vpop.permute.xlu0 %789
          %791 = vrot.lane.b32.xlu0 %v785, 64
          %v792 = vpop.permute.xlu0 %791
          %v795 = vadd.f32 %v759, %v790
          %v796 = vadd.f32 %v760, %v792
          %vm797 = vcmask 1048064
          %798 = vst.msk [vmem:[#allocation4] sm:$0xff] %vm797, %v795
          %799 = vst.msk [vmem:[#allocation4 + $0x8] sm:$0xff] %vm797, %v796
          %800 = vst.msk [vmem:[%s699] sm:$0xff] %vm612, %v708
          %801 = vst.msk [vmem:[%s699 + $0x8] sm:$0xff] %vm612, %v709
        $region167: #{gpt2_lm_head_forward.12} parent=146 // pred_fallthru
          _
        // Predicated region
        $region168: #{gpt2_lm_head_forward.12} parent=146 // pred_check
          %p802 = pneg %p488
        $region169: #{gpt2_lm_head_forward.12} parent=146 // pred_check_branch
          %804 = sbr.rel (%p802) target = $region171
        $region170: #{gpt2_lm_head_forward.12} parent=146 // pred_region
          %v805 = vld [vmem:[#allocation4] sm:$0xff]
          %v806 = vld [vmem:[#allocation4 + $0x8] sm:$0xff]
          %v807 = vld [vmem:[#allocation3] sm:$0xff]
          %v808 = vld [vmem:[#allocation3 + $0x8] sm:$0xff]
          %v809 = vrcp.pop %v807
          %v810 = vmul.f32 %v807, %v809
          %v811 = vsub.f32 1.0, %v810
          %v812 = vmul.f32 %v809, %v811
          %v813 = vadd.f32 %v809, %v812
          %vm814 = vweird.f32 %v807
          %vm815 = vweird.f32 %v809
          %vm816 = vmor %vm814, %vm815
          %v817 = vsel %vm816, %v809, %v813
          %v818 = vand.u32 2147483647, %v807
          %vm819 = vcmp.eq.f32.partialorder %v818, 8.507059e+37
          %v820 = vand.u32 %v807, 2147483648
          %v821 = vor.u32 1.1754944e-38, %v820
          %v822 = vsel %vm819, %v821, %v817
          %v823 = vrcp.pop %v808
          %v824 = vmul.f32 %v808, %v823
          %v825 = vsub.f32 1.0, %v824
          %v826 = vmul.f32 %v823, %v825
          %v827 = vadd.f32 %v823, %v826
          %vm828 = vweird.f32 %v808
          %vm829 = vweird.f32 %v823
          %vm830 = vmor %vm828, %vm829
          %v831 = vsel %vm830, %v823, %v827
          %v832 = vand.u32 2147483647, %v808
          %vm833 = vcmp.eq.f32.partialorder %v832, 8.507059e+37
          %v834 = vand.u32 %v808, 2147483648
          %v835 = vor.u32 1.1754944e-38, %v834
          %v836 = vsel %vm833, %v835, %v831
          %838 = vset.pattern.permute.xlu0 0
          %839 = vperm.xlu0 %838, %v822
          %v840 = vpop.permute.xlu0 %839
          %843 = vset.pattern.permute.xlu0 0
          %844 = vperm.xlu0 %843, %v836
          %v845 = vpop.permute.xlu0 %844
          %v847 = vmul.f32 %v805, %v840
          %v848 = vmul.f32 %v806, %v845
          %vm849 = vcmask 523264
          %850 = vst.msk [vmem:[#allocation4] sm:$0xff] %vm849, %v847
          %851 = vst.msk [vmem:[#allocation4 + $0x8] sm:$0xff] %vm849, %v848
          %v852 = vld [vmem:[#allocation4] sm:$0xff]
          %v853 = vld [vmem:[#allocation4 + $0x8] sm:$0xff]
          %s854 = scalar_lea.vmem [#allocation3], 16
          %v855 = vld [vmem:[%s854] sm:$0xff]
          %v856 = vld [vmem:[%s854 + $0x8] sm:$0xff]
          %v857 = vrcp.pop %v855
          %v858 = vmul.f32 %v855, %v857
          %v859 = vsub.f32 1.0, %v858
          %v860 = vmul.f32 %v857, %v859
          %v861 = vadd.f32 %v857, %v860
          %vm862 = vweird.f32 %v855
          %vm863 = vweird.f32 %v857
          %vm864 = vmor %vm862, %vm863
          %v865 = vsel %vm864, %v857, %v861
          %v866 = vand.u32 2147483647, %v855
          %vm867 = vcmp.eq.f32.partialorder %v866, 8.507059e+37
          %v868 = vand.u32 %v855, 2147483648
          %v869 = vor.u32 1.1754944e-38, %v868
          %v870 = vsel %vm867, %v869, %v865
          %v871 = vrcp.pop %v856
          %v872 = vmul.f32 %v856, %v871
          %v873 = vsub.f32 1.0, %v872
          %v874 = vmul.f32 %v871, %v873
          %v875 = vadd.f32 %v871, %v874
          %vm876 = vweird.f32 %v856
          %vm877 = vweird.f32 %v871
          %vm878 = vmor %vm876, %vm877
          %v879 = vsel %vm878, %v871, %v875
          %v880 = vand.u32 2147483647, %v856
          %vm881 = vcmp.eq.f32.partialorder %v880, 8.507059e+37
          %v882 = vand.u32 %v856, 2147483648
          %v883 = vor.u32 1.1754944e-38, %v882
          %v884 = vsel %vm881, %v883, %v879
          %886 = vset.pattern.permute.xlu0 0
          %887 = vperm.xlu0 %886, %v870
          %v888 = vpop.permute.xlu0 %887
          %891 = vset.pattern.permute.xlu0 0
          %892 = vperm.xlu0 %891, %v884
          %v893 = vpop.permute.xlu0 %892
          %v895 = vmul.f32 %v852, %v888
          %v896 = vmul.f32 %v853, %v893
          %vm897 = vcmask 1048064
          %898 = vst.msk [vmem:[#allocation4] sm:$0xff] %vm897, %v895
          %899 = vst.msk [vmem:[#allocation4 + $0x8] sm:$0xff] %vm897, %v896
          %v900 = vld [vmem:[#allocation4] sm:$0xff]
          %v901 = vld [vmem:[#allocation4 + $0x8] sm:$0xff]
          %v902 = vpack.c.bf16 %v900, %v900
          %v903 = vpack.c.bf16 %v901, %v901
          %904 = vst [vmem:[%s485] sm:$0xf] %v902
          %905 = vst [vmem:[%s485 + $0x4] sm:$0xf] %v903
        $region171: #{gpt2_lm_head_forward.12} parent=146 // pred_fallthru
          _
        %s906 = smul.u32 2, %s21
        %p907 = scmp.lt.s32.totalorder %s20, 1
        %s908 = scalar_select %p907, %s20, 1
        %p909 = scmp.lt.s32.totalorder %s906, 1
        %s910 = scalar_select %p909, %s906, 1
        %s911 = smul.addr %s908, 2
        %s912 = sadd.s32 %s910, %s911
        %s913 = smul.addr %s912, 4
        %s914 = scalar_lea.vmem %s4, %s913
        // Predicated region
        $region172: #{gpt2_lm_head_forward.12} parent=146 // pred_check
          %p915 = pneg %p178
        $region173: #{gpt2_lm_head_forward.12} parent=146 // pred_check_branch
          %917 = sbr.rel (%p915) target = $region175
        $region174: #{gpt2_lm_head_forward.12} parent=146 // pred_region
          %s918 = smul.u32 2, %s21
        $region175: #{gpt2_lm_head_forward.12} parent=146 // pred_fallthru
          _
      $region147: #{gpt2_lm_head_forward.12} parent=5 // pred_fallthru
        _
      %p919 = scmp.le.s32.totalorder 2, %s10
      // Predicated region
      $region176: #{gpt2_lm_head_forward.12} parent=5 // pred_check
        %p920 = pneg %p919
      $region177: #{gpt2_lm_head_forward.12} parent=5 // pred_check_branch
        %922 = sbr.rel (%p920) target = $region179
      $region178: #{gpt2_lm_head_forward.12} parent=5 // pred_region
        %s923 = ssub.s32 %s10, 2
        // Predicated region
        $region180: #{gpt2_lm_head_forward.12} parent=178 // pred_check
          %p924 = pneg %p184
        $region181: #{gpt2_lm_head_forward.12} parent=178 // pred_check_branch
          %926 = sbr.rel (%p924) target = $region183
        $region182: #{gpt2_lm_head_forward.12} parent=178 // pred_region
          %s927 = smul.u32 2, %s24
          %p928 = scmp.lt.s32.totalorder %s23, 1
          %s929 = scalar_select %p928, %s23, 1
          %p930 = scmp.lt.s32.totalorder %s927, 1
          %s931 = scalar_select %p930, %s927, 1
          %s932 = smul.addr %s929, 2
          %s933 = sadd.s32 %s931, %s932
          %s934 = smul.addr %s933, 4
          %s935 = scalar_lea.vmem %s4, %s934
        $region183: #{gpt2_lm_head_forward.12} parent=178 // pred_fallthru
          _
      $region179: #{gpt2_lm_head_forward.12} parent=5 // pred_fallthru
        _
    $region6: #{gpt2_lm_head_forward.12} parent=1 // loop_footer
      %s14 = sadd.s32 1, %s10
    $region7: #{gpt2_lm_head_forward.12} parent=1 // loop_footer_branch
      %9 = sbr.rel target = $region3
    $region8: #{gpt2_lm_head_forward.12} parent=1 // loop_exit
      _

// kernel: gpt2_lm_head_forward.14
$region0: #{gpt2_lm_head_forward.14}
  #allocation0 [shape = 'u32[]', space=smem, size = 0x4, offset = 0x4, fixed_abs, tag = 'smem constant byte address 0x4 - core index']
  #allocation1 [shape = 'u32[72,128]{1,0:T(1,128)}', space=vmem, size = 0x9000, scoped, tag = 'internal scratch']
  %s0 = inlined_call_operand.vmem [shape: bf16[32,128], index: 0, kind: input, shape index: {}]
  %s1 = inlined_call_operand.vmem [shape: bf16[1,128], index: 1, kind: input, shape index: {}]
  %s2 = inlined_call_operand.vmem [shape: bf16[1,128], index: 2, kind: input, shape index: {}]
  %s3 = inlined_call_operand.vmem [shape: bf16[128,512], index: 3, kind: input, shape index: {}]
  %s4 = inlined_call_operand.vmem [shape: bf16[1,512], index: 4, kind: input, shape index: {}]
  %s5 = inlined_call_operand.vmem [shape: bf16[32,512], index: 5, kind: output, shape index: {}]
  %s6 = sld [smem:[#allocation0]]
  $region30: #{gpt2_lm_head_forward.14} parent=0
    _
  %s8 = ssub.s32 1, %s6
  %s9 = scalar_select 0, %s8, %s6
  // Predicated region
  $region2: #{gpt2_lm_head_forward.14} parent=0 // pred_check
    _
  $region3: #{gpt2_lm_head_forward.14} parent=0 // pred_check_branch
    %11 = sbr.rel (0) target = $region5
  $region4: #{gpt2_lm_head_forward.14} parent=0 // pred_region
    _
  $region5: #{gpt2_lm_head_forward.14} parent=0 // pred_fallthru
    _
  // Predicated region
  $region6: #{gpt2_lm_head_forward.14} parent=0 // pred_check
    _
  $region7: #{gpt2_lm_head_forward.14} parent=0 // pred_check_branch
    %13 = sbr.rel (0) target = $region9
  $region8: #{gpt2_lm_head_forward.14} parent=0 // pred_region
    _
  $region9: #{gpt2_lm_head_forward.14} parent=0 // pred_fallthru
    _
  // Predicated region
  $region10: #{gpt2_lm_head_forward.14} parent=0 // pred_check
    _
  $region11: #{gpt2_lm_head_forward.14} parent=0 // pred_check_branch
    %15 = sbr.rel (0) target = $region13
  $region12: #{gpt2_lm_head_forward.14} parent=0 // pred_region
    _
  $region13: #{gpt2_lm_head_forward.14} parent=0 // pred_fallthru
    _
  // Predicated region
  $region14: #{gpt2_lm_head_forward.14} parent=0 // pred_check
    _
  $region15: #{gpt2_lm_head_forward.14} parent=0 // pred_check_branch
    %17 = sbr.rel (0) target = $region17
  $region16: #{gpt2_lm_head_forward.14} parent=0 // pred_region
    _
  $region17: #{gpt2_lm_head_forward.14} parent=0 // pred_fallthru
    _
  // Predicated region
  $region18: #{gpt2_lm_head_forward.14} parent=0 // pred_check
    _
  $region19: #{gpt2_lm_head_forward.14} parent=0 // pred_check_branch
    %19 = sbr.rel (0) target = $region21
  $region20: #{gpt2_lm_head_forward.14} parent=0 // pred_region
    _
  $region21: #{gpt2_lm_head_forward.14} parent=0 // pred_fallthru
    _
  %v20 = vld [vmem:[%s0] sm:$0xf]
  %v21 = vld [vmem:[%s0 + $0x4] sm:$0xf]
  %v22 = vld [vmem:[%s0 + $0x8] sm:$0xf]
  %v23 = vld [vmem:[%s0 + $0xc] sm:$0xf]
  %v24 = vunpack.c.l.bf16 %v20
  %v25 = vunpack.c.l.bf16 %v21
  %v26 = vunpack.c.l.bf16 %v22
  %v27 = vunpack.c.l.bf16 %v23
  %28 = vadd.xlane.f32.xlu0 %v24
  %v29 = vpop.xlane.xlu0 %28
  %30 = vadd.xlane.f32.xlu0 %v25
  %v31 = vpop.xlane.xlu0 %30
  %32 = vadd.xlane.f32.xlu0 %v26
  %v33 = vpop.xlane.xlu0 %32
  %34 = vadd.xlane.f32.xlu0 %v27
  %v35 = vpop.xlane.xlu0 %34
  %v36 = vrcp.pop 128.0
  %v37 = vmul.f32 128.0, %v36
  %v38 = vsub.f32 1.0, %v37
  %v39 = vmul.f32 %v36, %v38
  %v40 = vadd.f32 %v36, %v39
  %vm41 = vweird.f32 %v36
  %v42 = vsel %vm41, %v36, %v40
  %v43 = vmul.f32 %v29, %v42
  %v44 = vmul.f32 %v31, %v42
  %v45 = vmul.f32 %v33, %v42
  %v46 = vmul.f32 %v35, %v42
  %v47 = vsub.f32 %v24, %v43
  %v48 = vsub.f32 %v25, %v44
  %v49 = vsub.f32 %v26, %v45
  %v50 = vsub.f32 %v27, %v46
  %v51 = vmul.f32 %v47, %v47
  %v52 = vmul.f32 %v48, %v48
  %v53 = vmul.f32 %v49, %v49
  %v54 = vmul.f32 %v50, %v50
  %55 = vadd.xlane.f32.xlu0 %v51
  %v56 = vpop.xlane.xlu0 %55
  %57 = vadd.xlane.f32.xlu0 %v52
  %v58 = vpop.xlane.xlu0 %57
  %59 = vadd.xlane.f32.xlu0 %v53
  %v60 = vpop.xlane.xlu0 %59
  %61 = vadd.xlane.f32.xlu0 %v54
  %v62 = vpop.xlane.xlu0 %61
  %v63 = vmul.f32 %v56, %v42
  %v64 = vmul.f32 %v58, %v42
  %v65 = vmul.f32 %v60, %v42
  %v66 = vmul.f32 %v62, %v42
  %v67 = vadd.f32 %v63, 1e-05
  %v68 = vadd.f32 %v64, 1e-05
  %v69 = vadd.f32 %v65, 1e-05
  %v70 = vadd.f32 %v66, 1e-05
  %v71 = vrsqrt.pop %v67
  %v72 = vmul.f32 %v71, %v67
  %v73 = vmul.f32 %v72, %v71
  %v74 = vmul.f32 0.5, %v73
  %v75 = vsub.f32 1.5, %v74
  %v76 = vmul.f32 %v71, %v75
  %vm77 = vweird.f32 %v67
  %vm78 = vweird.f32 %v71
  %vm79 = vmor %vm77, %vm78
  %v80 = vsel %vm79, %v71, %v76
  %v81 = vrsqrt.pop %v68
  %v82 = vmul.f32 %v81, %v68
  %v83 = vmul.f32 %v82, %v81
  %v84 = vmul.f32 0.5, %v83
  %v85 = vsub.f32 1.5, %v84
  %v86 = vmul.f32 %v81, %v85
  %vm87 = vweird.f32 %v68
  %vm88 = vweird.f32 %v81
  %vm89 = vmor %vm87, %vm88
  %v90 = vsel %vm89, %v81, %v86
  %v91 = vrsqrt.pop %v69
  %v92 = vmul.f32 %v91, %v69
  %v93 = vmul.f32 %v92, %v91
  %v94 = vmul.f32 0.5, %v93
  %v95 = vsub.f32 1.5, %v94
  %v96 = vmul.f32 %v91, %v95
  %vm97 = vweird.f32 %v69
  %vm98 = vweird.f32 %v91
  %vm99 = vmor %vm97, %vm98
  %v100 = vsel %vm99, %v91, %v96
  %v101 = vrsqrt.pop %v70
  %v102 = vmul.f32 %v101, %v70
  %v103 = vmul.f32 %v102, %v101
  %v104 = vmul.f32 0.5, %v103
  %v105 = vsub.f32 1.5, %v104
  %v106 = vmul.f32 %v101, %v105
  %vm107 = vweird.f32 %v70
  %vm108 = vweird.f32 %v101
  %vm109 = vmor %vm107, %vm108
  %v110 = vsel %vm109, %v101, %v106
  %v111 = vmul.f32 %v47, %v80
  %v112 = vmul.f32 %v48, %v90
  %v113 = vmul.f32 %v49, %v100
  %v114 = vmul.f32 %v50, %v110
  %v115 = vld [vmem:[%s1] sm:$0x1]
  %v116 = vunpack.c.l.bf16 %v115
  %v117 = vperm.slane %v116, 0
  %v118 = vmul.f32 %v111, %v117
  %v119 = vmul.f32 %v112, %v117
  %v120 = vmul.f32 %v113, %v117
  %v121 = vmul.f32 %v114, %v117
  %v122 = vld [vmem:[%s2] sm:$0x1]
  %v123 = vunpack.c.l.bf16 %v122
  %v124 = vperm.slane %v123, 0
  %v125 = vadd.f32 %v118, %v124
  %v126 = vadd.f32 %v119, %v124
  %v127 = vadd.f32 %v120, %v124
  %v128 = vadd.f32 %v121, %v124
  %v129 = vpack.c.bf16 %v126, %v125
  %v130 = vpack.c.bf16 %v128, %v127
  %v131 = vld [vmem:[%s3] sm:$0xff]
  %v132 = vld [vmem:[%s3 + $0x8] sm:$0xff]
  %v133 = vld [vmem:[%s3 + $0x10] sm:$0xff]
  %v134 = vld [vmem:[%s3 + $0x18] sm:$0xff]
  %v135 = vld [vmem:[%s3 + $0x20] sm:$0xff]
  %v136 = vld [vmem:[%s3 + $0x28] sm:$0xff]
  %v137 = vld [vmem:[%s3 + $0x30] sm:$0xff]
  %v138 = vld [vmem:[%s3 + $0x38] sm:$0xff]
  %v139 = vld [vmem:[%s3 + $0x40] sm:$0xff]
  %v140 = vld [vmem:[%s3 + $0x48] sm:$0xff]
  %v141 = vld [vmem:[%s3 + $0x50] sm:$0xff]
  %v142 = vld [vmem:[%s3 + $0x58] sm:$0xff]
  %v143 = vld [vmem:[%s3 + $0x60] sm:$0xff]
  %v144 = vld [vmem:[%s3 + $0x68] sm:$0xff]
  %v145 = vld [vmem:[%s3 + $0x70] sm:$0xff]
  %v146 = vld [vmem:[%s3 + $0x78] sm:$0xff]
  %v147 = vld [vmem:[%s3 + $0x80] sm:$0xff]
  %v148 = vld [vmem:[%s3 + $0x88] sm:$0xff]
  %v149 = vld [vmem:[%s3 + $0x90] sm:$0xff]
  %v150 = vld [vmem:[%s3 + $0x98] sm:$0xff]
  %v151 = vld [vmem:[%s3 + $0xa0] sm:$0xff]
  %v152 = vld [vmem:[%s3 + $0xa8] sm:$0xff]
  %v153 = vld [vmem:[%s3 + $0xb0] sm:$0xff]
  %v154 = vld [vmem:[%s3 + $0xb8] sm:$0xff]
  %v155 = vld [vmem:[%s3 + $0xc0] sm:$0xff]
  %v156 = vld [vmem:[%s3 + $0xc8] sm:$0xff]
  %v157 = vld [vmem:[%s3 + $0xd0] sm:$0xff]
  %v158 = vld [vmem:[%s3 + $0xd8] sm:$0xff]
  %v159 = vld [vmem:[%s3 + $0xe0] sm:$0xff]
  %v160 = vld [vmem:[%s3 + $0xe8] sm:$0xff]
  %v161 = vld [vmem:[%s3 + $0xf0] sm:$0xff]
  %v162 = vld [vmem:[%s3 + $0xf8] sm:$0xff]
  %v163 = vld [vmem:[%s4] sm:$0xf]
  %v164 = vunpack.c.l.bf16 %v163
  %v166 = vperm.slane %v164, 0
  %v167 = vperm.slane %v164, 2
  %v168 = vperm.slane %v164, 4
  %v169 = vperm.slane %v164, 6
  %v174 = vperm.slane %v166, 0
  %v175 = vperm.slane %v167, 0
  %v176 = vperm.slane %v168, 0
  %v177 = vperm.slane %v169, 0
  %v210 = vunpack.c.l.b16 %v131
  %v211 = vunpack.c.h.b16 %v131
  %v212 = vunpack.c.l.b16 %v132
  %v213 = vunpack.c.h.b16 %v132
  %v214 = vunpack.c.l.b16 %v133
  %v215 = vunpack.c.h.b16 %v133
  %v216 = vunpack.c.l.b16 %v134
  %v217 = vunpack.c.h.b16 %v134
  %v218 = vunpack.c.l.b16 %v135
  %v219 = vunpack.c.h.b16 %v135
  %v220 = vunpack.c.l.b16 %v136
  %v221 = vunpack.c.h.b16 %v136
  %v222 = vunpack.c.l.b16 %v137
  %v223 = vunpack.c.h.b16 %v137
  %v224 = vunpack.c.l.b16 %v138
  %v225 = vunpack.c.h.b16 %v138
  %v226 = vunpack.c.l.b16 %v139
  %v227 = vunpack.c.h.b16 %v139
  %v228 = vunpack.c.l.b16 %v140
  %v229 = vunpack.c.h.b16 %v140
  %v230 = vunpack.c.l.b16 %v141
  %v231 = vunpack.c.h.b16 %v141
  %v232 = vunpack.c.l.b16 %v142
  %v233 = vunpack.c.h.b16 %v142
  %v234 = vunpack.c.l.b16 %v143
  %v235 = vunpack.c.h.b16 %v143
  %v236 = vunpack.c.l.b16 %v144
  %v237 = vunpack.c.h.b16 %v144
  %v238 = vunpack.c.l.b16 %v145
  %v239 = vunpack.c.h.b16 %v145
  %v240 = vunpack.c.l.b16 %v146
  %v241 = vunpack.c.h.b16 %v146
  %v242 = vunpack.c.l.b16 %v147
  %v243 = vunpack.c.h.b16 %v147
  %v244 = vunpack.c.l.b16 %v148
  %v245 = vunpack.c.h.b16 %v148
  %v246 = vunpack.c.l.b16 %v149
  %v247 = vunpack.c.h.b16 %v149
  %v248 = vunpack.c.l.b16 %v150
  %v249 = vunpack.c.h.b16 %v150
  %v250 = vunpack.c.l.b16 %v151
  %v251 = vunpack.c.h.b16 %v151
  %v252 = vunpack.c.l.b16 %v152
  %v253 = vunpack.c.h.b16 %v152
  %v254 = vunpack.c.l.b16 %v153
  %v255 = vunpack.c.h.b16 %v153
  %v256 = vunpack.c.l.b16 %v154
  %v257 = vunpack.c.h.b16 %v154
  %v258 = vunpack.c.l.b16 %v155
  %v259 = vunpack.c.h.b16 %v155
  %v260 = vunpack.c.l.b16 %v156
  %v261 = vunpack.c.h.b16 %v156
  %v262 = vunpack.c.l.b16 %v157
  %v263 = vunpack.c.h.b16 %v157
  %v264 = vunpack.c.l.b16 %v158
  %v265 = vunpack.c.h.b16 %v158
  %v266 = vunpack.c.l.b16 %v159
  %v267 = vunpack.c.h.b16 %v159
  %v268 = vunpack.c.l.b16 %v160
  %v269 = vunpack.c.h.b16 %v160
  %v270 = vunpack.c.l.b16 %v161
  %v271 = vunpack.c.h.b16 %v161
  %v272 = vunpack.c.l.b16 %v162
  %v273 = vunpack.c.h.b16 %v162
  %v274 = vpack.c.b16 %v214, %v210
  %v275 = vpack.c.b16 %v215, %v211
  %v276 = vpack.c.b16 %v216, %v212
  %v277 = vpack.c.b16 %v217, %v213
  %v278 = vpack.c.b16 %v222, %v218
  %v279 = vpack.c.b16 %v223, %v219
  %v280 = vpack.c.b16 %v224, %v220
  %v281 = vpack.c.b16 %v225, %v221
  %v282 = vpack.c.b16 %v230, %v226
  %v283 = vpack.c.b16 %v231, %v227
  %v284 = vpack.c.b16 %v232, %v228
  %v285 = vpack.c.b16 %v233, %v229
  %v286 = vpack.c.b16 %v238, %v234
  %v287 = vpack.c.b16 %v239, %v235
  %v288 = vpack.c.b16 %v240, %v236
  %v289 = vpack.c.b16 %v241, %v237
  %v290 = vpack.c.b16 %v246, %v242
  %v291 = vpack.c.b16 %v247, %v243
  %v292 = vpack.c.b16 %v248, %v244
  %v293 = vpack.c.b16 %v249, %v245
  %v294 = vpack.c.b16 %v254, %v250
  %v295 = vpack.c.b16 %v255, %v251
  %v296 = vpack.c.b16 %v256, %v252
  %v297 = vpack.c.b16 %v257, %v253
  %v298 = vpack.c.b16 %v262, %v258
  %v299 = vpack.c.b16 %v263, %v259
  %v300 = vpack.c.b16 %v264, %v260
  %v301 = vpack.c.b16 %v265, %v261
  %v302 = vpack.c.b16 %v270, %v266
  %v303 = vpack.c.b16 %v271, %v267
  %v304 = vpack.c.b16 %v272, %v268
  %v305 = vpack.c.b16 %v273, %v269
  %338 = vmatpush.bf16.msra.mxu0 %v302
  %339 = vmatpush.bf16.msra.mxu0 %v298
  %340 = vmatpush.bf16.msra.mxu0 %v294
  %341 = vmatpush.bf16.msra.mxu0 %v290
  %342 = vmatpush.bf16.msra.mxu0 %v286
  %343 = vmatpush.bf16.msra.mxu0 %v282
  %344 = vmatpush.bf16.msra.mxu0 %v278
  %345 = vmatpush.bf16.msra.mxu0 %v274
  %346 = vmatmul.bf16.gmra.mxu0 %v129
  %v347 = vpop.f32.mrf.mxu0
  %v348 = vadd.f32 %v174, %v347
  %v349 = vpop.f32.mrf.mxu0
  %v350 = vadd.f32 %v174, %v349
  %351 = vmatmul.bf16.gmra.mxu0 %v130
  %v352 = vpop.f32.mrf.mxu0
  %v353 = vadd.f32 %v174, %v352
  %v354 = vpop.f32.mrf.mxu0
  %v355 = vadd.f32 %v174, %v354
  %356 = vdwg.mxu0
  %357 = vmatpush.bf16.msra.mxu0 %v303
  %358 = vmatpush.bf16.msra.mxu0 %v299
  %359 = vmatpush.bf16.msra.mxu0 %v295
  %360 = vmatpush.bf16.msra.mxu0 %v291
  %361 = vmatpush.bf16.msra.mxu0 %v287
  %362 = vmatpush.bf16.msra.mxu0 %v283
  %363 = vmatpush.bf16.msra.mxu0 %v279
  %364 = vmatpush.bf16.msra.mxu0 %v275
  %365 = vmatmul.bf16.gmra.mxu0 %v129
  %v366 = vpop.f32.mrf.mxu0
  %v367 = vadd.f32 %v175, %v366
  %v368 = vpop.f32.mrf.mxu0
  %v369 = vadd.f32 %v175, %v368
  %370 = vmatmul.bf16.gmra.mxu0 %v130
  %v371 = vpop.f32.mrf.mxu0
  %v372 = vadd.f32 %v175, %v371
  %v373 = vpop.f32.mrf.mxu0
  %v374 = vadd.f32 %v175, %v373
  %375 = vdwg.mxu0
  %376 = vmatpush.bf16.msra.mxu0 %v304
  %377 = vmatpush.bf16.msra.mxu0 %v300
  %378 = vmatpush.bf16.msra.mxu0 %v296
  %379 = vmatpush.bf16.msra.mxu0 %v292
  %380 = vmatpush.bf16.msra.mxu0 %v288
  %381 = vmatpush.bf16.msra.mxu0 %v284
  %382 = vmatpush.bf16.msra.mxu0 %v280
  %383 = vmatpush.bf16.msra.mxu0 %v276
  %384 = vmatmul.bf16.gmra.mxu0 %v129
  %v385 = vpop.f32.mrf.mxu0
  %v386 = vadd.f32 %v176, %v385
  %v387 = vpop.f32.mrf.mxu0
  %v388 = vadd.f32 %v176, %v387
  %389 = vmatmul.bf16.gmra.mxu0 %v130
  %v390 = vpop.f32.mrf.mxu0
  %v391 = vadd.f32 %v176, %v390
  %v392 = vpop.f32.mrf.mxu0
  %v393 = vadd.f32 %v176, %v392
  %394 = vdwg.mxu0
  %395 = vmatpush.bf16.msra.mxu0 %v305
  %396 = vmatpush.bf16.msra.mxu0 %v301
  %397 = vmatpush.bf16.msra.mxu0 %v297
  %398 = vmatpush.bf16.msra.mxu0 %v293
  %399 = vmatpush.bf16.msra.mxu0 %v289
  %400 = vmatpush.bf16.msra.mxu0 %v285
  %401 = vmatpush.bf16.msra.mxu0 %v281
  %402 = vmatpush.bf16.msra.mxu0 %v277
  %403 = vmatmul.bf16.gmra.mxu0 %v129
  %v404 = vpop.f32.mrf.mxu0
  %v405 = vadd.f32 %v177, %v404
  %v406 = vpop.f32.mrf.mxu0
  %v407 = vadd.f32 %v177, %v406
  %408 = vmatmul.bf16.gmra.mxu0 %v130
  %v409 = vpop.f32.mrf.mxu0
  %v410 = vadd.f32 %v177, %v409
  %v411 = vpop.f32.mrf.mxu0
  %v412 = vadd.f32 %v177, %v411
  %413 = vdwg.mxu0
  %v414 = vmul.f32 %v348, 0.5
  %v415 = vmul.f32 %v367, 0.5
  %v416 = vmul.f32 %v386, 0.5
  %v417 = vmul.f32 %v405, 0.5
  %v418 = vmul.f32 %v350, 0.5
  %v419 = vmul.f32 %v369, 0.5
  %v420 = vmul.f32 %v388, 0.5
  %v421 = vmul.f32 %v407, 0.5
  %v422 = vmul.f32 %v353, 0.5
  %v423 = vmul.f32 %v372, 0.5
  %v424 = vmul.f32 %v391, 0.5
  %v425 = vmul.f32 %v410, 0.5
  %v426 = vmul.f32 %v355, 0.5
  %v427 = vmul.f32 %v374, 0.5
  %v428 = vmul.f32 %v393, 0.5
  %v429 = vmul.f32 %v412, 0.5
  %v430 = vmul.f32 %v348, 0.044715
  %v431 = vmul.f32 %v367, 0.044715
  %v432 = vmul.f32 %v386, 0.044715
  %v433 = vmul.f32 %v405, 0.044715
  %v434 = vmul.f32 %v350, 0.044715
  %v435 = vmul.f32 %v369, 0.044715
  %v436 = vmul.f32 %v388, 0.044715
  %v437 = vmul.f32 %v407, 0.044715
  %v438 = vmul.f32 %v353, 0.044715
  %v439 = vmul.f32 %v372, 0.044715
  %v440 = vmul.f32 %v391, 0.044715
  %v441 = vmul.f32 %v410, 0.044715
  %v442 = vmul.f32 %v355, 0.044715
  %v443 = vmul.f32 %v374, 0.044715
  %v444 = vmul.f32 %v393, 0.044715
  %v445 = vmul.f32 %v412, 0.044715
  %v446 = vmul.f32 %v430, %v348
  %v447 = vmul.f32 %v431, %v367
  %v448 = vmul.f32 %v432, %v386
  %v449 = vmul.f32 %v433, %v405
  %v450 = vmul.f32 %v434, %v350
  %v451 = vmul.f32 %v435, %v369
  %v452 = vmul.f32 %v436, %v388
  %v453 = vmul.f32 %v437, %v407
  %v454 = vmul.f32 %v438, %v353
  %v455 = vmul.f32 %v439, %v372
  %v456 = vmul.f32 %v440, %v391
  %v457 = vmul.f32 %v441, %v410
  %v458 = vmul.f32 %v442, %v355
  %v459 = vmul.f32 %v443, %v374
  %v460 = vmul.f32 %v444, %v393
  %v461 = vmul.f32 %v445, %v412
  %v462 = vmul.f32 %v446, %v348
  %v463 = vmul.f32 %v447, %v367
  %v464 = vmul.f32 %v448, %v386
  %v465 = vmul.f32 %v449, %v405
  %v466 = vmul.f32 %v450, %v350
  %v467 = vmul.f32 %v451, %v369
  %v468 = vmul.f32 %v452, %v388
  %v469 = vmul.f32 %v453, %v407
  %v470 = vmul.f32 %v454, %v353
  %v471 = vmul.f32 %v455, %v372
  %v472 = vmul.f32 %v456, %v391
  %v473 = vmul.f32 %v457, %v410
  %v474 = vmul.f32 %v458, %v355
  %v475 = vmul.f32 %v459, %v374
  %v476 = vmul.f32 %v460, %v393
  %v477 = vmul.f32 %v461, %v412
  %v478 = vadd.f32 %v348, %v462
  %v479 = vadd.f32 %v367, %v463
  %v480 = vadd.f32 %v386, %v464
  %v481 = vadd.f32 %v405, %v465
  %v482 = vadd.f32 %v350, %v466
  %v483 = vadd.f32 %v369, %v467
  %v484 = vadd.f32 %v388, %v468
  %v485 = vadd.f32 %v407, %v469
  %v486 = vadd.f32 %v353, %v470
  %v487 = vadd.f32 %v372, %v471
  %v488 = vadd.f32 %v391, %v472
  %v489 = vadd.f32 %v410, %v473
  %v490 = vadd.f32 %v355, %v474
  %v491 = vadd.f32 %v374, %v475
  %v492 = vadd.f32 %v393, %v476
  %v493 = vadd.f32 %v412, %v477
  %v494 = vmul.f32 %v478, 0.7978846
  %v495 = vmul.f32 %v479, 0.7978846
  %v496 = vmul.f32 %v480, 0.7978846
  %v497 = vmul.f32 %v481, 0.7978846
  %v498 = vmul.f32 %v482, 0.7978846
  %v499 = vmul.f32 %v483, 0.7978846
  %v500 = vmul.f32 %v484, 0.7978846
  %v501 = vmul.f32 %v485, 0.7978846
  %v502 = vmul.f32 %v486, 0.7978846
  %v503 = vmul.f32 %v487, 0.7978846
  %v504 = vmul.f32 %v488, 0.7978846
  %v505 = vmul.f32 %v489, 0.7978846
  %v506 = vmul.f32 %v490, 0.7978846
  %v507 = vmul.f32 %v491, 0.7978846
  %v508 = vmul.f32 %v492, 0.7978846
  %v509 = vmul.f32 %v493, 0.7978846
  %v510 = vtanh.pop %v494
  %v511 = vtanh.pop %v495
  %v512 = vtanh.pop %v496
  %v513 = vtanh.pop %v497
  %v514 = vtanh.pop %v498
  %v515 = vtanh.pop %v499
  %v516 = vtanh.pop %v500
  %v517 = vtanh.pop %v501
  %v518 = vtanh.pop %v502
  %v519 = vtanh.pop %v503
  %v520 = vtanh.pop %v504
  %v521 = vtanh.pop %v505
  %v522 = vtanh.pop %v506
  %v523 = vtanh.pop %v507
  %v524 = vtanh.pop %v508
  %v525 = vtanh.pop %v509
  %v526 = vadd.f32 %v510, 1.0
  %v527 = vadd.f32 %v511, 1.0
  %v528 = vadd.f32 %v512, 1.0
  %v529 = vadd.f32 %v513, 1.0
  %v530 = vadd.f32 %v514, 1.0
  %v531 = vadd.f32 %v515, 1.0
  %v532 = vadd.f32 %v516, 1.0
  %v533 = vadd.f32 %v517, 1.0
  %v534 = vadd.f32 %v518, 1.0
  %v535 = vadd.f32 %v519, 1.0
  %v536 = vadd.f32 %v520, 1.0
  %v537 = vadd.f32 %v521, 1.0
  %v538 = vadd.f32 %v522, 1.0
  %v539 = vadd.f32 %v523, 1.0
  %v540 = vadd.f32 %v524, 1.0
  %v541 = vadd.f32 %v525, 1.0
  %v542 = vmul.f32 %v414, %v526
  %v543 = vmul.f32 %v415, %v527
  %v544 = vmul.f32 %v416, %v528
  %v545 = vmul.f32 %v417, %v529
  %v546 = vmul.f32 %v418, %v530
  %v547 = vmul.f32 %v419, %v531
  %v548 = vmul.f32 %v420, %v532
  %v549 = vmul.f32 %v421, %v533
  %v550 = vmul.f32 %v422, %v534
  %v551 = vmul.f32 %v423, %v535
  %v552 = vmul.f32 %v424, %v536
  %v553 = vmul.f32 %v425, %v537
  %v554 = vmul.f32 %v426, %v538
  %v555 = vmul.f32 %v427, %v539
  %v556 = vmul.f32 %v428, %v540
  %v557 = vmul.f32 %v429, %v541
  %v558 = vpack.c.bf16 %v543, %v542
  %v559 = vpack.c.bf16 %v545, %v544
  %v560 = vpack.c.bf16 %v547, %v546
  %v561 = vpack.c.bf16 %v549, %v548
  %v562 = vpack.c.bf16 %v551, %v550
  %v563 = vpack.c.bf16 %v553, %v552
  %v564 = vpack.c.bf16 %v555, %v554
  %v565 = vpack.c.bf16 %v557, %v556
  %566 = vst [vmem:[%s5] sm:$0xff] %v558
  %567 = vst [vmem:[%s5 + $0x8] sm:$0xff] %v559
  %568 = vst [vmem:[%s5 + $0x10] sm:$0xff] %v560
  %569 = vst [vmem:[%s5 + $0x18] sm:$0xff] %v561
  %570 = vst [vmem:[%s5 + $0x20] sm:$0xff] %v562
  %571 = vst [vmem:[%s5 + $0x28] sm:$0xff] %v563
  %572 = vst [vmem:[%s5 + $0x30] sm:$0xff] %v564
  %573 = vst [vmem:[%s5 + $0x38] sm:$0xff] %v565
  // Predicated region
  $region22: #{gpt2_lm_head_forward.14} parent=0 // pred_check
    _
  $region23: #{gpt2_lm_head_forward.14} parent=0 // pred_check_branch
    %575 = sbr.rel (0) target = $region25
  $region24: #{gpt2_lm_head_forward.14} parent=0 // pred_region
    _
  $region25: #{gpt2_lm_head_forward.14} parent=0 // pred_fallthru
    _
  // Predicated region
  $region26: #{gpt2_lm_head_forward.14} parent=0 // pred_check
    _
  $region27: #{gpt2_lm_head_forward.14} parent=0 // pred_check_branch
    %577 = sbr.rel (0) target = $region29
  $region28: #{gpt2_lm_head_forward.14} parent=0 // pred_region
    _
  $region29: #{gpt2_lm_head_forward.14} parent=0 // pred_fallthru
    _

// kernel: gpt2_lm_head_forward.15
$region0: #{gpt2_lm_head_forward.15}
  #allocation0 [shape = 'u32[]', space=smem, size = 0x4, offset = 0x4, fixed_abs, tag = 'smem constant byte address 0x4 - core index']
  #allocation1 [shape = 'u32[72,128]{1,0:T(1,128)}', space=vmem, size = 0x9000, scoped, tag = 'internal scratch']
  %s0 = inlined_call_operand.vmem [shape: bf16[32,512], index: 0, kind: input, shape index: {}]
  %s1 = inlined_call_operand.hbm [shape: bf16[512,128], index: 1, kind: input, shape index: {}]
  %s2 = inlined_call_operand.hbm [shape: bf16[1,128], index: 2, kind: input, shape index: {}]
  %s3 = inlined_call_operand.vmem [shape: bf16[32,128], index: 3, kind: input, shape index: {}]
  %s4 = inlined_call_operand.vmem [shape: bf16[32,128], index: 4, kind: output, shape index: {}]
  %s5 = sld [smem:[#allocation0]]
  $region34: #{gpt2_lm_head_forward.15} parent=0
    _
  %s7 = ssub.s32 1, %s5
  %s8 = scalar_select 0, %s7, %s5
  $region1: #{gpt2_lm_head_forward.15} parent=0
    #allocation2 [shape = 'u8[131072]{0}', space=vmem, size = 0x20000, scoped, tag = 'input window, operand 1, single buffered']
    #allocation3 [shape = 's32[1]{0}', space=sflag, size = 0x4, scoped, tag = 'scoped memory for gpt2_lm_head_forward.15']
    #allocation4 [shape = 'u8[512]{0}', space=vmem, size = 0x400, scoped, tag = 'input window, operand 2, single buffered']
    #allocation5 [shape = 's32[1]{0}', space=sflag, size = 0x4, scoped, tag = 'scoped memory for gpt2_lm_head_forward.15']
    %9 = vsyncpa [#allocation3], 0
    %10 = vsyncpa [#allocation5], 0
    // Predicated region
    $region2: #{gpt2_lm_head_forward.15} parent=1 // pred_check
      _
    $region3: #{gpt2_lm_head_forward.15} parent=1 // pred_check_branch
      %12 = sbr.rel (0) target = $region5
    $region4: #{gpt2_lm_head_forward.15} parent=1 // pred_region
      _
    $region5: #{gpt2_lm_head_forward.15} parent=1 // pred_fallthru
      _
    // Predicated region
    $region6: #{gpt2_lm_head_forward.15} parent=1 // pred_check
      _
    $region7: #{gpt2_lm_head_forward.15} parent=1 // pred_check_branch
      %14 = sbr.rel (0) target = $region9
    $region8: #{gpt2_lm_head_forward.15} parent=1 // pred_region
      %16 = vsyncadd [#allocation3], 0
      %s17 = sshll.u32 %s1, 4
      %s18 = int_to_ptr.hbm [resolvable:$true] %s17
      %s19 = sshll.u32 [#allocation2], 4
      %s20 = int_to_ptr.vmem [resolvable:$true] %s19
      %25 = dma.hbm_to_vmem [thread:$0]  %s18, 4096, %s20, [#allocation3], 64, 64, 4
    $region9: #{gpt2_lm_head_forward.15} parent=1 // pred_fallthru
      _
    // Predicated region
    $region10: #{gpt2_lm_head_forward.15} parent=1 // pred_check
      _
    $region11: #{gpt2_lm_head_forward.15} parent=1 // pred_check_branch
      %27 = sbr.rel (0) target = $region13
    $region12: #{gpt2_lm_head_forward.15} parent=1 // pred_region
      %29 = vsyncadd [#allocation5], 0
      %s31 = sshll.u32 %s2, 4
      %s32 = int_to_ptr.hbm [resolvable:$true] %s31
      %s33 = sshll.u32 [#allocation4], 4
      %s34 = int_to_ptr.vmem [resolvable:$true] %s33
      %36 = dma.hbm_to_vmem [thread:$0]  %s32, 16, %s34, [#allocation5]
    $region13: #{gpt2_lm_head_forward.15} parent=1 // pred_fallthru
      _
    // Predicated region
    $region14: #{gpt2_lm_head_forward.15} parent=1 // pred_check
      _
    $region15: #{gpt2_lm_head_forward.15} parent=1 // pred_check_branch
      %38 = sbr.rel (0) target = $region17
    $region16: #{gpt2_lm_head_forward.15} parent=1 // pred_region
      _
    $region17: #{gpt2_lm_head_forward.15} parent=1 // pred_fallthru
      _
    // Predicated region
    $region18: #{gpt2_lm_head_forward.15} parent=1 // pred_check
      _
    $region19: #{gpt2_lm_head_forward.15} parent=1 // pred_check_branch
      %40 = sbr.rel (0) target = $region21
    $region20: #{gpt2_lm_head_forward.15} parent=1 // pred_region
      %42 = dma.done [#allocation3], 4096
    $region21: #{gpt2_lm_head_forward.15} parent=1 // pred_fallthru
      _
    // Predicated region
    $region22: #{gpt2_lm_head_forward.15} parent=1 // pred_check
      _
    $region23: #{gpt2_lm_head_forward.15} parent=1 // pred_check_branch
      %44 = sbr.rel (0) target = $region25
    $region24: #{gpt2_lm_head_forward.15} parent=1 // pred_region
      %46 = dma.done [#allocation5], 16
    $region25: #{gpt2_lm_head_forward.15} parent=1 // pred_fallthru
      _
    %v47 = vld [vmem:[%s0] sm:$0xff]
    %v48 = vld [vmem:[%s0 + $0x8] sm:$0xff]
    %v49 = vld [vmem:[%s0 + $0x10] sm:$0xff]
    %v50 = vld [vmem:[%s0 + $0x18] sm:$0xff]
    %v51 = vld [vmem:[%s0 + $0x20] sm:$0xff]
    %v52 = vld [vmem:[%s0 + $0x28] sm:$0xff]
    %v53 = vld [vmem:[%s0 + $0x30] sm:$0xff]
    %v54 = vld [vmem:[%s0 + $0x38] sm:$0xff]
    %v55 = vld [vmem:[#allocation2] sm:$0xf]
    %v56 = vld [vmem:[#allocation2 + $0x4] sm:$0xf]
    %v57 = vld [vmem:[#allocation2 + $0x8] sm:$0xf]
    %v58 = vld [vmem:[#allocation2 + $0xc] sm:$0xf]
    %v59 = vld [vmem:[#allocation2 + $0x10] sm:$0xf]
    %v60 = vld [vmem:[#allocation2 + $0x14] sm:$0xf]
    %v61 = vld [vmem:[#allocation2 + $0x18] sm:$0xf]
    %v62 = vld [vmem:[#allocation2 + $0x1c] sm:$0xf]
    %v63 = vld [vmem:[#allocation2 + $0x20] sm:$0xf]
    %v64 = vld [vmem:[#allocation2 + $0x24] sm:$0xf]
    %v65 = vld [vmem:[#allocation2 + $0x28] sm:$0xf]
    %v66 = vld [vmem:[#allocation2 + $0x2c] sm:$0xf]
    %v67 = vld [vmem:[#allocation2 + $0x30] sm:$0xf]
    %v68 = vld [vmem:[#allocation2 + $0x34] sm:$0xf]
    %v69 = vld [vmem:[#allocation2 + $0x38] sm:$0xf]
    %v70 = vld [vmem:[#allocation2 + $0x3c] sm:$0xf]
    %v71 = vld [vmem:[#allocation2 + $0x40] sm:$0xf]
    %v72 = vld [vmem:[#allocation2 + $0x44] sm:$0xf]
    %v73 = vld [vmem:[#allocation2 + $0x48] sm:$0xf]
    %v74 = vld [vmem:[#allocation2 + $0x4c] sm:$0xf]
    %v75 = vld [vmem:[#allocation2 + $0x50] sm:$0xf]
    %v76 = vld [vmem:[#allocation2 + $0x54] sm:$0xf]
    %v77 = vld [vmem:[#allocation2 + $0x58] sm:$0xf]
    %v78 = vld [vmem:[#allocation2 + $0x5c] sm:$0xf]
    %v79 = vld [vmem:[#allocation2 + $0x60] sm:$0xf]
    %v80 = vld [vmem:[#allocation2 + $0x64] sm:$0xf]
    %v81 = vld [vmem:[#allocation2 + $0x68] sm:$0xf]
    %v82 = vld [vmem:[#allocation2 + $0x6c] sm:$0xf]
    %v83 = vld [vmem:[#allocation2 + $0x70] sm:$0xf]
    %v84 = vld [vmem:[#allocation2 + $0x74] sm:$0xf]
    %v85 = vld [vmem:[#allocation2 + $0x78] sm:$0xf]
    %v86 = vld [vmem:[#allocation2 + $0x7c] sm:$0xf]
    %v87 = vld [vmem:[#allocation2 + $0x80] sm:$0xf]
    %v88 = vld [vmem:[#allocation2 + $0x84] sm:$0xf]
    %v89 = vld [vmem:[#allocation2 + $0x88] sm:$0xf]
    %v90 = vld [vmem:[#allocation2 + $0x8c] sm:$0xf]
    %v91 = vld [vmem:[#allocation2 + $0x90] sm:$0xf]
    %v92 = vld [vmem:[#allocation2 + $0x94] sm:$0xf]
    %v93 = vld [vmem:[#allocation2 + $0x98] sm:$0xf]
    %v94 = vld [vmem:[#allocation2 + $0x9c] sm:$0xf]
    %v95 = vld [vmem:[#allocation2 + $0xa0] sm:$0xf]
    %v96 = vld [vmem:[#allocation2 + $0xa4] sm:$0xf]
    %v97 = vld [vmem:[#allocation2 + $0xa8] sm:$0xf]
    %v98 = vld [vmem:[#allocation2 + $0xac] sm:$0xf]
    %v99 = vld [vmem:[#allocation2 + $0xb0] sm:$0xf]
    %v100 = vld [vmem:[#allocation2 + $0xb4] sm:$0xf]
    %v101 = vld [vmem:[#allocation2 + $0xb8] sm:$0xf]
    %v102 = vld [vmem:[#allocation2 + $0xbc] sm:$0xf]
    %v103 = vld [vmem:[#allocation2 + $0xc0] sm:$0xf]
    %v104 = vld [vmem:[#allocation2 + $0xc4] sm:$0xf]
    %v105 = vld [vmem:[#allocation2 + $0xc8] sm:$0xf]
    %v106 = vld [vmem:[#allocation2 + $0xcc] sm:$0xf]
    %v107 = vld [vmem:[#allocation2 + $0xd0] sm:$0xf]
    %v108 = vld [vmem:[#allocation2 + $0xd4] sm:$0xf]
    %v109 = vld [vmem:[#allocation2 + $0xd8] sm:$0xf]
    %v110 = vld [vmem:[#allocation2 + $0xdc] sm:$0xf]
    %v111 = vld [vmem:[#allocation2 + $0xe0] sm:$0xf]
    %v112 = vld [vmem:[#allocation2 + $0xe4] sm:$0xf]
    %v113 = vld [vmem:[#allocation2 + $0xe8] sm:$0xf]
    %v114 = vld [vmem:[#allocation2 + $0xec] sm:$0xf]
    %v115 = vld [vmem:[#allocation2 + $0xf0] sm:$0xf]
    %v116 = vld [vmem:[#allocation2 + $0xf4] sm:$0xf]
    %v117 = vld [vmem:[#allocation2 + $0xf8] sm:$0xf]
    %v118 = vld [vmem:[#allocation2 + $0xfc] sm:$0xf]
    %v119 = vld [vmem:[#allocation4] sm:$0x1]
    %v120 = vunpack.c.l.bf16 %v119
    %v121 = vperm.slane %v120, 0
    %v130 = vunpack.c.l.b16 %v47
    %v131 = vunpack.c.h.b16 %v47
    %v132 = vunpack.c.l.b16 %v48
    %v133 = vunpack.c.h.b16 %v48
    %v134 = vunpack.c.l.b16 %v49
    %v135 = vunpack.c.h.b16 %v49
    %v136 = vunpack.c.l.b16 %v50
    %v137 = vunpack.c.h.b16 %v50
    %v138 = vunpack.c.l.b16 %v51
    %v139 = vunpack.c.h.b16 %v51
    %v140 = vunpack.c.l.b16 %v52
    %v141 = vunpack.c.h.b16 %v52
    %v142 = vunpack.c.l.b16 %v53
    %v143 = vunpack.c.h.b16 %v53
    %v144 = vunpack.c.l.b16 %v54
    %v145 = vunpack.c.h.b16 %v54
    %v146 = vpack.c.b16 %v134, %v130
    %v147 = vpack.c.b16 %v135, %v131
    %v148 = vpack.c.b16 %v136, %v132
    %v149 = vpack.c.b16 %v137, %v133
    %v150 = vpack.c.b16 %v142, %v138
    %v151 = vpack.c.b16 %v143, %v139
    %v152 = vpack.c.b16 %v144, %v140
    %v153 = vpack.c.b16 %v145, %v141
    %v226 = vunpack.c.l.b16 %v55
    %v227 = vunpack.c.l.b16 %v56
    %v228 = vunpack.c.l.b16 %v57
    %v229 = vunpack.c.l.b16 %v58
    %v230 = vunpack.c.l.b16 %v59
    %v231 = vunpack.c.l.b16 %v60
    %v232 = vunpack.c.l.b16 %v61
    %v233 = vunpack.c.l.b16 %v62
    %v234 = vunpack.c.l.b16 %v63
    %v235 = vunpack.c.l.b16 %v64
    %v236 = vunpack.c.l.b16 %v65
    %v237 = vunpack.c.l.b16 %v66
    %v238 = vunpack.c.l.b16 %v67
    %v239 = vunpack.c.l.b16 %v68
    %v240 = vunpack.c.l.b16 %v69
    %v241 = vunpack.c.l.b16 %v70
    %v242 = vunpack.c.l.b16 %v71
    %v243 = vunpack.c.l.b16 %v72
    %v244 = vunpack.c.l.b16 %v73
    %v245 = vunpack.c.l.b16 %v74
    %v246 = vunpack.c.l.b16 %v75
    %v247 = vunpack.c.l.b16 %v76
    %v248 = vunpack.c.l.b16 %v77
    %v249 = vunpack.c.l.b16 %v78
    %v250 = vunpack.c.l.b16 %v79
    %v251 = vunpack.c.l.b16 %v80
    %v252 = vunpack.c.l.b16 %v81
    %v253 = vunpack.c.l.b16 %v82
    %v254 = vunpack.c.l.b16 %v83
    %v255 = vunpack.c.l.b16 %v84
    %v256 = vunpack.c.l.b16 %v85
    %v257 = vunpack.c.l.b16 %v86
    %v258 = vunpack.c.l.b16 %v87
    %v259 = vunpack.c.l.b16 %v88
    %v260 = vunpack.c.l.b16 %v89
    %v261 = vunpack.c.l.b16 %v90
    %v262 = vunpack.c.l.b16 %v91
    %v263 = vunpack.c.l.b16 %v92
    %v264 = vunpack.c.l.b16 %v93
    %v265 = vunpack.c.l.b16 %v94
    %v266 = vunpack.c.l.b16 %v95
    %v267 = vunpack.c.l.b16 %v96
    %v268 = vunpack.c.l.b16 %v97
    %v269 = vunpack.c.l.b16 %v98
    %v270 = vunpack.c.l.b16 %v99
    %v271 = vunpack.c.l.b16 %v100
    %v272 = vunpack.c.l.b16 %v101
    %v273 = vunpack.c.l.b16 %v102
    %v274 = vunpack.c.l.b16 %v103
    %v275 = vunpack.c.l.b16 %v104
    %v276 = vunpack.c.l.b16 %v105
    %v277 = vunpack.c.l.b16 %v106
    %v278 = vunpack.c.l.b16 %v107
    %v279 = vunpack.c.l.b16 %v108
    %v280 = vunpack.c.l.b16 %v109
    %v281 = vunpack.c.l.b16 %v110
    %v282 = vunpack.c.l.b16 %v111
    %v283 = vunpack.c.l.b16 %v112
    %v284 = vunpack.c.l.b16 %v113
    %v285 = vunpack.c.l.b16 %v114
    %v286 = vunpack.c.l.b16 %v115
    %v287 = vunpack.c.l.b16 %v116
    %v288 = vunpack.c.l.b16 %v117
    %v289 = vunpack.c.l.b16 %v118
    %v290 = vpack.c.b16 %v227, %v226
    %v291 = vpack.c.b16 %v229, %v228
    %v292 = vpack.c.b16 %v231, %v230
    %v293 = vpack.c.b16 %v233, %v232
    %v294 = vpack.c.b16 %v235, %v234
    %v295 = vpack.c.b16 %v237, %v236
    %v296 = vpack.c.b16 %v239, %v238
    %v297 = vpack.c.b16 %v241, %v240
    %v298 = vpack.c.b16 %v243, %v242
    %v299 = vpack.c.b16 %v245, %v244
    %v300 = vpack.c.b16 %v247, %v246
    %v301 = vpack.c.b16 %v249, %v248
    %v302 = vpack.c.b16 %v251, %v250
    %v303 = vpack.c.b16 %v253, %v252
    %v304 = vpack.c.b16 %v255, %v254
    %v305 = vpack.c.b16 %v257, %v256
    %v306 = vpack.c.b16 %v259, %v258
    %v307 = vpack.c.b16 %v261, %v260
    %v308 = vpack.c.b16 %v263, %v262
    %v309 = vpack.c.b16 %v265, %v264
    %v310 = vpack.c.b16 %v267, %v266
    %v311 = vpack.c.b16 %v269, %v268
    %v312 = vpack.c.b16 %v271, %v270
    %v313 = vpack.c.b16 %v273, %v272
    %v314 = vpack.c.b16 %v275, %v274
    %v315 = vpack.c.b16 %v277, %v276
    %v316 = vpack.c.b16 %v279, %v278
    %v317 = vpack.c.b16 %v281, %v280
    %v318 = vpack.c.b16 %v283, %v282
    %v319 = vpack.c.b16 %v285, %v284
    %v320 = vpack.c.b16 %v287, %v286
    %v321 = vpack.c.b16 %v289, %v288
    %354 = vmatpush.bf16.msra.mxu0 %v297
    %355 = vmatpush.bf16.msra.mxu0 %v296
    %356 = vmatpush.bf16.msra.mxu0 %v295
    %357 = vmatpush.bf16.msra.mxu0 %v294
    %358 = vmatpush.bf16.msra.mxu0 %v293
    %359 = vmatpush.bf16.msra.mxu0 %v292
    %360 = vmatpush.bf16.msra.mxu0 %v291
    %361 = vmatpush.bf16.msra.mxu0 %v290
    %362 = vmatmul.bf16.gmra.mxu0 %v146
    %v363 = vpop.f32.mrf.mxu0
    %v364 = vadd.f32 %v121, %v363
    %v365 = vpop.f32.mrf.mxu0
    %v366 = vadd.f32 %v121, %v365
    %367 = vmatmul.bf16.gmra.mxu0 %v150
    %v368 = vpop.f32.mrf.mxu0
    %v369 = vadd.f32 %v121, %v368
    %v370 = vpop.f32.mrf.mxu0
    %v371 = vadd.f32 %v121, %v370
    %372 = vdwg.mxu0
    %373 = vmatpush.bf16.msra.mxu0 %v305
    %374 = vmatpush.bf16.msra.mxu0 %v304
    %375 = vmatpush.bf16.msra.mxu0 %v303
    %376 = vmatpush.bf16.msra.mxu0 %v302
    %377 = vmatpush.bf16.msra.mxu0 %v301
    %378 = vmatpush.bf16.msra.mxu0 %v300
    %379 = vmatpush.bf16.msra.mxu0 %v299
    %380 = vmatpush.bf16.msra.mxu0 %v298
    %381 = vmatmul.bf16.gmra.mxu0 %v147
    %v382 = vpop.f32.mrf.mxu0
    %v383 = vadd.f32 %v364, %v382
    %v384 = vpop.f32.mrf.mxu0
    %v385 = vadd.f32 %v366, %v384
    %386 = vmatmul.bf16.gmra.mxu0 %v151
    %v387 = vpop.f32.mrf.mxu0
    %v388 = vadd.f32 %v369, %v387
    %v389 = vpop.f32.mrf.mxu0
    %v390 = vadd.f32 %v371, %v389
    %391 = vdwg.mxu0
    %392 = vmatpush.bf16.msra.mxu0 %v313
    %393 = vmatpush.bf16.msra.mxu0 %v312
    %394 = vmatpush.bf16.msra.mxu0 %v311
    %395 = vmatpush.bf16.msra.mxu0 %v310
    %396 = vmatpush.bf16.msra.mxu0 %v309
    %397 = vmatpush.bf16.msra.mxu0 %v308
    %398 = vmatpush.bf16.msra.mxu0 %v307
    %399 = vmatpush.bf16.msra.mxu0 %v306
    %400 = vmatmul.bf16.gmra.mxu0 %v148
    %v401 = vpop.f32.mrf.mxu0
    %v402 = vadd.f32 %v383, %v401
    %v403 = vpop.f32.mrf.mxu0
    %v404 = vadd.f32 %v385, %v403
    %405 = vmatmul.bf16.gmra.mxu0 %v152
    %v406 = vpop.f32.mrf.mxu0
    %v407 = vadd.f32 %v388, %v406
    %v408 = vpop.f32.mrf.mxu0
    %v409 = vadd.f32 %v390, %v408
    %410 = vdwg.mxu0
    %411 = vmatpush.bf16.msra.mxu0 %v321
    %412 = vmatpush.bf16.msra.mxu0 %v320
    %413 = vmatpush.bf16.msra.mxu0 %v319
    %414 = vmatpush.bf16.msra.mxu0 %v318
    %415 = vmatpush.bf16.msra.mxu0 %v317
    %416 = vmatpush.bf16.msra.mxu0 %v316
    %417 = vmatpush.bf16.msra.mxu0 %v315
    %418 = vmatpush.bf16.msra.mxu0 %v314
    %419 = vmatmul.bf16.gmra.mxu0 %v149
    %v420 = vpop.f32.mrf.mxu0
    %v421 = vadd.f32 %v402, %v420
    %v422 = vpop.f32.mrf.mxu0
    %v423 = vadd.f32 %v404, %v422
    %424 = vmatmul.bf16.gmra.mxu0 %v153
    %v425 = vpop.f32.mrf.mxu0
    %v426 = vadd.f32 %v407, %v425
    %v427 = vpop.f32.mrf.mxu0
    %v428 = vadd.f32 %v409, %v427
    %429 = vdwg.mxu0
    %v430 = vld [vmem:[%s3] sm:$0xf]
    %v431 = vld [vmem:[%s3 + $0x4] sm:$0xf]
    %v432 = vld [vmem:[%s3 + $0x8] sm:$0xf]
    %v433 = vld [vmem:[%s3 + $0xc] sm:$0xf]
    %v434 = vunpack.c.l.bf16 %v430
    %v435 = vunpack.c.l.bf16 %v431
    %v436 = vunpack.c.l.bf16 %v432
    %v437 = vunpack.c.l.bf16 %v433
    %v438 = vadd.f32 %v421, %v434
    %v439 = vadd.f32 %v423, %v435
    %v440 = vadd.f32 %v426, %v436
    %v441 = vadd.f32 %v428, %v437
    %v442 = vpack.c.bf16 %v438, %v438
    %v443 = vpack.c.bf16 %v439, %v439
    %v444 = vpack.c.bf16 %v440, %v440
    %v445 = vpack.c.bf16 %v441, %v441
    %446 = vst [vmem:[%s4] sm:$0xf] %v442
    %447 = vst [vmem:[%s4 + $0x4] sm:$0xf] %v443
    %448 = vst [vmem:[%s4 + $0x8] sm:$0xf] %v444
    %449 = vst [vmem:[%s4 + $0xc] sm:$0xf] %v445
    // Predicated region
    $region26: #{gpt2_lm_head_forward.15} parent=1 // pred_check
      _
    $region27: #{gpt2_lm_head_forward.15} parent=1 // pred_check_branch
      %451 = sbr.rel (0) target = $region29
    $region28: #{gpt2_lm_head_forward.15} parent=1 // pred_region
      _
    $region29: #{gpt2_lm_head_forward.15} parent=1 // pred_fallthru
      _
    // Predicated region
    $region30: #{gpt2_lm_head_forward.15} parent=1 // pred_check
      _
    $region31: #{gpt2_lm_head_forward.15} parent=1 // pred_check_branch
      %453 = sbr.rel (0) target = $region33
    $region32: #{gpt2_lm_head_forward.15} parent=1 // pred_region
      _
    $region33: #{gpt2_lm_head_forward.15} parent=1 // pred_fallthru
      _
    %454 = vsyncpa [#allocation3], 1
    %455 = vsyncpa [#allocation5], 1

// kernel: gpt2_lm_head_forward.21
$region0: #{gpt2_lm_head_forward.21}
  #allocation0 [shape = 'u32[]', space=smem, size = 0x4, offset = 0x4, fixed_abs, tag = 'smem constant byte address 0x4 - core index']
  #allocation1 [shape = 'u32[72,128]{1,0:T(1,128)}', space=vmem, size = 0x9000, scoped, tag = 'internal scratch']
  %s0 = inlined_call_operand.vmem [shape: bf16[32,128], index: 0, kind: input, shape index: {}]
  %s1 = inlined_call_operand.vmem [shape: bf16[1,128], index: 1, kind: input, shape index: {}]
  %s2 = inlined_call_operand.vmem [shape: bf16[1,128], index: 2, kind: input, shape index: {}]
  %s3 = inlined_call_operand.hbm [shape: bf16[128,256], index: 3, kind: input, shape index: {}]
  %s4 = inlined_call_operand.hbm [shape: f32[32,256], index: 4, kind: output, shape index: {}]
  %s5 = sld [smem:[#allocation0]]
  $region30: #{gpt2_lm_head_forward.21} parent=0
    _
  %s7 = ssub.s32 1, %s5
  %s8 = scalar_select 0, %s7, %s5
  $region1: #{gpt2_lm_head_forward.21} parent=0
    #allocation2 [shape = 'u8[65536]{0}', space=vmem, size = 0x10000, scoped, tag = 'input window, operand 3, single buffered']
    #allocation3 [shape = 's32[1]{0}', space=sflag, size = 0x4, scoped, tag = 'scoped memory for gpt2_lm_head_forward.21']
    #allocation4 [shape = 's32[1]{0}', space=sflag, size = 0x4, scoped, tag = 'scoped memory for gpt2_lm_head_forward.21']
    #allocation5 [shape = 'u8[32768]{0}', space=vmem, size = 0x8000, scoped, tag = 'output window, operand 0, single buffered']
    %9 = vsyncpa [#allocation3], 0
    %10 = vsyncpa [#allocation4], 0
    // Predicated region
    $region2: #{gpt2_lm_head_forward.21} parent=1 // pred_check
      _
    $region3: #{gpt2_lm_head_forward.21} parent=1 // pred_check_branch
      %12 = sbr.rel (0) target = $region5
    $region4: #{gpt2_lm_head_forward.21} parent=1 // pred_region
      _
    $region5: #{gpt2_lm_head_forward.21} parent=1 // pred_fallthru
      _
    // Predicated region
    $region6: #{gpt2_lm_head_forward.21} parent=1 // pred_check
      _
    $region7: #{gpt2_lm_head_forward.21} parent=1 // pred_check_branch
      %14 = sbr.rel (0) target = $region9
    $region8: #{gpt2_lm_head_forward.21} parent=1 // pred_region
      _
    $region9: #{gpt2_lm_head_forward.21} parent=1 // pred_fallthru
      _
    // Predicated region
    $region10: #{gpt2_lm_head_forward.21} parent=1 // pred_check
      _
    $region11: #{gpt2_lm_head_forward.21} parent=1 // pred_check_branch
      %16 = sbr.rel (0) target = $region13
    $region12: #{gpt2_lm_head_forward.21} parent=1 // pred_region
      _
    $region13: #{gpt2_lm_head_forward.21} parent=1 // pred_fallthru
      _
    // Predicated region
    $region14: #{gpt2_lm_head_forward.21} parent=1 // pred_check
      _
    $region15: #{gpt2_lm_head_forward.21} parent=1 // pred_check_branch
      %18 = sbr.rel (0) target = $region17
    $region16: #{gpt2_lm_head_forward.21} parent=1 // pred_region
      %20 = vsyncadd [#allocation3], 0
      %s21 = sshll.u32 %s3, 4
      %s22 = int_to_ptr.hbm [resolvable:$true] %s21
      %s23 = sshll.u32 [#allocation2], 4
      %s24 = int_to_ptr.vmem [resolvable:$true] %s23
      %29 = dma.hbm_to_vmem [thread:$0]  %s22, 2048, %s24, [#allocation3], 128, 128, 8
    $region17: #{gpt2_lm_head_forward.21} parent=1 // pred_fallthru
      _
    // Predicated region
    $region18: #{gpt2_lm_head_forward.21} parent=1 // pred_check
      _
    $region19: #{gpt2_lm_head_forward.21} parent=1 // pred_check_branch
      %31 = sbr.rel (0) target = $region21
    $region20: #{gpt2_lm_head_forward.21} parent=1 // pred_region
      %33 = dma.done [#allocation3], 2048
    $region21: #{gpt2_lm_head_forward.21} parent=1 // pred_fallthru
      _
    %v34 = vld [vmem:[%s0] sm:$0xf]
    %v35 = vld [vmem:[%s0 + $0x4] sm:$0xf]
    %v36 = vld [vmem:[%s0 + $0x8] sm:$0xf]
    %v37 = vld [vmem:[%s0 + $0xc] sm:$0xf]
    %v38 = vunpack.c.l.bf16 %v34
    %v39 = vunpack.c.l.bf16 %v35
    %v40 = vunpack.c.l.bf16 %v36
    %v41 = vunpack.c.l.bf16 %v37
    %42 = vadd.xlane.f32.xlu0 %v38
    %v43 = vpop.xlane.xlu0 %42
    %44 = vadd.xlane.f32.xlu0 %v39
    %v45 = vpop.xlane.xlu0 %44
    %46 = vadd.xlane.f32.xlu0 %v40
    %v47 = vpop.xlane.xlu0 %46
    %48 = vadd.xlane.f32.xlu0 %v41
    %v49 = vpop.xlane.xlu0 %48
    %v50 = vrcp.pop 128.0
    %v51 = vmul.f32 128.0, %v50
    %v52 = vsub.f32 1.0, %v51
    %v53 = vmul.f32 %v50, %v52
    %v54 = vadd.f32 %v50, %v53
    %vm55 = vweird.f32 %v50
    %v56 = vsel %vm55, %v50, %v54
    %v57 = vmul.f32 %v43, %v56
    %v58 = vmul.f32 %v45, %v56
    %v59 = vmul.f32 %v47, %v56
    %v60 = vmul.f32 %v49, %v56
    %v61 = vsub.f32 %v38, %v57
    %v62 = vsub.f32 %v39, %v58
    %v63 = vsub.f32 %v40, %v59
    %v64 = vsub.f32 %v41, %v60
    %v65 = vmul.f32 %v61, %v61
    %v66 = vmul.f32 %v62, %v62
    %v67 = vmul.f32 %v63, %v63
    %v68 = vmul.f32 %v64, %v64
    %69 = vadd.xlane.f32.xlu0 %v65
    %v70 = vpop.xlane.xlu0 %69
    %71 = vadd.xlane.f32.xlu0 %v66
    %v72 = vpop.xlane.xlu0 %71
    %73 = vadd.xlane.f32.xlu0 %v67
    %v74 = vpop.xlane.xlu0 %73
    %75 = vadd.xlane.f32.xlu0 %v68
    %v76 = vpop.xlane.xlu0 %75
    %v77 = vmul.f32 %v70, %v56
    %v78 = vmul.f32 %v72, %v56
    %v79 = vmul.f32 %v74, %v56
    %v80 = vmul.f32 %v76, %v56
    %v81 = vadd.f32 %v77, 1e-05
    %v82 = vadd.f32 %v78, 1e-05
    %v83 = vadd.f32 %v79, 1e-05
    %v84 = vadd.f32 %v80, 1e-05
    %v85 = vrsqrt.pop %v81
    %v86 = vmul.f32 %v85, %v81
    %v87 = vmul.f32 %v86, %v85
    %v88 = vmul.f32 0.5, %v87
    %v89 = vsub.f32 1.5, %v88
    %v90 = vmul.f32 %v85, %v89
    %vm91 = vweird.f32 %v81
    %vm92 = vweird.f32 %v85
    %vm93 = vmor %vm91, %vm92
    %v94 = vsel %vm93, %v85, %v90
    %v95 = vrsqrt.pop %v82
    %v96 = vmul.f32 %v95, %v82
    %v97 = vmul.f32 %v96, %v95
    %v98 = vmul.f32 0.5, %v97
    %v99 = vsub.f32 1.5, %v98
    %v100 = vmul.f32 %v95, %v99
    %vm101 = vweird.f32 %v82
    %vm102 = vweird.f32 %v95
    %vm103 = vmor %vm101, %vm102
    %v104 = vsel %vm103, %v95, %v100
    %v105 = vrsqrt.pop %v83
    %v106 = vmul.f32 %v105, %v83
    %v107 = vmul.f32 %v106, %v105
    %v108 = vmul.f32 0.5, %v107
    %v109 = vsub.f32 1.5, %v108
    %v110 = vmul.f32 %v105, %v109
    %vm111 = vweird.f32 %v83
    %vm112 = vweird.f32 %v105
    %vm113 = vmor %vm111, %vm112
    %v114 = vsel %vm113, %v105, %v110
    %v115 = vrsqrt.pop %v84
    %v116 = vmul.f32 %v115, %v84
    %v117 = vmul.f32 %v116, %v115
    %v118 = vmul.f32 0.5, %v117
    %v119 = vsub.f32 1.5, %v118
    %v120 = vmul.f32 %v115, %v119
    %vm121 = vweird.f32 %v84
    %vm122 = vweird.f32 %v115
    %vm123 = vmor %vm121, %vm122
    %v124 = vsel %vm123, %v115, %v120
    %v125 = vmul.f32 %v61, %v94
    %v126 = vmul.f32 %v62, %v104
    %v127 = vmul.f32 %v63, %v114
    %v128 = vmul.f32 %v64, %v124
    %v129 = vld [vmem:[%s1] sm:$0x1]
    %v130 = vunpack.c.l.bf16 %v129
    %v131 = vperm.slane %v130, 0
    %v132 = vmul.f32 %v125, %v131
    %v133 = vmul.f32 %v126, %v131
    %v134 = vmul.f32 %v127, %v131
    %v135 = vmul.f32 %v128, %v131
    %v136 = vld [vmem:[%s2] sm:$0x1]
    %v137 = vunpack.c.l.bf16 %v136
    %v138 = vperm.slane %v137, 0
    %v139 = vadd.f32 %v132, %v138
    %v140 = vadd.f32 %v133, %v138
    %v141 = vadd.f32 %v134, %v138
    %v142 = vadd.f32 %v135, %v138
    %v143 = vpack.c.bf16 %v140, %v139
    %v144 = vpack.c.bf16 %v142, %v141
    %v145 = vld [vmem:[#allocation2] sm:$0xff]
    %v146 = vld [vmem:[#allocation2 + $0x8] sm:$0xff]
    %v147 = vld [vmem:[#allocation2 + $0x10] sm:$0xff]
    %v148 = vld [vmem:[#allocation2 + $0x18] sm:$0xff]
    %v149 = vld [vmem:[#allocation2 + $0x20] sm:$0xff]
    %v150 = vld [vmem:[#allocation2 + $0x28] sm:$0xff]
    %v151 = vld [vmem:[#allocation2 + $0x30] sm:$0xff]
    %v152 = vld [vmem:[#allocation2 + $0x38] sm:$0xff]
    %v153 = vld [vmem:[#allocation2 + $0x40] sm:$0xff]
    %v154 = vld [vmem:[#allocation2 + $0x48] sm:$0xff]
    %v155 = vld [vmem:[#allocation2 + $0x50] sm:$0xff]
    %v156 = vld [vmem:[#allocation2 + $0x58] sm:$0xff]
    %v157 = vld [vmem:[#allocation2 + $0x60] sm:$0xff]
    %v158 = vld [vmem:[#allocation2 + $0x68] sm:$0xff]
    %v159 = vld [vmem:[#allocation2 + $0x70] sm:$0xff]
    %v160 = vld [vmem:[#allocation2 + $0x78] sm:$0xff]
    %v177 = vunpack.c.l.b16 %v145
    %v178 = vunpack.c.h.b16 %v145
    %v179 = vunpack.c.l.b16 %v146
    %v180 = vunpack.c.h.b16 %v146
    %v181 = vunpack.c.l.b16 %v147
    %v182 = vunpack.c.h.b16 %v147
    %v183 = vunpack.c.l.b16 %v148
    %v184 = vunpack.c.h.b16 %v148
    %v185 = vunpack.c.l.b16 %v149
    %v186 = vunpack.c.h.b16 %v149
    %v187 = vunpack.c.l.b16 %v150
    %v188 = vunpack.c.h.b16 %v150
    %v189 = vunpack.c.l.b16 %v151
    %v190 = vunpack.c.h.b16 %v151
    %v191 = vunpack.c.l.b16 %v152
    %v192 = vunpack.c.h.b16 %v152
    %v193 = vunpack.c.l.b16 %v153
    %v194 = vunpack.c.h.b16 %v153
    %v195 = vunpack.c.l.b16 %v154
    %v196 = vunpack.c.h.b16 %v154
    %v197 = vunpack.c.l.b16 %v155
    %v198 = vunpack.c.h.b16 %v155
    %v199 = vunpack.c.l.b16 %v156
    %v200 = vunpack.c.h.b16 %v156
    %v201 = vunpack.c.l.b16 %v157
    %v202 = vunpack.c.h.b16 %v157
    %v203 = vunpack.c.l.b16 %v158
    %v204 = vunpack.c.h.b16 %v158
    %v205 = vunpack.c.l.b16 %v159
    %v206 = vunpack.c.h.b16 %v159
    %v207 = vunpack.c.l.b16 %v160
    %v208 = vunpack.c.h.b16 %v160
    %v209 = vpack.c.b16 %v179, %v177
    %v210 = vpack.c.b16 %v180, %v178
    %v211 = vpack.c.b16 %v183, %v181
    %v212 = vpack.c.b16 %v184, %v182
    %v213 = vpack.c.b16 %v187, %v185
    %v214 = vpack.c.b16 %v188, %v186
    %v215 = vpack.c.b16 %v191, %v189
    %v216 = vpack.c.b16 %v192, %v190
    %v217 = vpack.c.b16 %v195, %v193
    %v218 = vpack.c.b16 %v196, %v194
    %v219 = vpack.c.b16 %v199, %v197
    %v220 = vpack.c.b16 %v200, %v198
    %v221 = vpack.c.b16 %v203, %v201
    %v222 = vpack.c.b16 %v204, %v202
    %v223 = vpack.c.b16 %v207, %v205
    %v224 = vpack.c.b16 %v208, %v206
    %241 = vmatpush.bf16.msra.mxu0 %v223
    %242 = vmatpush.bf16.msra.mxu0 %v221
    %243 = vmatpush.bf16.msra.mxu0 %v219
    %244 = vmatpush.bf16.msra.mxu0 %v217
    %245 = vmatpush.bf16.msra.mxu0 %v215
    %246 = vmatpush.bf16.msra.mxu0 %v213
    %247 = vmatpush.bf16.msra.mxu0 %v211
    %248 = vmatpush.bf16.msra.mxu0 %v209
    %249 = vmatmul.bf16.gmra.mxu0 %v143
    %v250 = vpop.f32.mrf.mxu0
    %v251 = vadd.f32 0.0, %v250
    %v252 = vpop.f32.mrf.mxu0
    %v253 = vadd.f32 0.0, %v252
    %254 = vmatmul.bf16.gmra.mxu0 %v144
    %v255 = vpop.f32.mrf.mxu0
    %v256 = vadd.f32 0.0, %v255
    %v257 = vpop.f32.mrf.mxu0
    %v258 = vadd.f32 0.0, %v257
    %259 = vdwg.mxu0
    %260 = vmatpush.bf16.msra.mxu0 %v224
    %261 = vmatpush.bf16.msra.mxu0 %v222
    %262 = vmatpush.bf16.msra.mxu0 %v220
    %263 = vmatpush.bf16.msra.mxu0 %v218
    %264 = vmatpush.bf16.msra.mxu0 %v216
    %265 = vmatpush.bf16.msra.mxu0 %v214
    %266 = vmatpush.bf16.msra.mxu0 %v212
    %267 = vmatpush.bf16.msra.mxu0 %v210
    %268 = vmatmul.bf16.gmra.mxu0 %v143
    %v269 = vpop.f32.mrf.mxu0
    %v270 = vadd.f32 0.0, %v269
    %v271 = vpop.f32.mrf.mxu0
    %v272 = vadd.f32 0.0, %v271
    %273 = vmatmul.bf16.gmra.mxu0 %v144
    %v274 = vpop.f32.mrf.mxu0
    %v275 = vadd.f32 0.0, %v274
    %v276 = vpop.f32.mrf.mxu0
    %v277 = vadd.f32 0.0, %v276
    %278 = vdwg.mxu0
    %279 = vst [vmem:[#allocation5] sm:$0xff] %v251
    %280 = vst [vmem:[#allocation5 + $0x8] sm:$0xff] %v270
    %281 = vst [vmem:[#allocation5 + $0x10] sm:$0xff] %v253
    %282 = vst [vmem:[#allocation5 + $0x18] sm:$0xff] %v272
    %283 = vst [vmem:[#allocation5 + $0x20] sm:$0xff] %v256
    %284 = vst [vmem:[#allocation5 + $0x28] sm:$0xff] %v275
    %285 = vst [vmem:[#allocation5 + $0x30] sm:$0xff] %v258
    %286 = vst [vmem:[#allocation5 + $0x38] sm:$0xff] %v277
    // Predicated region
    $region22: #{gpt2_lm_head_forward.21} parent=1 // pred_check
      _
    $region23: #{gpt2_lm_head_forward.21} parent=1 // pred_check_branch
      %288 = sbr.rel (0) target = $region25
    $region24: #{gpt2_lm_head_forward.21} parent=1 // pred_region
      %290 = vsyncadd [#allocation4], 0
      %s291 = sshll.u32 [#allocation5], 4
      %s292 = int_to_ptr.vmem [resolvable:$true] %s291
      %s293 = sshll.u32 %s4, 4
      %s294 = int_to_ptr.hbm [resolvable:$true] %s293
      %299 = dma.vmem_to_hbm [thread:$0]  %s292, 1024, %s294, [#allocation4], 256, 256, 16
    $region25: #{gpt2_lm_head_forward.21} parent=1 // pred_fallthru
      _
    // Predicated region
    $region26: #{gpt2_lm_head_forward.21} parent=1 // pred_check
      _
    $region27: #{gpt2_lm_head_forward.21} parent=1 // pred_check_branch
      %301 = sbr.rel (0) target = $region29
    $region28: #{gpt2_lm_head_forward.21} parent=1 // pred_region
      %303 = dma.done [#allocation4], 1024
    $region29: #{gpt2_lm_head_forward.21} parent=1 // pred_fallthru
      _
    %304 = vsyncpa [#allocation3], 1
    %305 = vsyncpa [#allocation4], 1

// kernel: gpt2_lm_head_forward.19
$region0: #{gpt2_lm_head_forward.19}
  #allocation0 [shape = 'u32[]', space=smem, size = 0x4, offset = 0x4, fixed_abs, tag = 'smem constant byte address 0x4 - core index']
  #allocation1 [shape = 'u32[72,128]{1,0:T(1,128)}', space=vmem, size = 0x9000, scoped, tag = 'internal scratch']
  %s0 = inlined_call_operand.vmem [shape: bf16[32,128], index: 0, kind: input, shape index: {}]
  %s1 = inlined_call_operand.vmem [shape: bf16[1,128], index: 1, kind: input, shape index: {}]
  %s2 = inlined_call_operand.vmem [shape: bf16[1,128], index: 2, kind: input, shape index: {}]
  %s3 = inlined_call_operand.hbm [shape: bf16[128,512], index: 3, kind: input, shape index: {}]
  %s4 = inlined_call_operand.vmem [shape: bf16[1,512], index: 4, kind: input, shape index: {}]
  %s5 = inlined_call_operand.vmem [shape: bf16[32,512], index: 5, kind: output, shape index: {}]
  %s6 = sld [smem:[#allocation0]]
  $region34: #{gpt2_lm_head_forward.19} parent=0
    _
  %s8 = ssub.s32 1, %s6
  %s9 = scalar_select 0, %s8, %s6
  $region1: #{gpt2_lm_head_forward.19} parent=0
    #allocation2 [shape = 'u8[131072]{0}', space=vmem, size = 0x20000, scoped, tag = 'input window, operand 3, single buffered']
    #allocation3 [shape = 's32[1]{0}', space=sflag, size = 0x4, scoped, tag = 'scoped memory for gpt2_lm_head_forward.19']
    %10 = vsyncpa [#allocation3], 0
    // Predicated region
    $region2: #{gpt2_lm_head_forward.19} parent=1 // pred_check
      _
    $region3: #{gpt2_lm_head_forward.19} parent=1 // pred_check_branch
      %12 = sbr.rel (0) target = $region5
    $region4: #{gpt2_lm_head_forward.19} parent=1 // pred_region
      _
    $region5: #{gpt2_lm_head_forward.19} parent=1 // pred_fallthru
      _
    // Predicated region
    $region6: #{gpt2_lm_head_forward.19} parent=1 // pred_check
      _
    $region7: #{gpt2_lm_head_forward.19} parent=1 // pred_check_branch
      %14 = sbr.rel (0) target = $region9
    $region8: #{gpt2_lm_head_forward.19} parent=1 // pred_region
      _
    $region9: #{gpt2_lm_head_forward.19} parent=1 // pred_fallthru
      _
    // Predicated region
    $region10: #{gpt2_lm_head_forward.19} parent=1 // pred_check
      _
    $region11: #{gpt2_lm_head_forward.19} parent=1 // pred_check_branch
      %16 = sbr.rel (0) target = $region13
    $region12: #{gpt2_lm_head_forward.19} parent=1 // pred_region
      _
    $region13: #{gpt2_lm_head_forward.19} parent=1 // pred_fallthru
      _
    // Predicated region
    $region14: #{gpt2_lm_head_forward.19} parent=1 // pred_check
      _
    $region15: #{gpt2_lm_head_forward.19} parent=1 // pred_check_branch
      %18 = sbr.rel (0) target = $region17
    $region16: #{gpt2_lm_head_forward.19} parent=1 // pred_region
      %20 = vsyncadd [#allocation3], 0
      %s21 = sshll.u32 %s3, 4
      %s22 = int_to_ptr.hbm [resolvable:$true] %s21
      %s23 = sshll.u32 [#allocation2], 4
      %s24 = int_to_ptr.vmem [resolvable:$true] %s23
      %29 = dma.hbm_to_vmem [thread:$0]  %s22, 4096, %s24, [#allocation3], 256, 256, 16
    $region17: #{gpt2_lm_head_forward.19} parent=1 // pred_fallthru
      _
    // Predicated region
    $region18: #{gpt2_lm_head_forward.19} parent=1 // pred_check
      _
    $region19: #{gpt2_lm_head_forward.19} parent=1 // pred_check_branch
      %31 = sbr.rel (0) target = $region21
    $region20: #{gpt2_lm_head_forward.19} parent=1 // pred_region
      _
    $region21: #{gpt2_lm_head_forward.19} parent=1 // pred_fallthru
      _
    // Predicated region
    $region22: #{gpt2_lm_head_forward.19} parent=1 // pred_check
      _
    $region23: #{gpt2_lm_head_forward.19} parent=1 // pred_check_branch
      %33 = sbr.rel (0) target = $region25
    $region24: #{gpt2_lm_head_forward.19} parent=1 // pred_region
      %35 = dma.done [#allocation3], 4096
    $region25: #{gpt2_lm_head_forward.19} parent=1 // pred_fallthru
      _
    %v36 = vld [vmem:[%s0] sm:$0xf]
    %v37 = vld [vmem:[%s0 + $0x4] sm:$0xf]
    %v38 = vld [vmem:[%s0 + $0x8] sm:$0xf]
    %v39 = vld [vmem:[%s0 + $0xc] sm:$0xf]
    %v40 = vunpack.c.l.bf16 %v36
    %v41 = vunpack.c.l.bf16 %v37
    %v42 = vunpack.c.l.bf16 %v38
    %v43 = vunpack.c.l.bf16 %v39
    %44 = vadd.xlane.f32.xlu0 %v40
    %v45 = vpop.xlane.xlu0 %44
    %46 = vadd.xlane.f32.xlu0 %v41
    %v47 = vpop.xlane.xlu0 %46
    %48 = vadd.xlane.f32.xlu0 %v42
    %v49 = vpop.xlane.xlu0 %48
    %50 = vadd.xlane.f32.xlu0 %v43
    %v51 = vpop.xlane.xlu0 %50
    %v52 = vrcp.pop 128.0
    %v53 = vmul.f32 128.0, %v52
    %v54 = vsub.f32 1.0, %v53
    %v55 = vmul.f32 %v52, %v54
    %v56 = vadd.f32 %v52, %v55
    %vm57 = vweird.f32 %v52
    %v58 = vsel %vm57, %v52, %v56
    %v59 = vmul.f32 %v45, %v58
    %v60 = vmul.f32 %v47, %v58
    %v61 = vmul.f32 %v49, %v58
    %v62 = vmul.f32 %v51, %v58
    %v63 = vsub.f32 %v40, %v59
    %v64 = vsub.f32 %v41, %v60
    %v65 = vsub.f32 %v42, %v61
    %v66 = vsub.f32 %v43, %v62
    %v67 = vmul.f32 %v63, %v63
    %v68 = vmul.f32 %v64, %v64
    %v69 = vmul.f32 %v65, %v65
    %v70 = vmul.f32 %v66, %v66
    %71 = vadd.xlane.f32.xlu0 %v67
    %v72 = vpop.xlane.xlu0 %71
    %73 = vadd.xlane.f32.xlu0 %v68
    %v74 = vpop.xlane.xlu0 %73
    %75 = vadd.xlane.f32.xlu0 %v69
    %v76 = vpop.xlane.xlu0 %75
    %77 = vadd.xlane.f32.xlu0 %v70
    %v78 = vpop.xlane.xlu0 %77
    %v79 = vmul.f32 %v72, %v58
    %v80 = vmul.f32 %v74, %v58
    %v81 = vmul.f32 %v76, %v58
    %v82 = vmul.f32 %v78, %v58
    %v83 = vadd.f32 %v79, 1e-05
    %v84 = vadd.f32 %v80, 1e-05
    %v85 = vadd.f32 %v81, 1e-05
    %v86 = vadd.f32 %v82, 1e-05
    %v87 = vrsqrt.pop %v83
    %v88 = vmul.f32 %v87, %v83
    %v89 = vmul.f32 %v88, %v87
    %v90 = vmul.f32 0.5, %v89
    %v91 = vsub.f32 1.5, %v90
    %v92 = vmul.f32 %v87, %v91
    %vm93 = vweird.f32 %v83
    %vm94 = vweird.f32 %v87
    %vm95 = vmor %vm93, %vm94
    %v96 = vsel %vm95, %v87, %v92
    %v97 = vrsqrt.pop %v84
    %v98 = vmul.f32 %v97, %v84
    %v99 = vmul.f32 %v98, %v97
    %v100 = vmul.f32 0.5, %v99
    %v101 = vsub.f32 1.5, %v100
    %v102 = vmul.f32 %v97, %v101
    %vm103 = vweird.f32 %v84
    %vm104 = vweird.f32 %v97
    %vm105 = vmor %vm103, %vm104
    %v106 = vsel %vm105, %v97, %v102
    %v107 = vrsqrt.pop %v85
    %v108 = vmul.f32 %v107, %v85
    %v109 = vmul.f32 %v108, %v107
    %v110 = vmul.f32 0.5, %v109
    %v111 = vsub.f32 1.5, %v110
    %v112 = vmul.f32 %v107, %v111
    %vm113 = vweird.f32 %v85
    %vm114 = vweird.f32 %v107
    %vm115 = vmor %vm113, %vm114
    %v116 = vsel %vm115, %v107, %v112
    %v117 = vrsqrt.pop %v86
    %v118 = vmul.f32 %v117, %v86
    %v119 = vmul.f32 %v118, %v117
    %v120 = vmul.f32 0.5, %v119
    %v121 = vsub.f32 1.5, %v120
    %v122 = vmul.f32 %v117, %v121
    %vm123 = vweird.f32 %v86
    %vm124 = vweird.f32 %v117
    %vm125 = vmor %vm123, %vm124
    %v126 = vsel %vm125, %v117, %v122
    %v127 = vmul.f32 %v63, %v96
    %v128 = vmul.f32 %v64, %v106
    %v129 = vmul.f32 %v65, %v116
    %v130 = vmul.f32 %v66, %v126
    %v131 = vld [vmem:[%s1] sm:$0x1]
    %v132 = vunpack.c.l.bf16 %v131
    %v133 = vperm.slane %v132, 0
    %v134 = vmul.f32 %v127, %v133
    %v135 = vmul.f32 %v128, %v133
    %v136 = vmul.f32 %v129, %v133
    %v137 = vmul.f32 %v130, %v133
    %v138 = vld [vmem:[%s2] sm:$0x1]
    %v139 = vunpack.c.l.bf16 %v138
    %v140 = vperm.slane %v139, 0
    %v141 = vadd.f32 %v134, %v140
    %v142 = vadd.f32 %v135, %v140
    %v143 = vadd.f32 %v136, %v140
    %v144 = vadd.f32 %v137, %v140
    %v145 = vpack.c.bf16 %v142, %v141
    %v146 = vpack.c.bf16 %v144, %v143
    %v147 = vld [vmem:[#allocation2] sm:$0xff]
    %v148 = vld [vmem:[#allocation2 + $0x8] sm:$0xff]
    %v149 = vld [vmem:[#allocation2 + $0x10] sm:$0xff]
    %v150 = vld [vmem:[#allocation2 + $0x18] sm:$0xff]
    %v151 = vld [vmem:[#allocation2 + $0x20] sm:$0xff]
    %v152 = vld [vmem:[#allocation2 + $0x28] sm:$0xff]
    %v153 = vld [vmem:[#allocation2 + $0x30] sm:$0xff]
    %v154 = vld [vmem:[#allocation2 + $0x38] sm:$0xff]
    %v155 = vld [vmem:[#allocation2 + $0x40] sm:$0xff]
    %v156 = vld [vmem:[#allocation2 + $0x48] sm:$0xff]
    %v157 = vld [vmem:[#allocation2 + $0x50] sm:$0xff]
    %v158 = vld [vmem:[#allocation2 + $0x58] sm:$0xff]
    %v159 = vld [vmem:[#allocation2 + $0x60] sm:$0xff]
    %v160 = vld [vmem:[#allocation2 + $0x68] sm:$0xff]
    %v161 = vld [vmem:[#allocation2 + $0x70] sm:$0xff]
    %v162 = vld [vmem:[#allocation2 + $0x78] sm:$0xff]
    %v163 = vld [vmem:[#allocation2 + $0x80] sm:$0xff]
    %v164 = vld [vmem:[#allocation2 + $0x88] sm:$0xff]
    %v165 = vld [vmem:[#allocation2 + $0x90] sm:$0xff]
    %v166 = vld [vmem:[#allocation2 + $0x98] sm:$0xff]
    %v167 = vld [vmem:[#allocation2 + $0xa0] sm:$0xff]
    %v168 = vld [vmem:[#allocation2 + $0xa8] sm:$0xff]
    %v169 = vld [vmem:[#allocation2 + $0xb0] sm:$0xff]
    %v170 = vld [vmem:[#allocation2 + $0xb8] sm:$0xff]
    %v171 = vld [vmem:[#allocation2 + $0xc0] sm:$0xff]
    %v172 = vld [vmem:[#allocation2 + $0xc8] sm:$0xff]
    %v173 = vld [vmem:[#allocation2 + $0xd0] sm:$0xff]
    %v174 = vld [vmem:[#allocation2 + $0xd8] sm:$0xff]
    %v175 = vld [vmem:[#allocation2 + $0xe0] sm:$0xff]
    %v176 = vld [vmem:[#allocation2 + $0xe8] sm:$0xff]
    %v177 = vld [vmem:[#allocation2 + $0xf0] sm:$0xff]
    %v178 = vld [vmem:[#allocation2 + $0xf8] sm:$0xff]
    %v179 = vld [vmem:[%s4] sm:$0xf]
    %v180 = vunpack.c.l.bf16 %v179
    %v182 = vperm.slane %v180, 0
    %v183 = vperm.slane %v180, 2
    %v184 = vperm.slane %v180, 4
    %v185 = vperm.slane %v180, 6
    %v190 = vperm.slane %v182, 0
    %v191 = vperm.slane %v183, 0
    %v192 = vperm.slane %v184, 0
    %v193 = vperm.slane %v185, 0
    %v226 = vunpack.c.l.b16 %v147
    %v227 = vunpack.c.h.b16 %v147
    %v228 = vunpack.c.l.b16 %v148
    %v229 = vunpack.c.h.b16 %v148
    %v230 = vunpack.c.l.b16 %v149
    %v231 = vunpack.c.h.b16 %v149
    %v232 = vunpack.c.l.b16 %v150
    %v233 = vunpack.c.h.b16 %v150
    %v234 = vunpack.c.l.b16 %v151
    %v235 = vunpack.c.h.b16 %v151
    %v236 = vunpack.c.l.b16 %v152
    %v237 = vunpack.c.h.b16 %v152
    %v238 = vunpack.c.l.b16 %v153
    %v239 = vunpack.c.h.b16 %v153
    %v240 = vunpack.c.l.b16 %v154
    %v241 = vunpack.c.h.b16 %v154
    %v242 = vunpack.c.l.b16 %v155
    %v243 = vunpack.c.h.b16 %v155
    %v244 = vunpack.c.l.b16 %v156
    %v245 = vunpack.c.h.b16 %v156
    %v246 = vunpack.c.l.b16 %v157
    %v247 = vunpack.c.h.b16 %v157
    %v248 = vunpack.c.l.b16 %v158
    %v249 = vunpack.c.h.b16 %v158
    %v250 = vunpack.c.l.b16 %v159
    %v251 = vunpack.c.h.b16 %v159
    %v252 = vunpack.c.l.b16 %v160
    %v253 = vunpack.c.h.b16 %v160
    %v254 = vunpack.c.l.b16 %v161
    %v255 = vunpack.c.h.b16 %v161
    %v256 = vunpack.c.l.b16 %v162
    %v257 = vunpack.c.h.b16 %v162
    %v258 = vunpack.c.l.b16 %v163
    %v259 = vunpack.c.h.b16 %v163
    %v260 = vunpack.c.l.b16 %v164
    %v261 = vunpack.c.h.b16 %v164
    %v262 = vunpack.c.l.b16 %v165
    %v263 = vunpack.c.h.b16 %v165
    %v264 = vunpack.c.l.b16 %v166
    %v265 = vunpack.c.h.b16 %v166
    %v266 = vunpack.c.l.b16 %v167
    %v267 = vunpack.c.h.b16 %v167
    %v268 = vunpack.c.l.b16 %v168
    %v269 = vunpack.c.h.b16 %v168
    %v270 = vunpack.c.l.b16 %v169
    %v271 = vunpack.c.h.b16 %v169
    %v272 = vunpack.c.l.b16 %v170
    %v273 = vunpack.c.h.b16 %v170
    %v274 = vunpack.c.l.b16 %v171
    %v275 = vunpack.c.h.b16 %v171
    %v276 = vunpack.c.l.b16 %v172
    %v277 = vunpack.c.h.b16 %v172
    %v278 = vunpack.c.l.b16 %v173
    %v279 = vunpack.c.h.b16 %v173
    %v280 = vunpack.c.l.b16 %v174
    %v281 = vunpack.c.h.b16 %v174
    %v282 = vunpack.c.l.b16 %v175
    %v283 = vunpack.c.h.b16 %v175
    %v284 = vunpack.c.l.b16 %v176
    %v285 = vunpack.c.h.b16 %v176
    %v286 = vunpack.c.l.b16 %v177
    %v287 = vunpack.c.h.b16 %v177
    %v288 = vunpack.c.l.b16 %v178
    %v289 = vunpack.c.h.b16 %v178
    %v290 = vpack.c.b16 %v230, %v226
    %v291 = vpack.c.b16 %v231, %v227
    %v292 = vpack.c.b16 %v232, %v228
    %v293 = vpack.c.b16 %v233, %v229
    %v294 = vpack.c.b16 %v238, %v234
    %v295 = vpack.c.b16 %v239, %v235
    %v296 = vpack.c.b16 %v240, %v236
    %v297 = vpack.c.b16 %v241, %v237
    %v298 = vpack.c.b16 %v246, %v242
    %v299 = vpack.c.b16 %v247, %v243
    %v300 = vpack.c.b16 %v248, %v244
    %v301 = vpack.c.b16 %v249, %v245
    %v302 = vpack.c.b16 %v254, %v250
    %v303 = vpack.c.b16 %v255, %v251
    %v304 = vpack.c.b16 %v256, %v252
    %v305 = vpack.c.b16 %v257, %v253
    %v306 = vpack.c.b16 %v262, %v258
    %v307 = vpack.c.b16 %v263, %v259
    %v308 = vpack.c.b16 %v264, %v260
    %v309 = vpack.c.b16 %v265, %v261
    %v310 = vpack.c.b16 %v270, %v266
    %v311 = vpack.c.b16 %v271, %v267
    %v312 = vpack.c.b16 %v272, %v268
    %v313 = vpack.c.b16 %v273, %v269
    %v314 = vpack.c.b16 %v278, %v274
    %v315 = vpack.c.b16 %v279, %v275
    %v316 = vpack.c.b16 %v280, %v276
    %v317 = vpack.c.b16 %v281, %v277
    %v318 = vpack.c.b16 %v286, %v282
    %v319 = vpack.c.b16 %v287, %v283
    %v320 = vpack.c.b16 %v288, %v284
    %v321 = vpack.c.b16 %v289, %v285
    %354 = vmatpush.bf16.msra.mxu0 %v318
    %355 = vmatpush.bf16.msra.mxu0 %v314
    %356 = vmatpush.bf16.msra.mxu0 %v310
    %357 = vmatpush.bf16.msra.mxu0 %v306
    %358 = vmatpush.bf16.msra.mxu0 %v302
    %359 = vmatpush.bf16.msra.mxu0 %v298
    %360 = vmatpush.bf16.msra.mxu0 %v294
    %361 = vmatpush.bf16.msra.mxu0 %v290
    %362 = vmatmul.bf16.gmra.mxu0 %v145
    %v363 = vpop.f32.mrf.mxu0
    %v364 = vadd.f32 %v190, %v363
    %v365 = vpop.f32.mrf.mxu0
    %v366 = vadd.f32 %v190, %v365
    %367 = vmatmul.bf16.gmra.mxu0 %v146
    %v368 = vpop.f32.mrf.mxu0
    %v369 = vadd.f32 %v190, %v368
    %v370 = vpop.f32.mrf.mxu0
    %v371 = vadd.f32 %v190, %v370
    %372 = vdwg.mxu0
    %373 = vmatpush.bf16.msra.mxu0 %v319
    %374 = vmatpush.bf16.msra.mxu0 %v315
    %375 = vmatpush.bf16.msra.mxu0 %v311
    %376 = vmatpush.bf16.msra.mxu0 %v307
    %377 = vmatpush.bf16.msra.mxu0 %v303
    %378 = vmatpush.bf16.msra.mxu0 %v299
    %379 = vmatpush.bf16.msra.mxu0 %v295
    %380 = vmatpush.bf16.msra.mxu0 %v291
    %381 = vmatmul.bf16.gmra.mxu0 %v145
    %v382 = vpop.f32.mrf.mxu0
    %v383 = vadd.f32 %v191, %v382
    %v384 = vpop.f32.mrf.mxu0
    %v385 = vadd.f32 %v191, %v384
    %386 = vmatmul.bf16.gmra.mxu0 %v146
    %v387 = vpop.f32.mrf.mxu0
    %v388 = vadd.f32 %v191, %v387
    %v389 = vpop.f32.mrf.mxu0
    %v390 = vadd.f32 %v191, %v389
    %391 = vdwg.mxu0
    %392 = vmatpush.bf16.msra.mxu0 %v320
    %393 = vmatpush.bf16.msra.mxu0 %v316
    %394 = vmatpush.bf16.msra.mxu0 %v312
    %395 = vmatpush.bf16.msra.mxu0 %v308
    %396 = vmatpush.bf16.msra.mxu0 %v304
    %397 = vmatpush.bf16.msra.mxu0 %v300
    %398 = vmatpush.bf16.msra.mxu0 %v296
    %399 = vmatpush.bf16.msra.mxu0 %v292
    %400 = vmatmul.bf16.gmra.mxu0 %v145
    %v401 = vpop.f32.mrf.mxu0
    %v402 = vadd.f32 %v192, %v401
    %v403 = vpop.f32.mrf.mxu0
    %v404 = vadd.f32 %v192, %v403
    %405 = vmatmul.bf16.gmra.mxu0 %v146
    %v406 = vpop.f32.mrf.mxu0
    %v407 = vadd.f32 %v192, %v406
    %v408 = vpop.f32.mrf.mxu0
    %v409 = vadd.f32 %v192, %v408
    %410 = vdwg.mxu0
    %411 = vmatpush.bf16.msra.mxu0 %v321
    %412 = vmatpush.bf16.msra.mxu0 %v317
    %413 = vmatpush.bf16.msra.mxu0 %v313
    %414 = vmatpush.bf16.msra.mxu0 %v309
    %415 = vmatpush.bf16.msra.mxu0 %v305
    %416 = vmatpush.bf16.msra.mxu0 %v301
    %417 = vmatpush.bf16.msra.mxu0 %v297
    %418 = vmatpush.bf16.msra.mxu0 %v293
    %419 = vmatmul.bf16.gmra.mxu0 %v145
    %v420 = vpop.f32.mrf.mxu0
    %v421 = vadd.f32 %v193, %v420
    %v422 = vpop.f32.mrf.mxu0
    %v423 = vadd.f32 %v193, %v422
    %424 = vmatmul.bf16.gmra.mxu0 %v146
    %v425 = vpop.f32.mrf.mxu0
    %v426 = vadd.f32 %v193, %v425
    %v427 = vpop.f32.mrf.mxu0
    %v428 = vadd.f32 %v193, %v427
    %429 = vdwg.mxu0
    %v430 = vmul.f32 %v364, 0.5
    %v431 = vmul.f32 %v383, 0.5
    %v432 = vmul.f32 %v402, 0.5
    %v433 = vmul.f32 %v421, 0.5
    %v434 = vmul.f32 %v366, 0.5
    %v435 = vmul.f32 %v385, 0.5
    %v436 = vmul.f32 %v404, 0.5
    %v437 = vmul.f32 %v423, 0.5
    %v438 = vmul.f32 %v369, 0.5
    %v439 = vmul.f32 %v388, 0.5
    %v440 = vmul.f32 %v407, 0.5
    %v441 = vmul.f32 %v426, 0.5
    %v442 = vmul.f32 %v371, 0.5
    %v443 = vmul.f32 %v390, 0.5
    %v444 = vmul.f32 %v409, 0.5
    %v445 = vmul.f32 %v428, 0.5
    %v446 = vmul.f32 %v364, 0.044715
    %v447 = vmul.f32 %v383, 0.044715
    %v448 = vmul.f32 %v402, 0.044715
    %v449 = vmul.f32 %v421, 0.044715
    %v450 = vmul.f32 %v366, 0.044715
    %v451 = vmul.f32 %v385, 0.044715
    %v452 = vmul.f32 %v404, 0.044715
    %v453 = vmul.f32 %v423, 0.044715
    %v454 = vmul.f32 %v369, 0.044715
    %v455 = vmul.f32 %v388, 0.044715
    %v456 = vmul.f32 %v407, 0.044715
    %v457 = vmul.f32 %v426, 0.044715
    %v458 = vmul.f32 %v371, 0.044715
    %v459 = vmul.f32 %v390, 0.044715
    %v460 = vmul.f32 %v409, 0.044715
    %v461 = vmul.f32 %v428, 0.044715
    %v462 = vmul.f32 %v446, %v364
    %v463 = vmul.f32 %v447, %v383
    %v464 = vmul.f32 %v448, %v402
    %v465 = vmul.f32 %v449, %v421
    %v466 = vmul.f32 %v450, %v366
    %v467 = vmul.f32 %v451, %v385
    %v468 = vmul.f32 %v452, %v404
    %v469 = vmul.f32 %v453, %v423
    %v470 = vmul.f32 %v454, %v369
    %v471 = vmul.f32 %v455, %v388
    %v472 = vmul.f32 %v456, %v407
    %v473 = vmul.f32 %v457, %v426
    %v474 = vmul.f32 %v458, %v371
    %v475 = vmul.f32 %v459, %v390
    %v476 = vmul.f32 %v460, %v409
    %v477 = vmul.f32 %v461, %v428
    %v478 = vmul.f32 %v462, %v364
    %v479 = vmul.f32 %v463, %v383
    %v480 = vmul.f32 %v464, %v402
    %v481 = vmul.f32 %v465, %v421
    %v482 = vmul.f32 %v466, %v366
    %v483 = vmul.f32 %v467, %v385
    %v484 = vmul.f32 %v468, %v404
    %v485 = vmul.f32 %v469, %v423
    %v486 = vmul.f32 %v470, %v369
    %v487 = vmul.f32 %v471, %v388
    %v488 = vmul.f32 %v472, %v407
    %v489 = vmul.f32 %v473, %v426
    %v490 = vmul.f32 %v474, %v371
    %v491 = vmul.f32 %v475, %v390
    %v492 = vmul.f32 %v476, %v409
    %v493 = vmul.f32 %v477, %v428
    %v494 = vadd.f32 %v364, %v478
    %v495 = vadd.f32 %v383, %v479
    %v496 = vadd.f32 %v402, %v480
    %v497 = vadd.f32 %v421, %v481
    %v498 = vadd.f32 %v366, %v482
    %v499 = vadd.f32 %v385, %v483
    %v500 = vadd.f32 %v404, %v484
    %v501 = vadd.f32 %v423, %v485
    %v502 = vadd.f32 %v369, %v486
    %v503 = vadd.f32 %v388, %v487
    %v504 = vadd.f32 %v407, %v488
    %v505 = vadd.f32 %v426, %v489
    %v506 = vadd.f32 %v371, %v490
    %v507 = vadd.f32 %v390, %v491
    %v508 = vadd.f32 %v409, %v492
    %v509 = vadd.f32 %v428, %v493
    %v510 = vmul.f32 %v494, 0.7978846
    %v511 = vmul.f32 %v495, 0.7978846
    %v512 = vmul.f32 %v496, 0.7978846
    %v513 = vmul.f32 %v497, 0.7978846
    %v514 = vmul.f32 %v498, 0.7978846
    %v515 = vmul.f32 %v499, 0.7978846
    %v516 = vmul.f32 %v500, 0.7978846
    %v517 = vmul.f32 %v501, 0.7978846
    %v518 = vmul.f32 %v502, 0.7978846
    %v519 = vmul.f32 %v503, 0.7978846
    %v520 = vmul.f32 %v504, 0.7978846
    %v521 = vmul.f32 %v505, 0.7978846
    %v522 = vmul.f32 %v506, 0.7978846
    %v523 = vmul.f32 %v507, 0.7978846
    %v524 = vmul.f32 %v508, 0.7978846
    %v525 = vmul.f32 %v509, 0.7978846
    %v526 = vtanh.pop %v510
    %v527 = vtanh.pop %v511
    %v528 = vtanh.pop %v512
    %v529 = vtanh.pop %v513
    %v530 = vtanh.pop %v514
    %v531 = vtanh.pop %v515
    %v532 = vtanh.pop %v516
    %v533 = vtanh.pop %v517
    %v534 = vtanh.pop %v518
    %v535 = vtanh.pop %v519
    %v536 = vtanh.pop %v520
    %v537 = vtanh.pop %v521
    %v538 = vtanh.pop %v522
    %v539 = vtanh.pop %v523
    %v540 = vtanh.pop %v524
    %v541 = vtanh.pop %v525
    %v542 = vadd.f32 %v526, 1.0
    %v543 = vadd.f32 %v527, 1.0
    %v544 = vadd.f32 %v528, 1.0
    %v545 = vadd.f32 %v529, 1.0
    %v546 = vadd.f32 %v530, 1.0
    %v547 = vadd.f32 %v531, 1.0
    %v548 = vadd.f32 %v532, 1.0
    %v549 = vadd.f32 %v533, 1.0
    %v550 = vadd.f32 %v534, 1.0
    %v551 = vadd.f32 %v535, 1.0
    %v552 = vadd.f32 %v536, 1.0
    %v553 = vadd.f32 %v537, 1.0
    %v554 = vadd.f32 %v538, 1.0
    %v555 = vadd.f32 %v539, 1.0
    %v556 = vadd.f32 %v540, 1.0
    %v557 = vadd.f32 %v541, 1.0
    %v558 = vmul.f32 %v430, %v542
    %v559 = vmul.f32 %v431, %v543
    %v560 = vmul.f32 %v432, %v544
    %v561 = vmul.f32 %v433, %v545
    %v562 = vmul.f32 %v434, %v546
    %v563 = vmul.f32 %v435, %v547
    %v564 = vmul.f32 %v436, %v548
    %v565 = vmul.f32 %v437, %v549
    %v566 = vmul.f32 %v438, %v550
    %v567 = vmul.f32 %v439, %v551
    %v568 = vmul.f32 %v440, %v552
    %v569 = vmul.f32 %v441, %v553
    %v570 = vmul.f32 %v442, %v554
    %v571 = vmul.f32 %v443, %v555
    %v572 = vmul.f32 %v444, %v556
    %v573 = vmul.f32 %v445, %v557
    %v574 = vpack.c.bf16 %v559, %v558
    %v575 = vpack.c.bf16 %v561, %v560
    %v576 = vpack.c.bf16 %v563, %v562
    %v577 = vpack.c.bf16 %v565, %v564
    %v578 = vpack.c.bf16 %v567, %v566
    %v579 = vpack.c.bf16 %v569, %v568
    %v580 = vpack.c.bf16 %v571, %v570
    %v581 = vpack.c.bf16 %v573, %v572
    %582 = vst [vmem:[%s5] sm:$0xff] %v574
    %583 = vst [vmem:[%s5 + $0x8] sm:$0xff] %v575
    %584 = vst [vmem:[%s5 + $0x10] sm:$0xff] %v576
    %585 = vst [vmem:[%s5 + $0x18] sm:$0xff] %v577
    %586 = vst [vmem:[%s5 + $0x20] sm:$0xff] %v578
    %587 = vst [vmem:[%s5 + $0x28] sm:$0xff] %v579
    %588 = vst [vmem:[%s5 + $0x30] sm:$0xff] %v580
    %589 = vst [vmem:[%s5 + $0x38] sm:$0xff] %v581
    // Predicated region
    $region26: #{gpt2_lm_head_forward.19} parent=1 // pred_check
      _
    $region27: #{gpt2_lm_head_forward.19} parent=1 // pred_check_branch
      %591 = sbr.rel (0) target = $region29
    $region28: #{gpt2_lm_head_forward.19} parent=1 // pred_region
      _
    $region29: #{gpt2_lm_head_forward.19} parent=1 // pred_fallthru
      _
    // Predicated region
    $region30: #{gpt2_lm_head_forward.19} parent=1 // pred_check
      _
    $region31: #{gpt2_lm_head_forward.19} parent=1 // pred_check_branch
      %593 = sbr.rel (0) target = $region33
    $region32: #{gpt2_lm_head_forward.19} parent=1 // pred_region
      _
    $region33: #{gpt2_lm_head_forward.19} parent=1 // pred_fallthru
      _
    %594 = vsyncpa [#allocation3], 1

// kernel: gpt2_lm_head_forward.20
$region0: #{gpt2_lm_head_forward.20}
  #allocation0 [shape = 'u32[]', space=smem, size = 0x4, offset = 0x4, fixed_abs, tag = 'smem constant byte address 0x4 - core index']
  #allocation1 [shape = 'u32[72,128]{1,0:T(1,128)}', space=vmem, size = 0x9000, scoped, tag = 'internal scratch']
  %s0 = inlined_call_operand.vmem [shape: bf16[32,512], index: 0, kind: input, shape index: {}]
  %s1 = inlined_call_operand.hbm [shape: bf16[512,128], index: 1, kind: input, shape index: {}]
  %s2 = inlined_call_operand.vmem [shape: bf16[1,128], index: 2, kind: input, shape index: {}]
  %s3 = inlined_call_operand.vmem [shape: bf16[32,128], index: 3, kind: input, shape index: {}]
  %s4 = inlined_call_operand.vmem [shape: bf16[32,128], index: 4, kind: output, shape index: {}]
  %s5 = sld [smem:[#allocation0]]
  $region30: #{gpt2_lm_head_forward.20} parent=0
    _
  %s7 = ssub.s32 1, %s5
  %s8 = scalar_select 0, %s7, %s5
  $region1: #{gpt2_lm_head_forward.20} parent=0
    #allocation2 [shape = 'u8[131072]{0}', space=vmem, size = 0x20000, scoped, tag = 'input window, operand 1, single buffered']
    #allocation3 [shape = 's32[1]{0}', space=sflag, size = 0x4, scoped, tag = 'scoped memory for gpt2_lm_head_forward.20']
    %9 = vsyncpa [#allocation3], 0
    // Predicated region
    $region2: #{gpt2_lm_head_forward.20} parent=1 // pred_check
      _
    $region3: #{gpt2_lm_head_forward.20} parent=1 // pred_check_branch
      %11 = sbr.rel (0) target = $region5
    $region4: #{gpt2_lm_head_forward.20} parent=1 // pred_region
      _
    $region5: #{gpt2_lm_head_forward.20} parent=1 // pred_fallthru
      _
    // Predicated region
    $region6: #{gpt2_lm_head_forward.20} parent=1 // pred_check
      _
    $region7: #{gpt2_lm_head_forward.20} parent=1 // pred_check_branch
      %13 = sbr.rel (0) target = $region9
    $region8: #{gpt2_lm_head_forward.20} parent=1 // pred_region
      %15 = vsyncadd [#allocation3], 0
      %s16 = sshll.u32 %s1, 4
      %s17 = int_to_ptr.hbm [resolvable:$true] %s16
      %s18 = sshll.u32 [#allocation2], 4
      %s19 = int_to_ptr.vmem [resolvable:$true] %s18
      %24 = dma.hbm_to_vmem [thread:$0]  %s17, 4096, %s19, [#allocation3], 64, 64, 4
    $region9: #{gpt2_lm_head_forward.20} parent=1 // pred_fallthru
      _
    // Predicated region
    $region10: #{gpt2_lm_head_forward.20} parent=1 // pred_check
      _
    $region11: #{gpt2_lm_head_forward.20} parent=1 // pred_check_branch
      %26 = sbr.rel (0) target = $region13
    $region12: #{gpt2_lm_head_forward.20} parent=1 // pred_region
      _
    $region13: #{gpt2_lm_head_forward.20} parent=1 // pred_fallthru
      _
    // Predicated region
    $region14: #{gpt2_lm_head_forward.20} parent=1 // pred_check
      _
    $region15: #{gpt2_lm_head_forward.20} parent=1 // pred_check_branch
      %28 = sbr.rel (0) target = $region17
    $region16: #{gpt2_lm_head_forward.20} parent=1 // pred_region
      _
    $region17: #{gpt2_lm_head_forward.20} parent=1 // pred_fallthru
      _
    // Predicated region
    $region18: #{gpt2_lm_head_forward.20} parent=1 // pred_check
      _
    $region19: #{gpt2_lm_head_forward.20} parent=1 // pred_check_branch
      %30 = sbr.rel (0) target = $region21
    $region20: #{gpt2_lm_head_forward.20} parent=1 // pred_region
      %32 = dma.done [#allocation3], 4096
    $region21: #{gpt2_lm_head_forward.20} parent=1 // pred_fallthru
      _
    %v33 = vld [vmem:[%s0] sm:$0xff]
    %v34 = vld [vmem:[%s0 + $0x8] sm:$0xff]
    %v35 = vld [vmem:[%s0 + $0x10] sm:$0xff]
    %v36 = vld [vmem:[%s0 + $0x18] sm:$0xff]
    %v37 = vld [vmem:[%s0 + $0x20] sm:$0xff]
    %v38 = vld [vmem:[%s0 + $0x28] sm:$0xff]
    %v39 = vld [vmem:[%s0 + $0x30] sm:$0xff]
    %v40 = vld [vmem:[%s0 + $0x38] sm:$0xff]
    %v41 = vld [vmem:[#allocation2] sm:$0xf]
    %v42 = vld [vmem:[#allocation2 + $0x4] sm:$0xf]
    %v43 = vld [vmem:[#allocation2 + $0x8] sm:$0xf]
    %v44 = vld [vmem:[#allocation2 + $0xc] sm:$0xf]
    %v45 = vld [vmem:[#allocation2 + $0x10] sm:$0xf]
    %v46 = vld [vmem:[#allocation2 + $0x14] sm:$0xf]
    %v47 = vld [vmem:[#allocation2 + $0x18] sm:$0xf]
    %v48 = vld [vmem:[#allocation2 + $0x1c] sm:$0xf]
    %v49 = vld [vmem:[#allocation2 + $0x20] sm:$0xf]
    %v50 = vld [vmem:[#allocation2 + $0x24] sm:$0xf]
    %v51 = vld [vmem:[#allocation2 + $0x28] sm:$0xf]
    %v52 = vld [vmem:[#allocation2 + $0x2c] sm:$0xf]
    %v53 = vld [vmem:[#allocation2 + $0x30] sm:$0xf]
    %v54 = vld [vmem:[#allocation2 + $0x34] sm:$0xf]
    %v55 = vld [vmem:[#allocation2 + $0x38] sm:$0xf]
    %v56 = vld [vmem:[#allocation2 + $0x3c] sm:$0xf]
    %v57 = vld [vmem:[#allocation2 + $0x40] sm:$0xf]
    %v58 = vld [vmem:[#allocation2 + $0x44] sm:$0xf]
    %v59 = vld [vmem:[#allocation2 + $0x48] sm:$0xf]
    %v60 = vld [vmem:[#allocation2 + $0x4c] sm:$0xf]
    %v61 = vld [vmem:[#allocation2 + $0x50] sm:$0xf]
    %v62 = vld [vmem:[#allocation2 + $0x54] sm:$0xf]
    %v63 = vld [vmem:[#allocation2 + $0x58] sm:$0xf]
    %v64 = vld [vmem:[#allocation2 + $0x5c] sm:$0xf]
    %v65 = vld [vmem:[#allocation2 + $0x60] sm:$0xf]
    %v66 = vld [vmem:[#allocation2 + $0x64] sm:$0xf]
    %v67 = vld [vmem:[#allocation2 + $0x68] sm:$0xf]
    %v68 = vld [vmem:[#allocation2 + $0x6c] sm:$0xf]
    %v69 = vld [vmem:[#allocation2 + $0x70] sm:$0xf]
    %v70 = vld [vmem:[#allocation2 + $0x74] sm:$0xf]
    %v71 = vld [vmem:[#allocation2 + $0x78] sm:$0xf]
    %v72 = vld [vmem:[#allocation2 + $0x7c] sm:$0xf]
    %v73 = vld [vmem:[#allocation2 + $0x80] sm:$0xf]
    %v74 = vld [vmem:[#allocation2 + $0x84] sm:$0xf]
    %v75 = vld [vmem:[#allocation2 + $0x88] sm:$0xf]
    %v76 = vld [vmem:[#allocation2 + $0x8c] sm:$0xf]
    %v77 = vld [vmem:[#allocation2 + $0x90] sm:$0xf]
    %v78 = vld [vmem:[#allocation2 + $0x94] sm:$0xf]
    %v79 = vld [vmem:[#allocation2 + $0x98] sm:$0xf]
    %v80 = vld [vmem:[#allocation2 + $0x9c] sm:$0xf]
    %v81 = vld [vmem:[#allocation2 + $0xa0] sm:$0xf]
    %v82 = vld [vmem:[#allocation2 + $0xa4] sm:$0xf]
    %v83 = vld [vmem:[#allocation2 + $0xa8] sm:$0xf]
    %v84 = vld [vmem:[#allocation2 + $0xac] sm:$0xf]
    %v85 = vld [vmem:[#allocation2 + $0xb0] sm:$0xf]
    %v86 = vld [vmem:[#allocation2 + $0xb4] sm:$0xf]
    %v87 = vld [vmem:[#allocation2 + $0xb8] sm:$0xf]
    %v88 = vld [vmem:[#allocation2 + $0xbc] sm:$0xf]
    %v89 = vld [vmem:[#allocation2 + $0xc0] sm:$0xf]
    %v90 = vld [vmem:[#allocation2 + $0xc4] sm:$0xf]
    %v91 = vld [vmem:[#allocation2 + $0xc8] sm:$0xf]
    %v92 = vld [vmem:[#allocation2 + $0xcc] sm:$0xf]
    %v93 = vld [vmem:[#allocation2 + $0xd0] sm:$0xf]
    %v94 = vld [vmem:[#allocation2 + $0xd4] sm:$0xf]
    %v95 = vld [vmem:[#allocation2 + $0xd8] sm:$0xf]
    %v96 = vld [vmem:[#allocation2 + $0xdc] sm:$0xf]
    %v97 = vld [vmem:[#allocation2 + $0xe0] sm:$0xf]
    %v98 = vld [vmem:[#allocation2 + $0xe4] sm:$0xf]
    %v99 = vld [vmem:[#allocation2 + $0xe8] sm:$0xf]
    %v100 = vld [vmem:[#allocation2 + $0xec] sm:$0xf]
    %v101 = vld [vmem:[#allocation2 + $0xf0] sm:$0xf]
    %v102 = vld [vmem:[#allocation2 + $0xf4] sm:$0xf]
    %v103 = vld [vmem:[#allocation2 + $0xf8] sm:$0xf]
    %v104 = vld [vmem:[#allocation2 + $0xfc] sm:$0xf]
    %v105 = vld [vmem:[%s2] sm:$0x1]
    %v106 = vunpack.c.l.bf16 %v105
    %v107 = vperm.slane %v106, 0
    %v116 = vunpack.c.l.b16 %v33
    %v117 = vunpack.c.h.b16 %v33
    %v118 = vunpack.c.l.b16 %v34
    %v119 = vunpack.c.h.b16 %v34
    %v120 = vunpack.c.l.b16 %v35
    %v121 = vunpack.c.h.b16 %v35
    %v122 = vunpack.c.l.b16 %v36
    %v123 = vunpack.c.h.b16 %v36
    %v124 = vunpack.c.l.b16 %v37
    %v125 = vunpack.c.h.b16 %v37
    %v126 = vunpack.c.l.b16 %v38
    %v127 = vunpack.c.h.b16 %v38
    %v128 = vunpack.c.l.b16 %v39
    %v129 = vunpack.c.h.b16 %v39
    %v130 = vunpack.c.l.b16 %v40
    %v131 = vunpack.c.h.b16 %v40
    %v132 = vpack.c.b16 %v120, %v116
    %v133 = vpack.c.b16 %v121, %v117
    %v134 = vpack.c.b16 %v122, %v118
    %v135 = vpack.c.b16 %v123, %v119
    %v136 = vpack.c.b16 %v128, %v124
    %v137 = vpack.c.b16 %v129, %v125
    %v138 = vpack.c.b16 %v130, %v126
    %v139 = vpack.c.b16 %v131, %v127
    %v212 = vunpack.c.l.b16 %v41
    %v213 = vunpack.c.l.b16 %v42
    %v214 = vunpack.c.l.b16 %v43
    %v215 = vunpack.c.l.b16 %v44
    %v216 = vunpack.c.l.b16 %v45
    %v217 = vunpack.c.l.b16 %v46
    %v218 = vunpack.c.l.b16 %v47
    %v219 = vunpack.c.l.b16 %v48
    %v220 = vunpack.c.l.b16 %v49
    %v221 = vunpack.c.l.b16 %v50
    %v222 = vunpack.c.l.b16 %v51
    %v223 = vunpack.c.l.b16 %v52
    %v224 = vunpack.c.l.b16 %v53
    %v225 = vunpack.c.l.b16 %v54
    %v226 = vunpack.c.l.b16 %v55
    %v227 = vunpack.c.l.b16 %v56
    %v228 = vunpack.c.l.b16 %v57
    %v229 = vunpack.c.l.b16 %v58
    %v230 = vunpack.c.l.b16 %v59
    %v231 = vunpack.c.l.b16 %v60
    %v232 = vunpack.c.l.b16 %v61
    %v233 = vunpack.c.l.b16 %v62
    %v234 = vunpack.c.l.b16 %v63
    %v235 = vunpack.c.l.b16 %v64
    %v236 = vunpack.c.l.b16 %v65
    %v237 = vunpack.c.l.b16 %v66
    %v238 = vunpack.c.l.b16 %v67
    %v239 = vunpack.c.l.b16 %v68
    %v240 = vunpack.c.l.b16 %v69
    %v241 = vunpack.c.l.b16 %v70
    %v242 = vunpack.c.l.b16 %v71
    %v243 = vunpack.c.l.b16 %v72
    %v244 = vunpack.c.l.b16 %v73
    %v245 = vunpack.c.l.b16 %v74
    %v246 = vunpack.c.l.b16 %v75
    %v247 = vunpack.c.l.b16 %v76
    %v248 = vunpack.c.l.b16 %v77
    %v249 = vunpack.c.l.b16 %v78
    %v250 = vunpack.c.l.b16 %v79
    %v251 = vunpack.c.l.b16 %v80
    %v252 = vunpack.c.l.b16 %v81
    %v253 = vunpack.c.l.b16 %v82
    %v254 = vunpack.c.l.b16 %v83
    %v255 = vunpack.c.l.b16 %v84
    %v256 = vunpack.c.l.b16 %v85
    %v257 = vunpack.c.l.b16 %v86
    %v258 = vunpack.c.l.b16 %v87
    %v259 = vunpack.c.l.b16 %v88
    %v260 = vunpack.c.l.b16 %v89
    %v261 = vunpack.c.l.b16 %v90
    %v262 = vunpack.c.l.b16 %v91
    %v263 = vunpack.c.l.b16 %v92
    %v264 = vunpack.c.l.b16 %v93
    %v265 = vunpack.c.l.b16 %v94
    %v266 = vunpack.c.l.b16 %v95
    %v267 = vunpack.c.l.b16 %v96
    %v268 = vunpack.c.l.b16 %v97
    %v269 = vunpack.c.l.b16 %v98
    %v270 = vunpack.c.l.b16 %v99
    %v271 = vunpack.c.l.b16 %v100
    %v272 = vunpack.c.l.b16 %v101
    %v273 = vunpack.c.l.b16 %v102
    %v274 = vunpack.c.l.b16 %v103
    %v275 = vunpack.c.l.b16 %v104
    %v276 = vpack.c.b16 %v213, %v212
    %v277 = vpack.c.b16 %v215, %v214
    %v278 = vpack.c.b16 %v217, %v216
    %v279 = vpack.c.b16 %v219, %v218
    %v280 = vpack.c.b16 %v221, %v220
    %v281 = vpack.c.b16 %v223, %v222
    %v282 = vpack.c.b16 %v225, %v224
    %v283 = vpack.c.b16 %v227, %v226
    %v284 = vpack.c.b16 %v229, %v228
    %v285 = vpack.c.b16 %v231, %v230
    %v286 = vpack.c.b16 %v233, %v232
    %v287 = vpack.c.b16 %v235, %v234
    %v288 = vpack.c.b16 %v237, %v236
    %v289 = vpack.c.b16 %v239, %v238
    %v290 = vpack.c.b16 %v241, %v240
    %v291 = vpack.c.b16 %v243, %v242
    %v292 = vpack.c.b16 %v245, %v244
    %v293 = vpack.c.b16 %v247, %v246
    %v294 = vpack.c.b16 %v249, %v248
    %v295 = vpack.c.b16 %v251, %v250
    %v296 = vpack.c.b16 %v253, %v252
    %v297 = vpack.c.b16 %v255, %v254
    %v298 = vpack.c.b16 %v257, %v256
    %v299 = vpack.c.b16 %v259, %v258
    %v300 = vpack.c.b16 %v261, %v260
    %v301 = vpack.c.b16 %v263, %v262
    %v302 = vpack.c.b16 %v265, %v264
    %v303 = vpack.c.b16 %v267, %v266
    %v304 = vpack.c.b16 %v269, %v268
    %v305 = vpack.c.b16 %v271, %v270
    %v306 = vpack.c.b16 %v273, %v272
    %v307 = vpack.c.b16 %v275, %v274
    %340 = vmatpush.bf16.msra.mxu0 %v283
    %341 = vmatpush.bf16.msra.mxu0 %v282
    %342 = vmatpush.bf16.msra.mxu0 %v281
    %343 = vmatpush.bf16.msra.mxu0 %v280
    %344 = vmatpush.bf16.msra.mxu0 %v279
    %345 = vmatpush.bf16.msra.mxu0 %v278
    %346 = vmatpush.bf16.msra.mxu0 %v277
    %347 = vmatpush.bf16.msra.mxu0 %v276
    %348 = vmatmul.bf16.gmra.mxu0 %v132
    %v349 = vpop.f32.mrf.mxu0
    %v350 = vadd.f32 %v107, %v349
    %v351 = vpop.f32.mrf.mxu0
    %v352 = vadd.f32 %v107, %v351
    %353 = vmatmul.bf16.gmra.mxu0 %v136
    %v354 = vpop.f32.mrf.mxu0
    %v355 = vadd.f32 %v107, %v354
    %v356 = vpop.f32.mrf.mxu0
    %v357 = vadd.f32 %v107, %v356
    %358 = vdwg.mxu0
    %359 = vmatpush.bf16.msra.mxu0 %v291
    %360 = vmatpush.bf16.msra.mxu0 %v290
    %361 = vmatpush.bf16.msra.mxu0 %v289
    %362 = vmatpush.bf16.msra.mxu0 %v288
    %363 = vmatpush.bf16.msra.mxu0 %v287
    %364 = vmatpush.bf16.msra.mxu0 %v286
    %365 = vmatpush.bf16.msra.mxu0 %v285
    %366 = vmatpush.bf16.msra.mxu0 %v284
    %367 = vmatmul.bf16.gmra.mxu0 %v133
    %v368 = vpop.f32.mrf.mxu0
    %v369 = vadd.f32 %v350, %v368
    %v370 = vpop.f32.mrf.mxu0
    %v371 = vadd.f32 %v352, %v370
    %372 = vmatmul.bf16.gmra.mxu0 %v137
    %v373 = vpop.f32.mrf.mxu0
    %v374 = vadd.f32 %v355, %v373
    %v375 = vpop.f32.mrf.mxu0
    %v376 = vadd.f32 %v357, %v375
    %377 = vdwg.mxu0
    %378 = vmatpush.bf16.msra.mxu0 %v299
    %379 = vmatpush.bf16.msra.mxu0 %v298
    %380 = vmatpush.bf16.msra.mxu0 %v297
    %381 = vmatpush.bf16.msra.mxu0 %v296
    %382 = vmatpush.bf16.msra.mxu0 %v295
    %383 = vmatpush.bf16.msra.mxu0 %v294
    %384 = vmatpush.bf16.msra.mxu0 %v293
    %385 = vmatpush.bf16.msra.mxu0 %v292
    %386 = vmatmul.bf16.gmra.mxu0 %v134
    %v387 = vpop.f32.mrf.mxu0
    %v388 = vadd.f32 %v369, %v387
    %v389 = vpop.f32.mrf.mxu0
    %v390 = vadd.f32 %v371, %v389
    %391 = vmatmul.bf16.gmra.mxu0 %v138
    %v392 = vpop.f32.mrf.mxu0
    %v393 = vadd.f32 %v374, %v392
    %v394 = vpop.f32.mrf.mxu0
    %v395 = vadd.f32 %v376, %v394
    %396 = vdwg.mxu0
    %397 = vmatpush.bf16.msra.mxu0 %v307
    %398 = vmatpush.bf16.msra.mxu0 %v306
    %399 = vmatpush.bf16.msra.mxu0 %v305
    %400 = vmatpush.bf16.msra.mxu0 %v304
    %401 = vmatpush.bf16.msra.mxu0 %v303
    %402 = vmatpush.bf16.msra.mxu0 %v302
    %403 = vmatpush.bf16.msra.mxu0 %v301
    %404 = vmatpush.bf16.msra.mxu0 %v300
    %405 = vmatmul.bf16.gmra.mxu0 %v135
    %v406 = vpop.f32.mrf.mxu0
    %v407 = vadd.f32 %v388, %v406
    %v408 = vpop.f32.mrf.mxu0
    %v409 = vadd.f32 %v390, %v408
    %410 = vmatmul.bf16.gmra.mxu0 %v139
    %v411 = vpop.f32.mrf.mxu0
    %v412 = vadd.f32 %v393, %v411
    %v413 = vpop.f32.mrf.mxu0
    %v414 = vadd.f32 %v395, %v413
    %415 = vdwg.mxu0
    %v416 = vld [vmem:[%s3] sm:$0xf]
    %v417 = vld [vmem:[%s3 + $0x4] sm:$0xf]
    %v418 = vld [vmem:[%s3 + $0x8] sm:$0xf]
    %v419 = vld [vmem:[%s3 + $0xc] sm:$0xf]
    %v420 = vunpack.c.l.bf16 %v416
    %v421 = vunpack.c.l.bf16 %v417
    %v422 = vunpack.c.l.bf16 %v418
    %v423 = vunpack.c.l.bf16 %v419
    %v424 = vadd.f32 %v407, %v420
    %v425 = vadd.f32 %v409, %v421
    %v426 = vadd.f32 %v412, %v422
    %v427 = vadd.f32 %v414, %v423
    %v428 = vpack.c.bf16 %v424, %v424
    %v429 = vpack.c.bf16 %v425, %v425
    %v430 = vpack.c.bf16 %v426, %v426
    %v431 = vpack.c.bf16 %v427, %v427
    %432 = vst [vmem:[%s4] sm:$0xf] %v428
    %433 = vst [vmem:[%s4 + $0x4] sm:$0xf] %v429
    %434 = vst [vmem:[%s4 + $0x8] sm:$0xf] %v430
    %435 = vst [vmem:[%s4 + $0xc] sm:$0xf] %v431
    // Predicated region
    $region22: #{gpt2_lm_head_forward.20} parent=1 // pred_check
      _
    $region23: #{gpt2_lm_head_forward.20} parent=1 // pred_check_branch
      %437 = sbr.rel (0) target = $region25
    $region24: #{gpt2_lm_head_forward.20} parent=1 // pred_region
      _
    $region25: #{gpt2_lm_head_forward.20} parent=1 // pred_fallthru
      _
    // Predicated region
    $region26: #{gpt2_lm_head_forward.20} parent=1 // pred_check
      _
    $region27: #{gpt2_lm_head_forward.20} parent=1 // pred_check_branch
      %439 = sbr.rel (0) target = $region29
    $region28: #{gpt2_lm_head_forward.20} parent=1 // pred_region
      _
    $region29: #{gpt2_lm_head_forward.20} parent=1 // pred_fallthru
      _
    %440 = vsyncpa [#allocation3], 1

</llo_original>
